<compile_context>
chip_gen: v6e
topology: v6e:2x2x1
jax: 0.10.0
libtpu: 0.0.40
codegen_flags: <defaults>
</compile_context>

<pallas_src>
import functools

import jax
import jax.numpy as jnp
from jax.experimental import pallas as pl
from jax.experimental.pallas import tpu as pltpu

# ---- model hyper-parameters (match nn.TransformerDecoderLayer defaults) ----
VOCAB = 20             # vocab_size
EMB = 32               # embedding_size
HEADS = 4              # num_heads
HEAD_DIM = EMB // HEADS
DIM_FF = 2048          # nn.TransformerDecoderLayer default dim_feedforward
LN_EPS = 1e-5          # default layer_norm_eps
VOCAB_PAD = 128        # lane-dense padded width of the final head / bias slab
EMB_ROWS = 32          # embedding table rows padded to a sublane multiple


# ----------------------------- kernel helpers -------------------------------
def _layer_norm(x, w, b):
    # x: (N, E) f32; w, b: (1, E) f32 (biased variance, like nn.LayerNorm)
    mu = jnp.mean(x, axis=-1, keepdims=True)
    var = jnp.mean((x - mu) ** 2, axis=-1, keepdims=True)
    return (x - mu) * jax.lax.rsqrt(var + LN_EPS) * w + b


def _attn_core(q, k, v, B, Tq, Tk):
    """Multi-head attention core with NO lane slicing / concats.

    q: (B*Tq, E) f32 (1/sqrt(hd) already folded into the q projection),
    k, v: (B*Tk, E) f32.
    Per head h: K/V lanes outside head h are zeroed (elementwise mask), the
    score matmul runs full-width (contraction over all 32 lanes, zeros kill
    the other heads), and the per-head context lands only in head-h lanes, so
    summing over heads reassembles the concatenated context for free.
    """
    E, H, hd = EMB, HEADS, HEAD_DIM
    q3 = q.reshape(B, Tq, E)
    k3 = k.reshape(B, Tk, E)
    v3 = v.reshape(B, Tk, E)

    lane = jax.lax.broadcasted_iota(jnp.int32, (1, 1, E), 2)
    ctx = jnp.zeros((B, Tq, E), jnp.float32)
    for h in range(H):
        m = ((lane >= h * hd) & (lane < (h + 1) * hd)).astype(jnp.float32)
        kh = k3 * m
        vh = v3 * m
        s = jnp.einsum('bqd,bkd->bqk', q3, kh,
                       preferred_element_type=jnp.float32)      # (B, Tq, Tk)
        s = s - jnp.max(s, axis=-1, keepdims=True)
        p = jnp.exp(s)
        p = p / jnp.sum(p, axis=-1, keepdims=True)               # exact softmax
        ctx = ctx + jnp.einsum('bqk,bkd->bqd', p, vh,
                               preferred_element_type=jnp.float32)
    return ctx.reshape(B * Tq, E)


# --------------------------------- kernel -----------------------------------
def decoder_kernel(tok_ref, mem_ref, emb_ref, wslab_ref,
                   ff1w_ref, ff1b_ref, ff2w_ref, bias_ref, ln_ref,
                   out_ref, *, B, T, S):
    E = EMB
    N = B * T

    # ---- packed parameter views (lane slices all start at offset 0) ----
    sa_wqkv = wslab_ref[0][:, : 3 * E]     # (E, 3E) bf16, q-scale folded
    ca_wq   = wslab_ref[1][:, :E]          # (E, E)  bf16, q-scale folded
    ca_wkv  = wslab_ref[2][:, : 2 * E]     # (E, 2E) bf16
    sa_wo   = wslab_ref[3][:, :E]          # (E, E)  bf16
    ca_wo   = wslab_ref[4][:, :E]          # (E, E)  bf16
    lin_w   = wslab_ref[5]                 # (E, 128) bf16 (vocab lane-padded)

    sa_bqkv = bias_ref[0:1, : 3 * E]
    ca_bq   = bias_ref[1:2, :E]
    ca_bkv  = bias_ref[2:3, : 2 * E]
    sa_bo   = bias_ref[3:4, :E]
    ca_bo   = bias_ref[4:5, :E]
    ff2_b   = bias_ref[5:6, :E]
    lin_b   = bias_ref[6:7, :]

    n1w, n1b = ln_ref[0:1, :], ln_ref[1:2, :]
    n2w, n2b = ln_ref[2:3, :], ln_ref[3:4, :]
    n3w, n3b = ln_ref[4:5, :], ln_ref[5:6, :]

    # ---- embedding gather fused in-kernel as an exact one-hot matmul ----
    tok = tok_ref[...]                                              # (N, 1) int32
    vocab_ids = jax.lax.broadcasted_iota(jnp.int32, (N, EMB_ROWS), 1)
    onehot = (vocab_ids == tok).astype(jnp.float32)                 # (N, 32)
    x = jnp.dot(onehot, emb_ref[...],
                preferred_element_type=jnp.float32)                 # (N, E) f32

    # ---- self-attention (one fused QKV projection) + post-norm ----
    qkv = jnp.dot(x.astype(jnp.bfloat16), sa_wqkv,
                  preferred_element_type=jnp.float32) + sa_bqkv     # (N, 3E)
    ctx = _attn_core(qkv[:, :E], qkv[:, E:2 * E], qkv[:, 2 * E:], B, T, T)
    sa = jnp.dot(ctx.astype(jnp.bfloat16), sa_wo,
                 preferred_element_type=jnp.float32) + sa_bo
    x = _layer_norm(x + sa, n1w, n1b)

    # ---- cross-attention + post-norm ----
    mem = mem_ref[...]                                              # (B*S, E)
    q = jnp.dot(x.astype(jnp.bfloat16), ca_wq,
                preferred_element_type=jnp.float32) + ca_bq         # (N, E)
    kv = jnp.dot(mem.astype(jnp.bfloat16), ca_wkv,
                 preferred_element_type=jnp.float32) + ca_bkv       # (B*S, 2E)
    ctx = _attn_core(q, kv[:, :E], kv[:, E:], B, T, S)
    ca = jnp.dot(ctx.astype(jnp.bfloat16), ca_wo,
                 preferred_element_type=jnp.float32) + ca_bo
    x = _layer_norm(x + ca, n2w, n2b)

    # ---- feed-forward: bias + ReLU + bf16 cast in one pass (vreg pressure) ----
    h = jnp.dot(x.astype(jnp.bfloat16), ff1w_ref[...],
                preferred_element_type=jnp.float32)                 # (N, DIM_FF)
    h_bf = jnp.maximum(h + ff1b_ref[...], 0.0).astype(jnp.bfloat16)
    ff = jnp.dot(h_bf, ff2w_ref[...],
                 preferred_element_type=jnp.float32) + ff2_b
    x = _layer_norm(x + ff, n3w, n3b)

    # ---- lane-dense vocab head (padded to 128 output lanes) ----
    out_ref[...] = jnp.dot(x.astype(jnp.bfloat16), lin_w,
                           preferred_element_type=jnp.float32) + lin_b


# --------------------------- parameter plumbing ------------------------------
def init_params(key):
    """Parameters in PyTorch layout (out_features, in_features)."""
    ks = jax.random.split(key, 12)
    n = lambda k, shape, s=0.05: s * jax.random.normal(k, shape, jnp.float32)
    return {
        "embedding": n(ks[0], (VOCAB, EMB), 1.0),
        "sa_in_w":  n(ks[1], (3 * EMB, EMB)),
        "sa_in_b":  jnp.zeros((1, 3 * EMB), jnp.float32),
        "sa_out_w": n(ks[2], (EMB, EMB)),
        "sa_out_b": jnp.zeros((1, EMB), jnp.float32),
        "ca_in_w":  n(ks[3], (3 * EMB, EMB)),
        "ca_in_b":  jnp.zeros((1, 3 * EMB), jnp.float32),
        "ca_out_w": n(ks[4], (EMB, EMB)),
        "ca_out_b": jnp.zeros((1, EMB), jnp.float32),
        "ff1_w":    n(ks[5], (DIM_FF, EMB)),
        "ff1_b":    n(ks[6], (1, DIM_FF)),
        "ff2_w":    n(ks[7], (EMB, DIM_FF)),
        "ff2_b":    n(ks[8], (1, EMB)),
        "n1_w": jnp.ones((1, EMB), jnp.float32), "n1_b": jnp.zeros((1, EMB), jnp.float32),
        "n2_w": jnp.ones((1, EMB), jnp.float32), "n2_b": jnp.zeros((1, EMB), jnp.float32),
        "n3_w": jnp.ones((1, EMB), jnp.float32), "n3_b": jnp.zeros((1, EMB), jnp.float32),
        "lin_w":    n(ks[9], (VOCAB, EMB)),
        "lin_b":    n(ks[10], (1, VOCAB)),
    }


def prepare_params(p):
    """One-time layout plumbing: transpose, fold q-scale, pad, pack, bf16."""
    E = EMB
    scale = jnp.float32(1.0 / (HEAD_DIM ** 0.5))

    def pad_lanes(w, width=VOCAB_PAD):
        buf = jnp.zeros((w.shape[0], width), jnp.float32)
        return buf.at[:, : w.shape[1]].set(w.astype(jnp.float32))

    # self-attention: fused (E, 3E) qkv projection, q-scale folded into q part
    sa_in_w, sa_in_b = p["sa_in_w"], p["sa_in_b"]
    sa_wqkv = jnp.concatenate(
        [sa_in_w[:E, :].T * scale, sa_in_w[E:2 * E, :].T, sa_in_w[2 * E:, :].T],
        axis=1)                                                   # (E, 3E)
    sa_bqkv = jnp.concatenate([sa_in_b[:, :E] * scale, sa_in_b[:, E:]], axis=1)

    # cross-attention: q (scaled) and fused kv, separate (different inputs)
    ca_in_w, ca_in_b = p["ca_in_w"], p["ca_in_b"]
    ca_wq, ca_bq = ca_in_w[:E, :].T * scale, ca_in_b[:, :E] * scale
    ca_wkv, ca_bkv = ca_in_w[E:, :].T, ca_in_b[:, E:]             # (E, 2E)

    sa_wo, sa_bo = p["sa_out_w"].T, p["sa_out_b"]
    ca_wo, ca_bo = p["ca_out_w"].T, p["ca_out_b"]
    lin_w, lin_b = pad_lanes(p["lin_w"].T), pad_lanes(p["lin_b"])  # (E,128),(1,128)

    # one (6, E, 128) bf16 weight slab -> one DMA instead of six
    wslab = jnp.stack(
        [pad_lanes(sa_wqkv), pad_lanes(ca_wq), pad_lanes(ca_wkv),
         pad_lanes(sa_wo), pad_lanes(ca_wo), lin_w],
        axis=0).astype(jnp.bfloat16)

    # one (8, 128) f32 bias slab
    bias = jnp.concatenate(
        [pad_lanes(sa_bqkv), pad_lanes(ca_bq), pad_lanes(ca_bkv),
         pad_lanes(sa_bo), pad_lanes(ca_bo), pad_lanes(p["ff2_b"]),
         lin_b, jnp.zeros((1, VOCAB_PAD), jnp.float32)],
        axis=0)

    # one (6, E) f32 LayerNorm slab: [n1w, n1b, n2w, n2b, n3w, n3b]
    ln = jnp.concatenate(
        [p["n1_w"], p["n1_b"], p["n2_w"], p["n2_b"], p["n3_w"], p["n3_b"]],
        axis=0)

    emb = jnp.zeros((EMB_ROWS, E), jnp.float32).at[:VOCAB, :].set(p["embedding"])

    return {
        "emb": emb, "wslab": wslab, "bias": bias, "ln": ln,
        "ff1_w": p["ff1_w"].T.astype(jnp.bfloat16),   # (E, DIM_FF)
        "ff1_b": p["ff1_b"].astype(jnp.float32),      # (1, DIM_FF)
        "ff2_w": p["ff2_w"].T.astype(jnp.bfloat16),   # (DIM_FF, E)
    }


# --------------------------------- wrapper ----------------------------------
@jax.jit
def decoder_transformer_forward(tokens, encoder_output, prepped):
    """tokens: (B, T) int32; encoder_output: (B, S, E) f32 -> (B, T, VOCAB) f32."""
    B, T = tokens.shape
    S = encoder_output.shape[1]
    N = B * T
    assert T % 8 == 0 and S % 8 == 0, "T and S must be multiples of 8 (sublane tile)"

    tok2d = tokens.reshape(N, 1).astype(jnp.int32)
    mem2d = encoder_output.reshape(B * S, EMB).astype(jnp.float32)

    inputs = [
        tok2d, mem2d, prepped["emb"], prepped["wslab"],
        prepped["ff1_w"], prepped["ff1_b"], prepped["ff2_w"],
        prepped["bias"], prepped["ln"],
    ]

    def full_spec(a):
        nd = a.ndim
        return pl.BlockSpec(tuple(a.shape), lambda i, _nd=nd: (0,) * _nd)

    kernel = functools.partial(decoder_kernel, B=B, T=T, S=S)

    logits_pad = pl.pallas_call(
        kernel,
        out_shape=jax.ShapeDtypeStruct((N, VOCAB_PAD), jnp.float32),
        grid=(1,),                       # whole (tiny) batch in one fat step
        in_specs=[full_spec(a) for a in inputs],
        out_specs=pl.BlockSpec((N, VOCAB_PAD), lambda i: (0, 0)),
        compiler_params=pltpu.CompilerParams(
            dimension_semantics=("arbitrary",)),
    )(*inputs)

    # drop the lane padding of the head (kept: module returns (B, T, VOCAB))
    return logits_pad.reshape(B, T, VOCAB_PAD)[:, :, :VOCAB]


if __name__ == "__main__":
    key = jax.random.PRNGKey(0)
    k_tok, k_mem, k_par = jax.random.split(key, 3)

    B, T, S = 2, 8, 16
    tokens = jax.random.randint(k_tok, (B, T), 0, VOCAB, dtype=jnp.int32)
    encoder_output = jax.random.normal(k_mem, (B, S, EMB), jnp.float32)
    params = init_params(k_par)
    prepped = prepare_params(params)     # one-time layout plumbing

    # TODO(synk): training-mode dropout (stochastic masking) not implemented;
    # eval-mode (identity) semantics only.
    out = decoder_transformer_forward(tokens, encoder_output, prepped)
    jax.block_until_ready(out)
    assert out.shape == (B, T, VOCAB) and out.dtype == jnp.float32
    print("KERNEL_OK")
</pallas_src>

<mosaic_0001>
module attributes {stable_mosaic.version = 11 : i64} {
  func.func @decoder_kernel(%arg0: i32, %arg1: memref<16x1xi32, #tpu.memory_space<vmem>>, %arg2: memref<32x32xf32, #tpu.memory_space<vmem>>, %arg3: memref<32x32xf32, #tpu.memory_space<vmem>>, %arg4: memref<6x32x128xbf16, #tpu.memory_space<vmem>>, %arg5: memref<32x2048xbf16, #tpu.memory_space<vmem>>, %arg6: memref<1x2048xf32, #tpu.memory_space<vmem>>, %arg7: memref<2048x32xbf16, #tpu.memory_space<vmem>>, %arg8: memref<8x128xf32, #tpu.memory_space<vmem>>, %arg9: memref<6x32xf32, #tpu.memory_space<vmem>>, %arg10: memref<16x128xf32, #tpu.memory_space<vmem>>) attributes {dimension_semantics = [#tpu.dimension_semantics<arbitrary>], iteration_bounds = array<i64: 1>, scalar_prefetch = 0 : i64, scratch_operands = 0 : i64, tpu.core_type = #tpu.core_type<tc>, window_params = [{pipeline_mode = #tpu.pipeline_mode<synchronous>, transform_indices = @transform_0, window_bounds = array<i64: 16, 1>}, {pipeline_mode = #tpu.pipeline_mode<synchronous>, transform_indices = @transform_1, window_bounds = array<i64: 32, 32>}, {pipeline_mode = #tpu.pipeline_mode<synchronous>, transform_indices = @transform_2, window_bounds = array<i64: 32, 32>}, {pipeline_mode = #tpu.pipeline_mode<synchronous>, transform_indices = @transform_3, window_bounds = array<i64: 6, 32, 128>}, {pipeline_mode = #tpu.pipeline_mode<synchronous>, transform_indices = @transform_4, window_bounds = array<i64: 32, 2048>}, {pipeline_mode = #tpu.pipeline_mode<synchronous>, transform_indices = @transform_5, window_bounds = array<i64: 1, 2048>}, {pipeline_mode = #tpu.pipeline_mode<synchronous>, transform_indices = @transform_6, window_bounds = array<i64: 2048, 32>}, {pipeline_mode = #tpu.pipeline_mode<synchronous>, transform_indices = @transform_7, window_bounds = array<i64: 8, 128>}, {pipeline_mode = #tpu.pipeline_mode<synchronous>, transform_indices = @transform_8, window_bounds = array<i64: 6, 32>}, {pipeline_mode = #tpu.pipeline_mode<synchronous>, transform_indices = @transform_9, window_bounds = array<i64: 16, 128>}]} {
    %c0 = arith.constant 0 : index
    %c0_0 = arith.constant 0 : index
    %c0_1 = arith.constant 0 : index
    %0 = vector.load %arg4[%c0, %c0_0, %c0_1] : memref<6x32x128xbf16, #tpu.memory_space<vmem>>, vector<1x32x128xbf16>
    %1 = vector.shape_cast %0 : vector<1x32x128xbf16> to vector<32x128xbf16>
    %2 = vector.extract_strided_slice %1 {offsets = [0, 0], sizes = [32, 96], strides = [1, 1]} : vector<32x128xbf16> to vector<32x96xbf16>
    %c1 = arith.constant 1 : index
    %c0_2 = arith.constant 0 : index
    %c0_3 = arith.constant 0 : index
    %3 = vector.load %arg4[%c1, %c0_2, %c0_3] : memref<6x32x128xbf16, #tpu.memory_space<vmem>>, vector<1x32x128xbf16>
    %4 = vector.shape_cast %3 : vector<1x32x128xbf16> to vector<32x128xbf16>
    %5 = vector.extract_strided_slice %4 {offsets = [0, 0], sizes = [32, 32], strides = [1, 1]} : vector<32x128xbf16> to vector<32x32xbf16>
    %c2 = arith.constant 2 : index
    %c0_4 = arith.constant 0 : index
    %c0_5 = arith.constant 0 : index
    %6 = vector.load %arg4[%c2, %c0_4, %c0_5] : memref<6x32x128xbf16, #tpu.memory_space<vmem>>, vector<1x32x128xbf16>
    %7 = vector.shape_cast %6 : vector<1x32x128xbf16> to vector<32x128xbf16>
    %8 = vector.extract_strided_slice %7 {offsets = [0, 0], sizes = [32, 64], strides = [1, 1]} : vector<32x128xbf16> to vector<32x64xbf16>
    %c3 = arith.constant 3 : index
    %c0_6 = arith.constant 0 : index
    %c0_7 = arith.constant 0 : index
    %9 = vector.load %arg4[%c3, %c0_6, %c0_7] : memref<6x32x128xbf16, #tpu.memory_space<vmem>>, vector<1x32x128xbf16>
    %10 = vector.shape_cast %9 : vector<1x32x128xbf16> to vector<32x128xbf16>
    %11 = vector.extract_strided_slice %10 {offsets = [0, 0], sizes = [32, 32], strides = [1, 1]} : vector<32x128xbf16> to vector<32x32xbf16>
    %c4 = arith.constant 4 : index
    %c0_8 = arith.constant 0 : index
    %c0_9 = arith.constant 0 : index
    %12 = vector.load %arg4[%c4, %c0_8, %c0_9] : memref<6x32x128xbf16, #tpu.memory_space<vmem>>, vector<1x32x128xbf16>
    %13 = vector.shape_cast %12 : vector<1x32x128xbf16> to vector<32x128xbf16>
    %14 = vector.extract_strided_slice %13 {offsets = [0, 0], sizes = [32, 32], strides = [1, 1]} : vector<32x128xbf16> to vector<32x32xbf16>
    %c5 = arith.constant 5 : index
    %c0_10 = arith.constant 0 : index
    %c0_11 = arith.constant 0 : index
    %15 = vector.load %arg4[%c5, %c0_10, %c0_11] : memref<6x32x128xbf16, #tpu.memory_space<vmem>>, vector<1x32x128xbf16>
    %16 = vector.shape_cast %15 : vector<1x32x128xbf16> to vector<32x128xbf16>
    %c0_12 = arith.constant 0 : index
    %c0_13 = arith.constant 0 : index
    %17 = vector.load %arg8[%c0_12, %c0_13] : memref<8x128xf32, #tpu.memory_space<vmem>>, vector<1x96xf32>
    %c1_14 = arith.constant 1 : index
    %c0_15 = arith.constant 0 : index
    %18 = vector.load %arg8[%c1_14, %c0_15] : memref<8x128xf32, #tpu.memory_space<vmem>>, vector<1x32xf32>
    %c2_16 = arith.constant 2 : index
    %c0_17 = arith.constant 0 : index
    %19 = vector.load %arg8[%c2_16, %c0_17] : memref<8x128xf32, #tpu.memory_space<vmem>>, vector<1x64xf32>
    %c3_18 = arith.constant 3 : index
    %c0_19 = arith.constant 0 : index
    %20 = vector.load %arg8[%c3_18, %c0_19] : memref<8x128xf32, #tpu.memory_space<vmem>>, vector<1x32xf32>
    %c4_20 = arith.constant 4 : index
    %c0_21 = arith.constant 0 : index
    %21 = vector.load %arg8[%c4_20, %c0_21] : memref<8x128xf32, #tpu.memory_space<vmem>>, vector<1x32xf32>
    %c5_22 = arith.constant 5 : index
    %c0_23 = arith.constant 0 : index
    %22 = vector.load %arg8[%c5_22, %c0_23] : memref<8x128xf32, #tpu.memory_space<vmem>>, vector<1x32xf32>
    %c6 = arith.constant 6 : index
    %c0_24 = arith.constant 0 : index
    %23 = vector.load %arg8[%c6, %c0_24] : memref<8x128xf32, #tpu.memory_space<vmem>>, vector<1x128xf32>
    %c0_25 = arith.constant 0 : index
    %c0_26 = arith.constant 0 : index
    %24 = vector.load %arg9[%c0_25, %c0_26] : memref<6x32xf32, #tpu.memory_space<vmem>>, vector<1x32xf32>
    %c1_27 = arith.constant 1 : index
    %c0_28 = arith.constant 0 : index
    %25 = vector.load %arg9[%c1_27, %c0_28] : memref<6x32xf32, #tpu.memory_space<vmem>>, vector<1x32xf32>
    %c2_29 = arith.constant 2 : index
    %c0_30 = arith.constant 0 : index
    %26 = vector.load %arg9[%c2_29, %c0_30] : memref<6x32xf32, #tpu.memory_space<vmem>>, vector<1x32xf32>
    %c3_31 = arith.constant 3 : index
    %c0_32 = arith.constant 0 : index
    %27 = vector.load %arg9[%c3_31, %c0_32] : memref<6x32xf32, #tpu.memory_space<vmem>>, vector<1x32xf32>
    %c4_33 = arith.constant 4 : index
    %c0_34 = arith.constant 0 : index
    %28 = vector.load %arg9[%c4_33, %c0_34] : memref<6x32xf32, #tpu.memory_space<vmem>>, vector<1x32xf32>
    %c5_35 = arith.constant 5 : index
    %c0_36 = arith.constant 0 : index
    %29 = vector.load %arg9[%c5_35, %c0_36] : memref<6x32xf32, #tpu.memory_space<vmem>>, vector<1x32xf32>
    %c0_37 = arith.constant 0 : index
    %c0_38 = arith.constant 0 : index
    %30 = vector.load %arg1[%c0_37, %c0_38] : memref<16x1xi32, #tpu.memory_space<vmem>>, vector<16x1xi32>
    %31 = tpu.iota {dimensions = array<i32: 1>} : vector<16x32xi32>
    %32 = vector.broadcast %30 : vector<16x1xi32> to vector<16x32xi32>
    %33 = arith.cmpi eq, %31, %32 : vector<16x32xi32>
    %34 = arith.extui %33 : vector<16x32xi1> to vector<16x32xi32>
    %35 = arith.sitofp %34 : vector<16x32xi32> to vector<16x32xf32>
    %c0_39 = arith.constant 0 : index
    %c0_40 = arith.constant 0 : index
    %36 = vector.load %arg3[%c0_39, %c0_40] : memref<32x32xf32, #tpu.memory_space<vmem>>, vector<32x32xf32>
    %cst = arith.constant dense<0.000000e+00> : vector<16x32xf32>
    %37 = tpu.matmul %35, %36, %cst {dimension_numbers = #tpu.dot_dimension_numbers<[1], [0], [0], [1], [0, 0, 1, 1], [], []>} : vector<16x32xf32>, vector<32x32xf32>, vector<16x32xf32> -> vector<16x32xf32>
    %38 = arith.truncf %37 : vector<16x32xf32> to vector<16x32xbf16>
    %cst_41 = arith.constant dense<0.000000e+00> : vector<16x96xf32>
    %39 = tpu.matmul %38, %2, %cst_41 {dimension_numbers = #tpu.dot_dimension_numbers<[1], [0], [0], [1], [0, 0, 1, 1], [], []>} : vector<16x32xbf16>, vector<32x96xbf16>, vector<16x96xf32> -> vector<16x96xf32>
    %40 = vector.broadcast %17 : vector<1x96xf32> to vector<16x96xf32>
    %41 = arith.addf %39, %40 : vector<16x96xf32>
    %42 = vector.extract_strided_slice %41 {offsets = [0, 0], sizes = [16, 32], strides = [1, 1]} : vector<16x96xf32> to vector<16x32xf32>
    %43 = vector.extract_strided_slice %41 {offsets = [0, 32], sizes = [16, 32], strides = [1, 1]} : vector<16x96xf32> to vector<16x32xf32>
    %44 = vector.extract_strided_slice %41 {offsets = [0, 64], sizes = [16, 32], strides = [1, 1]} : vector<16x96xf32> to vector<16x32xf32>
    %45 = vector.shape_cast %42 : vector<16x32xf32> to vector<2x8x32xf32>
    %46 = vector.shape_cast %43 : vector<16x32xf32> to vector<2x8x32xf32>
    %47 = vector.shape_cast %44 : vector<16x32xf32> to vector<2x8x32xf32>
    %48 = tpu.iota {dimensions = array<i32: 2>} : vector<1x1x32xi32>
    %cst_42 = arith.constant 0.000000e+00 : f32
    %49 = vector.broadcast %cst_42 : f32 to vector<2x8x32xf32>
    %c0_i32 = arith.constant 0 : i32
    %50 = vector.broadcast %c0_i32 : i32 to vector<1x1x32xi32>
    %51 = arith.cmpi sge, %48, %50 : vector<1x1x32xi32>
    %c8_i32 = arith.constant 8 : i32
    %52 = vector.broadcast %c8_i32 : i32 to vector<1x1x32xi32>
    %53 = arith.cmpi slt, %48, %52 : vector<1x1x32xi32>
    %54 = arith.andi %51, %53 : vector<1x1x32xi1>
    %55 = arith.extui %54 : vector<1x1x32xi1> to vector<1x1x32xi32>
    %56 = arith.sitofp %55 : vector<1x1x32xi32> to vector<1x1x32xf32>
    %57 = vector.broadcast %56 : vector<1x1x32xf32> to vector<2x8x32xf32>
    %58 = arith.mulf %46, %57 : vector<2x8x32xf32>
    %59 = vector.broadcast %56 : vector<1x1x32xf32> to vector<2x8x32xf32>
    %60 = arith.mulf %47, %59 : vector<2x8x32xf32>
    "tpu.trace_start"() <{level = 10 : i32, message = "bqd,bkd->bqk"}> : () -> ()
    %cst_43 = arith.constant dense<0.000000e+00> : vector<2x8x8xf32>
    %61 = tpu.matmul %45, %58, %cst_43 {dimension_numbers = #tpu.dot_dimension_numbers<[2], [2], [1], [1], [0, 0, 0, 1, 1, 1], [0], [0]>} : vector<2x8x32xf32>, vector<2x8x32xf32>, vector<2x8x8xf32> -> vector<2x8x8xf32>
    "tpu.trace_stop"() : () -> ()
    %cst_44 = arith.constant dense<0xFF800000> : vector<2x8xf32>
    %62 = vector.multi_reduction <maximumf>, %61, %cst_44 [2] : vector<2x8x8xf32> to vector<2x8xf32>
    %63 = vector.shape_cast %62 : vector<2x8xf32> to vector<2x8x1xf32>
    %64 = vector.broadcast %63 : vector<2x8x1xf32> to vector<2x8x8xf32>
    %65 = arith.subf %61, %64 : vector<2x8x8xf32>
    %66 = math.exp %65 : vector<2x8x8xf32>
    %cst_45 = arith.constant dense<0.000000e+00> : vector<2x8xf32>
    %67 = vector.multi_reduction <add>, %66, %cst_45 [2] : vector<2x8x8xf32> to vector<2x8xf32>
    %68 = vector.shape_cast %67 : vector<2x8xf32> to vector<2x8x1xf32>
    %69 = vector.broadcast %68 : vector<2x8x1xf32> to vector<2x8x8xf32>
    %70 = arith.divf %66, %69 : vector<2x8x8xf32>
    "tpu.trace_start"() <{level = 10 : i32, message = "bqk,bkd->bqd"}> : () -> ()
    %cst_46 = arith.constant dense<0.000000e+00> : vector<2x8x32xf32>
    %71 = tpu.matmul %70, %60, %cst_46 {dimension_numbers = #tpu.dot_dimension_numbers<[2], [1], [1], [2], [0, 0, 0, 1, 1, 2], [0], [0]>} : vector<2x8x8xf32>, vector<2x8x32xf32>, vector<2x8x32xf32> -> vector<2x8x32xf32>
    "tpu.trace_stop"() : () -> ()
    %72 = arith.addf %49, %71 : vector<2x8x32xf32>
    %c8_i32_47 = arith.constant 8 : i32
    %73 = vector.broadcast %c8_i32_47 : i32 to vector<1x1x32xi32>
    %74 = arith.cmpi sge, %48, %73 : vector<1x1x32xi32>
    %c16_i32 = arith.constant 16 : i32
    %75 = vector.broadcast %c16_i32 : i32 to vector<1x1x32xi32>
    %76 = arith.cmpi slt, %48, %75 : vector<1x1x32xi32>
    %77 = arith.andi %74, %76 : vector<1x1x32xi1>
    %78 = arith.extui %77 : vector<1x1x32xi1> to vector<1x1x32xi32>
    %79 = arith.sitofp %78 : vector<1x1x32xi32> to vector<1x1x32xf32>
    %80 = vector.broadcast %79 : vector<1x1x32xf32> to vector<2x8x32xf32>
    %81 = arith.mulf %46, %80 : vector<2x8x32xf32>
    %82 = vector.broadcast %79 : vector<1x1x32xf32> to vector<2x8x32xf32>
    %83 = arith.mulf %47, %82 : vector<2x8x32xf32>
    "tpu.trace_start"() <{level = 10 : i32, message = "bqd,bkd->bqk"}> : () -> ()
    %cst_48 = arith.constant dense<0.000000e+00> : vector<2x8x8xf32>
    %84 = tpu.matmul %45, %81, %cst_48 {dimension_numbers = #tpu.dot_dimension_numbers<[2], [2], [1], [1], [0, 0, 0, 1, 1, 1], [0], [0]>} : vector<2x8x32xf32>, vector<2x8x32xf32>, vector<2x8x8xf32> -> vector<2x8x8xf32>
    "tpu.trace_stop"() : () -> ()
    %cst_49 = arith.constant dense<0xFF800000> : vector<2x8xf32>
    %85 = vector.multi_reduction <maximumf>, %84, %cst_49 [2] : vector<2x8x8xf32> to vector<2x8xf32>
    %86 = vector.shape_cast %85 : vector<2x8xf32> to vector<2x8x1xf32>
    %87 = vector.broadcast %86 : vector<2x8x1xf32> to vector<2x8x8xf32>
    %88 = arith.subf %84, %87 : vector<2x8x8xf32>
    %89 = math.exp %88 : vector<2x8x8xf32>
    %cst_50 = arith.constant dense<0.000000e+00> : vector<2x8xf32>
    %90 = vector.multi_reduction <add>, %89, %cst_50 [2] : vector<2x8x8xf32> to vector<2x8xf32>
    %91 = vector.shape_cast %90 : vector<2x8xf32> to vector<2x8x1xf32>
    %92 = vector.broadcast %91 : vector<2x8x1xf32> to vector<2x8x8xf32>
    %93 = arith.divf %89, %92 : vector<2x8x8xf32>
    "tpu.trace_start"() <{level = 10 : i32, message = "bqk,bkd->bqd"}> : () -> ()
    %cst_51 = arith.constant dense<0.000000e+00> : vector<2x8x32xf32>
    %94 = tpu.matmul %93, %83, %cst_51 {dimension_numbers = #tpu.dot_dimension_numbers<[2], [1], [1], [2], [0, 0, 0, 1, 1, 2], [0], [0]>} : vector<2x8x8xf32>, vector<2x8x32xf32>, vector<2x8x32xf32> -> vector<2x8x32xf32>
    "tpu.trace_stop"() : () -> ()
    %95 = arith.addf %72, %94 : vector<2x8x32xf32>
    %c16_i32_52 = arith.constant 16 : i32
    %96 = vector.broadcast %c16_i32_52 : i32 to vector<1x1x32xi32>
    %97 = arith.cmpi sge, %48, %96 : vector<1x1x32xi32>
    %c24_i32 = arith.constant 24 : i32
    %98 = vector.broadcast %c24_i32 : i32 to vector<1x1x32xi32>
    %99 = arith.cmpi slt, %48, %98 : vector<1x1x32xi32>
    %100 = arith.andi %97, %99 : vector<1x1x32xi1>
    %101 = arith.extui %100 : vector<1x1x32xi1> to vector<1x1x32xi32>
    %102 = arith.sitofp %101 : vector<1x1x32xi32> to vector<1x1x32xf32>
    %103 = vector.broadcast %102 : vector<1x1x32xf32> to vector<2x8x32xf32>
    %104 = arith.mulf %46, %103 : vector<2x8x32xf32>
    %105 = vector.broadcast %102 : vector<1x1x32xf32> to vector<2x8x32xf32>
    %106 = arith.mulf %47, %105 : vector<2x8x32xf32>
    "tpu.trace_start"() <{level = 10 : i32, message = "bqd,bkd->bqk"}> : () -> ()
    %cst_53 = arith.constant dense<0.000000e+00> : vector<2x8x8xf32>
    %107 = tpu.matmul %45, %104, %cst_53 {dimension_numbers = #tpu.dot_dimension_numbers<[2], [2], [1], [1], [0, 0, 0, 1, 1, 1], [0], [0]>} : vector<2x8x32xf32>, vector<2x8x32xf32>, vector<2x8x8xf32> -> vector<2x8x8xf32>
    "tpu.trace_stop"() : () -> ()
    %cst_54 = arith.constant dense<0xFF800000> : vector<2x8xf32>
    %108 = vector.multi_reduction <maximumf>, %107, %cst_54 [2] : vector<2x8x8xf32> to vector<2x8xf32>
    %109 = vector.shape_cast %108 : vector<2x8xf32> to vector<2x8x1xf32>
    %110 = vector.broadcast %109 : vector<2x8x1xf32> to vector<2x8x8xf32>
    %111 = arith.subf %107, %110 : vector<2x8x8xf32>
    %112 = math.exp %111 : vector<2x8x8xf32>
    %cst_55 = arith.constant dense<0.000000e+00> : vector<2x8xf32>
    %113 = vector.multi_reduction <add>, %112, %cst_55 [2] : vector<2x8x8xf32> to vector<2x8xf32>
    %114 = vector.shape_cast %113 : vector<2x8xf32> to vector<2x8x1xf32>
    %115 = vector.broadcast %114 : vector<2x8x1xf32> to vector<2x8x8xf32>
    %116 = arith.divf %112, %115 : vector<2x8x8xf32>
    "tpu.trace_start"() <{level = 10 : i32, message = "bqk,bkd->bqd"}> : () -> ()
    %cst_56 = arith.constant dense<0.000000e+00> : vector<2x8x32xf32>
    %117 = tpu.matmul %116, %106, %cst_56 {dimension_numbers = #tpu.dot_dimension_numbers<[2], [1], [1], [2], [0, 0, 0, 1, 1, 2], [0], [0]>} : vector<2x8x8xf32>, vector<2x8x32xf32>, vector<2x8x32xf32> -> vector<2x8x32xf32>
    "tpu.trace_stop"() : () -> ()
    %118 = arith.addf %95, %117 : vector<2x8x32xf32>
    %c24_i32_57 = arith.constant 24 : i32
    %119 = vector.broadcast %c24_i32_57 : i32 to vector<1x1x32xi32>
    %120 = arith.cmpi sge, %48, %119 : vector<1x1x32xi32>
    %c32_i32 = arith.constant 32 : i32
    %121 = vector.broadcast %c32_i32 : i32 to vector<1x1x32xi32>
    %122 = arith.cmpi slt, %48, %121 : vector<1x1x32xi32>
    %123 = arith.andi %120, %122 : vector<1x1x32xi1>
    %124 = arith.extui %123 : vector<1x1x32xi1> to vector<1x1x32xi32>
    %125 = arith.sitofp %124 : vector<1x1x32xi32> to vector<1x1x32xf32>
    %126 = vector.broadcast %125 : vector<1x1x32xf32> to vector<2x8x32xf32>
    %127 = arith.mulf %46, %126 : vector<2x8x32xf32>
    %128 = vector.broadcast %125 : vector<1x1x32xf32> to vector<2x8x32xf32>
    %129 = arith.mulf %47, %128 : vector<2x8x32xf32>
    "tpu.trace_start"() <{level = 10 : i32, message = "bqd,bkd->bqk"}> : () -> ()
    %cst_58 = arith.constant dense<0.000000e+00> : vector<2x8x8xf32>
    %130 = tpu.matmul %45, %127, %cst_58 {dimension_numbers = #tpu.dot_dimension_numbers<[2], [2], [1], [1], [0, 0, 0, 1, 1, 1], [0], [0]>} : vector<2x8x32xf32>, vector<2x8x32xf32>, vector<2x8x8xf32> -> vector<2x8x8xf32>
    "tpu.trace_stop"() : () -> ()
    %cst_59 = arith.constant dense<0xFF800000> : vector<2x8xf32>
    %131 = vector.multi_reduction <maximumf>, %130, %cst_59 [2] : vector<2x8x8xf32> to vector<2x8xf32>
    %132 = vector.shape_cast %131 : vector<2x8xf32> to vector<2x8x1xf32>
    %133 = vector.broadcast %132 : vector<2x8x1xf32> to vector<2x8x8xf32>
    %134 = arith.subf %130, %133 : vector<2x8x8xf32>
    %135 = math.exp %134 : vector<2x8x8xf32>
    %cst_60 = arith.constant dense<0.000000e+00> : vector<2x8xf32>
    %136 = vector.multi_reduction <add>, %135, %cst_60 [2] : vector<2x8x8xf32> to vector<2x8xf32>
    %137 = vector.shape_cast %136 : vector<2x8xf32> to vector<2x8x1xf32>
    %138 = vector.broadcast %137 : vector<2x8x1xf32> to vector<2x8x8xf32>
    %139 = arith.divf %135, %138 : vector<2x8x8xf32>
    "tpu.trace_start"() <{level = 10 : i32, message = "bqk,bkd->bqd"}> : () -> ()
    %cst_61 = arith.constant dense<0.000000e+00> : vector<2x8x32xf32>
    %140 = tpu.matmul %139, %129, %cst_61 {dimension_numbers = #tpu.dot_dimension_numbers<[2], [1], [1], [2], [0, 0, 0, 1, 1, 2], [0], [0]>} : vector<2x8x8xf32>, vector<2x8x32xf32>, vector<2x8x32xf32> -> vector<2x8x32xf32>
    "tpu.trace_stop"() : () -> ()
    %141 = arith.addf %118, %140 : vector<2x8x32xf32>
    %142 = vector.shape_cast %141 : vector<2x8x32xf32> to vector<16x32xf32>
    %143 = arith.truncf %142 : vector<16x32xf32> to vector<16x32xbf16>
    %cst_62 = arith.constant dense<0.000000e+00> : vector<16x32xf32>
    %144 = tpu.matmul %143, %11, %cst_62 {dimension_numbers = #tpu.dot_dimension_numbers<[1], [0], [0], [1], [0, 0, 1, 1], [], []>} : vector<16x32xbf16>, vector<32x32xbf16>, vector<16x32xf32> -> vector<16x32xf32>
    %145 = vector.broadcast %20 : vector<1x32xf32> to vector<16x32xf32>
    %146 = arith.addf %144, %145 : vector<16x32xf32>
    %147 = arith.addf %37, %146 : vector<16x32xf32>
    %cst_63 = arith.constant dense<0.000000e+00> : vector<16xf32>
    %148 = vector.multi_reduction <add>, %147, %cst_63 [1] : vector<16x32xf32> to vector<16xf32>
    %149 = vector.shape_cast %148 : vector<16xf32> to vector<16x1xf32>
    %cst_64 = arith.constant 3.200000e+01 : f32
    %150 = vector.broadcast %cst_64 : f32 to vector<16x1xf32>
    %151 = arith.divf %149, %150 : vector<16x1xf32>
    %152 = vector.broadcast %151 : vector<16x1xf32> to vector<16x32xf32>
    %153 = arith.subf %147, %152 : vector<16x32xf32>
    %154 = arith.mulf %153, %153 : vector<16x32xf32>
    %cst_65 = arith.constant dense<0.000000e+00> : vector<16xf32>
    %155 = vector.multi_reduction <add>, %154, %cst_65 [1] : vector<16x32xf32> to vector<16xf32>
    %156 = vector.shape_cast %155 : vector<16xf32> to vector<16x1xf32>
    %cst_66 = arith.constant 3.200000e+01 : f32
    %157 = vector.broadcast %cst_66 : f32 to vector<16x1xf32>
    %158 = arith.divf %156, %157 : vector<16x1xf32>
    %159 = vector.broadcast %151 : vector<16x1xf32> to vector<16x32xf32>
    %160 = arith.subf %147, %159 : vector<16x32xf32>
    %cst_67 = arith.constant 9.99999974E-6 : f32
    %161 = vector.broadcast %cst_67 : f32 to vector<16x1xf32>
    %162 = arith.addf %158, %161 : vector<16x1xf32>
    %163 = math.rsqrt %162 : vector<16x1xf32>
    %164 = vector.broadcast %163 : vector<16x1xf32> to vector<16x32xf32>
    %165 = arith.mulf %160, %164 : vector<16x32xf32>
    %166 = vector.broadcast %24 : vector<1x32xf32> to vector<16x32xf32>
    %167 = arith.mulf %165, %166 : vector<16x32xf32>
    %168 = vector.broadcast %25 : vector<1x32xf32> to vector<16x32xf32>
    %169 = arith.addf %167, %168 : vector<16x32xf32>
    %c0_68 = arith.constant 0 : index
    %c0_69 = arith.constant 0 : index
    %170 = vector.load %arg2[%c0_68, %c0_69] : memref<32x32xf32, #tpu.memory_space<vmem>>, vector<32x32xf32>
    %171 = arith.truncf %169 : vector<16x32xf32> to vector<16x32xbf16>
    %cst_70 = arith.constant dense<0.000000e+00> : vector<16x32xf32>
    %172 = tpu.matmul %171, %5, %cst_70 {dimension_numbers = #tpu.dot_dimension_numbers<[1], [0], [0], [1], [0, 0, 1, 1], [], []>} : vector<16x32xbf16>, vector<32x32xbf16>, vector<16x32xf32> -> vector<16x32xf32>
    %173 = vector.broadcast %18 : vector<1x32xf32> to vector<16x32xf32>
    %174 = arith.addf %172, %173 : vector<16x32xf32>
    %175 = arith.truncf %170 : vector<32x32xf32> to vector<32x32xbf16>
    %cst_71 = arith.constant dense<0.000000e+00> : vector<32x64xf32>
    %176 = tpu.matmul %175, %8, %cst_71 {dimension_numbers = #tpu.dot_dimension_numbers<[1], [0], [0], [1], [0, 0, 1, 1], [], []>} : vector<32x32xbf16>, vector<32x64xbf16>, vector<32x64xf32> -> vector<32x64xf32>
    %177 = vector.broadcast %19 : vector<1x64xf32> to vector<32x64xf32>
    %178 = arith.addf %176, %177 : vector<32x64xf32>
    %179 = vector.extract_strided_slice %178 {offsets = [0, 0], sizes = [32, 32], strides = [1, 1]} : vector<32x64xf32> to vector<32x32xf32>
    %180 = vector.extract_strided_slice %178 {offsets = [0, 32], sizes = [32, 32], strides = [1, 1]} : vector<32x64xf32> to vector<32x32xf32>
    %181 = vector.shape_cast %174 : vector<16x32xf32> to vector<2x8x32xf32>
    %182 = vector.shape_cast %179 : vector<32x32xf32> to vector<2x16x32xf32>
    %183 = vector.shape_cast %180 : vector<32x32xf32> to vector<2x16x32xf32>
    %184 = tpu.iota {dimensions = array<i32: 2>} : vector<1x1x32xi32>
    %cst_72 = arith.constant 0.000000e+00 : f32
    %185 = vector.broadcast %cst_72 : f32 to vector<2x8x32xf32>
    %c0_i32_73 = arith.constant 0 : i32
    %186 = vector.broadcast %c0_i32_73 : i32 to vector<1x1x32xi32>
    %187 = arith.cmpi sge, %184, %186 : vector<1x1x32xi32>
    %c8_i32_74 = arith.constant 8 : i32
    %188 = vector.broadcast %c8_i32_74 : i32 to vector<1x1x32xi32>
    %189 = arith.cmpi slt, %184, %188 : vector<1x1x32xi32>
    %190 = arith.andi %187, %189 : vector<1x1x32xi1>
    %191 = arith.extui %190 : vector<1x1x32xi1> to vector<1x1x32xi32>
    %192 = arith.sitofp %191 : vector<1x1x32xi32> to vector<1x1x32xf32>
    %193 = vector.broadcast %192 : vector<1x1x32xf32> to vector<2x16x32xf32>
    %194 = arith.mulf %182, %193 : vector<2x16x32xf32>
    %195 = vector.broadcast %192 : vector<1x1x32xf32> to vector<2x16x32xf32>
    %196 = arith.mulf %183, %195 : vector<2x16x32xf32>
    "tpu.trace_start"() <{level = 10 : i32, message = "bqd,bkd->bqk"}> : () -> ()
    %cst_75 = arith.constant dense<0.000000e+00> : vector<2x8x16xf32>
    %197 = tpu.matmul %181, %194, %cst_75 {dimension_numbers = #tpu.dot_dimension_numbers<[2], [2], [1], [1], [0, 0, 0, 1, 1, 1], [0], [0]>} : vector<2x8x32xf32>, vector<2x16x32xf32>, vector<2x8x16xf32> -> vector<2x8x16xf32>
    "tpu.trace_stop"() : () -> ()
    %cst_76 = arith.constant dense<0xFF800000> : vector<2x8xf32>
    %198 = vector.multi_reduction <maximumf>, %197, %cst_76 [2] : vector<2x8x16xf32> to vector<2x8xf32>
    %199 = vector.shape_cast %198 : vector<2x8xf32> to vector<2x8x1xf32>
    %200 = vector.broadcast %199 : vector<2x8x1xf32> to vector<2x8x16xf32>
    %201 = arith.subf %197, %200 : vector<2x8x16xf32>
    %202 = math.exp %201 : vector<2x8x16xf32>
    %cst_77 = arith.constant dense<0.000000e+00> : vector<2x8xf32>
    %203 = vector.multi_reduction <add>, %202, %cst_77 [2] : vector<2x8x16xf32> to vector<2x8xf32>
    %204 = vector.shape_cast %203 : vector<2x8xf32> to vector<2x8x1xf32>
    %205 = vector.broadcast %204 : vector<2x8x1xf32> to vector<2x8x16xf32>
    %206 = arith.divf %202, %205 : vector<2x8x16xf32>
    "tpu.trace_start"() <{level = 10 : i32, message = "bqk,bkd->bqd"}> : () -> ()
    %cst_78 = arith.constant dense<0.000000e+00> : vector<2x8x32xf32>
    %207 = tpu.matmul %206, %196, %cst_78 {dimension_numbers = #tpu.dot_dimension_numbers<[2], [1], [1], [2], [0, 0, 0, 1, 1, 2], [0], [0]>} : vector<2x8x16xf32>, vector<2x16x32xf32>, vector<2x8x32xf32> -> vector<2x8x32xf32>
    "tpu.trace_stop"() : () -> ()
    %208 = arith.addf %185, %207 : vector<2x8x32xf32>
    %c8_i32_79 = arith.constant 8 : i32
    %209 = vector.broadcast %c8_i32_79 : i32 to vector<1x1x32xi32>
    %210 = arith.cmpi sge, %184, %209 : vector<1x1x32xi32>
    %c16_i32_80 = arith.constant 16 : i32
    %211 = vector.broadcast %c16_i32_80 : i32 to vector<1x1x32xi32>
    %212 = arith.cmpi slt, %184, %211 : vector<1x1x32xi32>
    %213 = arith.andi %210, %212 : vector<1x1x32xi1>
    %214 = arith.extui %213 : vector<1x1x32xi1> to vector<1x1x32xi32>
    %215 = arith.sitofp %214 : vector<1x1x32xi32> to vector<1x1x32xf32>
    %216 = vector.broadcast %215 : vector<1x1x32xf32> to vector<2x16x32xf32>
    %217 = arith.mulf %182, %216 : vector<2x16x32xf32>
    %218 = vector.broadcast %215 : vector<1x1x32xf32> to vector<2x16x32xf32>
    %219 = arith.mulf %183, %218 : vector<2x16x32xf32>
    "tpu.trace_start"() <{level = 10 : i32, message = "bqd,bkd->bqk"}> : () -> ()
    %cst_81 = arith.constant dense<0.000000e+00> : vector<2x8x16xf32>
    %220 = tpu.matmul %181, %217, %cst_81 {dimension_numbers = #tpu.dot_dimension_numbers<[2], [2], [1], [1], [0, 0, 0, 1, 1, 1], [0], [0]>} : vector<2x8x32xf32>, vector<2x16x32xf32>, vector<2x8x16xf32> -> vector<2x8x16xf32>
    "tpu.trace_stop"() : () -> ()
    %cst_82 = arith.constant dense<0xFF800000> : vector<2x8xf32>
    %221 = vector.multi_reduction <maximumf>, %220, %cst_82 [2] : vector<2x8x16xf32> to vector<2x8xf32>
    %222 = vector.shape_cast %221 : vector<2x8xf32> to vector<2x8x1xf32>
    %223 = vector.broadcast %222 : vector<2x8x1xf32> to vector<2x8x16xf32>
    %224 = arith.subf %220, %223 : vector<2x8x16xf32>
    %225 = math.exp %224 : vector<2x8x16xf32>
    %cst_83 = arith.constant dense<0.000000e+00> : vector<2x8xf32>
    %226 = vector.multi_reduction <add>, %225, %cst_83 [2] : vector<2x8x16xf32> to vector<2x8xf32>
    %227 = vector.shape_cast %226 : vector<2x8xf32> to vector<2x8x1xf32>
    %228 = vector.broadcast %227 : vector<2x8x1xf32> to vector<2x8x16xf32>
    %229 = arith.divf %225, %228 : vector<2x8x16xf32>
    "tpu.trace_start"() <{level = 10 : i32, message = "bqk,bkd->bqd"}> : () -> ()
    %cst_84 = arith.constant dense<0.000000e+00> : vector<2x8x32xf32>
    %230 = tpu.matmul %229, %219, %cst_84 {dimension_numbers = #tpu.dot_dimension_numbers<[2], [1], [1], [2], [0, 0, 0, 1, 1, 2], [0], [0]>} : vector<2x8x16xf32>, vector<2x16x32xf32>, vector<2x8x32xf32> -> vector<2x8x32xf32>
    "tpu.trace_stop"() : () -> ()
    %231 = arith.addf %208, %230 : vector<2x8x32xf32>
    %c16_i32_85 = arith.constant 16 : i32
    %232 = vector.broadcast %c16_i32_85 : i32 to vector<1x1x32xi32>
    %233 = arith.cmpi sge, %184, %232 : vector<1x1x32xi32>
    %c24_i32_86 = arith.constant 24 : i32
    %234 = vector.broadcast %c24_i32_86 : i32 to vector<1x1x32xi32>
    %235 = arith.cmpi slt, %184, %234 : vector<1x1x32xi32>
    %236 = arith.andi %233, %235 : vector<1x1x32xi1>
    %237 = arith.extui %236 : vector<1x1x32xi1> to vector<1x1x32xi32>
    %238 = arith.sitofp %237 : vector<1x1x32xi32> to vector<1x1x32xf32>
    %239 = vector.broadcast %238 : vector<1x1x32xf32> to vector<2x16x32xf32>
    %240 = arith.mulf %182, %239 : vector<2x16x32xf32>
    %241 = vector.broadcast %238 : vector<1x1x32xf32> to vector<2x16x32xf32>
    %242 = arith.mulf %183, %241 : vector<2x16x32xf32>
    "tpu.trace_start"() <{level = 10 : i32, message = "bqd,bkd->bqk"}> : () -> ()
    %cst_87 = arith.constant dense<0.000000e+00> : vector<2x8x16xf32>
    %243 = tpu.matmul %181, %240, %cst_87 {dimension_numbers = #tpu.dot_dimension_numbers<[2], [2], [1], [1], [0, 0, 0, 1, 1, 1], [0], [0]>} : vector<2x8x32xf32>, vector<2x16x32xf32>, vector<2x8x16xf32> -> vector<2x8x16xf32>
    "tpu.trace_stop"() : () -> ()
    %cst_88 = arith.constant dense<0xFF800000> : vector<2x8xf32>
    %244 = vector.multi_reduction <maximumf>, %243, %cst_88 [2] : vector<2x8x16xf32> to vector<2x8xf32>
    %245 = vector.shape_cast %244 : vector<2x8xf32> to vector<2x8x1xf32>
    %246 = vector.broadcast %245 : vector<2x8x1xf32> to vector<2x8x16xf32>
    %247 = arith.subf %243, %246 : vector<2x8x16xf32>
    %248 = math.exp %247 : vector<2x8x16xf32>
    %cst_89 = arith.constant dense<0.000000e+00> : vector<2x8xf32>
    %249 = vector.multi_reduction <add>, %248, %cst_89 [2] : vector<2x8x16xf32> to vector<2x8xf32>
    %250 = vector.shape_cast %249 : vector<2x8xf32> to vector<2x8x1xf32>
    %251 = vector.broadcast %250 : vector<2x8x1xf32> to vector<2x8x16xf32>
    %252 = arith.divf %248, %251 : vector<2x8x16xf32>
    "tpu.trace_start"() <{level = 10 : i32, message = "bqk,bkd->bqd"}> : () -> ()
    %cst_90 = arith.constant dense<0.000000e+00> : vector<2x8x32xf32>
    %253 = tpu.matmul %252, %242, %cst_90 {dimension_numbers = #tpu.dot_dimension_numbers<[2], [1], [1], [2], [0, 0, 0, 1, 1, 2], [0], [0]>} : vector<2x8x16xf32>, vector<2x16x32xf32>, vector<2x8x32xf32> -> vector<2x8x32xf32>
    "tpu.trace_stop"() : () -> ()
    %254 = arith.addf %231, %253 : vector<2x8x32xf32>
    %c24_i32_91 = arith.constant 24 : i32
    %255 = vector.broadcast %c24_i32_91 : i32 to vector<1x1x32xi32>
    %256 = arith.cmpi sge, %184, %255 : vector<1x1x32xi32>
    %c32_i32_92 = arith.constant 32 : i32
    %257 = vector.broadcast %c32_i32_92 : i32 to vector<1x1x32xi32>
    %258 = arith.cmpi slt, %184, %257 : vector<1x1x32xi32>
    %259 = arith.andi %256, %258 : vector<1x1x32xi1>
    %260 = arith.extui %259 : vector<1x1x32xi1> to vector<1x1x32xi32>
    %261 = arith.sitofp %260 : vector<1x1x32xi32> to vector<1x1x32xf32>
    %262 = vector.broadcast %261 : vector<1x1x32xf32> to vector<2x16x32xf32>
    %263 = arith.mulf %182, %262 : vector<2x16x32xf32>
    %264 = vector.broadcast %261 : vector<1x1x32xf32> to vector<2x16x32xf32>
    %265 = arith.mulf %183, %264 : vector<2x16x32xf32>
    "tpu.trace_start"() <{level = 10 : i32, message = "bqd,bkd->bqk"}> : () -> ()
    %cst_93 = arith.constant dense<0.000000e+00> : vector<2x8x16xf32>
    %266 = tpu.matmul %181, %263, %cst_93 {dimension_numbers = #tpu.dot_dimension_numbers<[2], [2], [1], [1], [0, 0, 0, 1, 1, 1], [0], [0]>} : vector<2x8x32xf32>, vector<2x16x32xf32>, vector<2x8x16xf32> -> vector<2x8x16xf32>
    "tpu.trace_stop"() : () -> ()
    %cst_94 = arith.constant dense<0xFF800000> : vector<2x8xf32>
    %267 = vector.multi_reduction <maximumf>, %266, %cst_94 [2] : vector<2x8x16xf32> to vector<2x8xf32>
    %268 = vector.shape_cast %267 : vector<2x8xf32> to vector<2x8x1xf32>
    %269 = vector.broadcast %268 : vector<2x8x1xf32> to vector<2x8x16xf32>
    %270 = arith.subf %266, %269 : vector<2x8x16xf32>
    %271 = math.exp %270 : vector<2x8x16xf32>
    %cst_95 = arith.constant dense<0.000000e+00> : vector<2x8xf32>
    %272 = vector.multi_reduction <add>, %271, %cst_95 [2] : vector<2x8x16xf32> to vector<2x8xf32>
    %273 = vector.shape_cast %272 : vector<2x8xf32> to vector<2x8x1xf32>
    %274 = vector.broadcast %273 : vector<2x8x1xf32> to vector<2x8x16xf32>
    %275 = arith.divf %271, %274 : vector<2x8x16xf32>
    "tpu.trace_start"() <{level = 10 : i32, message = "bqk,bkd->bqd"}> : () -> ()
    %cst_96 = arith.constant dense<0.000000e+00> : vector<2x8x32xf32>
    %276 = tpu.matmul %275, %265, %cst_96 {dimension_numbers = #tpu.dot_dimension_numbers<[2], [1], [1], [2], [0, 0, 0, 1, 1, 2], [0], [0]>} : vector<2x8x16xf32>, vector<2x16x32xf32>, vector<2x8x32xf32> -> vector<2x8x32xf32>
    "tpu.trace_stop"() : () -> ()
    %277 = arith.addf %254, %276 : vector<2x8x32xf32>
    %278 = vector.shape_cast %277 : vector<2x8x32xf32> to vector<16x32xf32>
    %279 = arith.truncf %278 : vector<16x32xf32> to vector<16x32xbf16>
    %cst_97 = arith.constant dense<0.000000e+00> : vector<16x32xf32>
    %280 = tpu.matmul %279, %14, %cst_97 {dimension_numbers = #tpu.dot_dimension_numbers<[1], [0], [0], [1], [0, 0, 1, 1], [], []>} : vector<16x32xbf16>, vector<32x32xbf16>, vector<16x32xf32> -> vector<16x32xf32>
    %281 = vector.broadcast %21 : vector<1x32xf32> to vector<16x32xf32>
    %282 = arith.addf %280, %281 : vector<16x32xf32>
    %283 = arith.addf %169, %282 : vector<16x32xf32>
    %cst_98 = arith.constant dense<0.000000e+00> : vector<16xf32>
    %284 = vector.multi_reduction <add>, %283, %cst_98 [1] : vector<16x32xf32> to vector<16xf32>
    %285 = vector.shape_cast %284 : vector<16xf32> to vector<16x1xf32>
    %cst_99 = arith.constant 3.200000e+01 : f32
    %286 = vector.broadcast %cst_99 : f32 to vector<16x1xf32>
    %287 = arith.divf %285, %286 : vector<16x1xf32>
    %288 = vector.broadcast %287 : vector<16x1xf32> to vector<16x32xf32>
    %289 = arith.subf %283, %288 : vector<16x32xf32>
    %290 = arith.mulf %289, %289 : vector<16x32xf32>
    %cst_100 = arith.constant dense<0.000000e+00> : vector<16xf32>
    %291 = vector.multi_reduction <add>, %290, %cst_100 [1] : vector<16x32xf32> to vector<16xf32>
    %292 = vector.shape_cast %291 : vector<16xf32> to vector<16x1xf32>
    %cst_101 = arith.constant 3.200000e+01 : f32
    %293 = vector.broadcast %cst_101 : f32 to vector<16x1xf32>
    %294 = arith.divf %292, %293 : vector<16x1xf32>
    %295 = vector.broadcast %287 : vector<16x1xf32> to vector<16x32xf32>
    %296 = arith.subf %283, %295 : vector<16x32xf32>
    %cst_102 = arith.constant 9.99999974E-6 : f32
    %297 = vector.broadcast %cst_102 : f32 to vector<16x1xf32>
    %298 = arith.addf %294, %297 : vector<16x1xf32>
    %299 = math.rsqrt %298 : vector<16x1xf32>
    %300 = vector.broadcast %299 : vector<16x1xf32> to vector<16x32xf32>
    %301 = arith.mulf %296, %300 : vector<16x32xf32>
    %302 = vector.broadcast %26 : vector<1x32xf32> to vector<16x32xf32>
    %303 = arith.mulf %301, %302 : vector<16x32xf32>
    %304 = vector.broadcast %27 : vector<1x32xf32> to vector<16x32xf32>
    %305 = arith.addf %303, %304 : vector<16x32xf32>
    %306 = arith.truncf %305 : vector<16x32xf32> to vector<16x32xbf16>
    %c0_103 = arith.constant 0 : index
    %c0_104 = arith.constant 0 : index
    %307 = vector.load %arg5[%c0_103, %c0_104] : memref<32x2048xbf16, #tpu.memory_space<vmem>>, vector<32x2048xbf16>
    %cst_105 = arith.constant dense<0.000000e+00> : vector<16x2048xf32>
    %308 = tpu.matmul %306, %307, %cst_105 {dimension_numbers = #tpu.dot_dimension_numbers<[1], [0], [0], [1], [0, 0, 1, 1], [], []>} : vector<16x32xbf16>, vector<32x2048xbf16>, vector<16x2048xf32> -> vector<16x2048xf32>
    %c0_106 = arith.constant 0 : index
    %c0_107 = arith.constant 0 : index
    %309 = vector.load %arg6[%c0_106, %c0_107] : memref<1x2048xf32, #tpu.memory_space<vmem>>, vector<1x2048xf32>
    %310 = vector.broadcast %309 : vector<1x2048xf32> to vector<16x2048xf32>
    %311 = arith.addf %308, %310 : vector<16x2048xf32>
    %cst_108 = arith.constant 0.000000e+00 : f32
    %312 = vector.broadcast %cst_108 : f32 to vector<16x2048xf32>
    %313 = arith.maximumf %311, %312 : vector<16x2048xf32>
    %314 = arith.truncf %313 : vector<16x2048xf32> to vector<16x2048xbf16>
    %c0_109 = arith.constant 0 : index
    %c0_110 = arith.constant 0 : index
    %315 = vector.load %arg7[%c0_109, %c0_110] : memref<2048x32xbf16, #tpu.memory_space<vmem>>, vector<2048x32xbf16>
    %cst_111 = arith.constant dense<0.000000e+00> : vector<16x32xf32>
    %316 = tpu.matmul %314, %315, %cst_111 {dimension_numbers = #tpu.dot_dimension_numbers<[1], [0], [0], [1], [0, 0, 1, 1], [], []>} : vector<16x2048xbf16>, vector<2048x32xbf16>, vector<16x32xf32> -> vector<16x32xf32>
    %317 = vector.broadcast %22 : vector<1x32xf32> to vector<16x32xf32>
    %318 = arith.addf %316, %317 : vector<16x32xf32>
    %319 = arith.addf %305, %318 : vector<16x32xf32>
    %cst_112 = arith.constant dense<0.000000e+00> : vector<16xf32>
    %320 = vector.multi_reduction <add>, %319, %cst_112 [1] : vector<16x32xf32> to vector<16xf32>
    %321 = vector.shape_cast %320 : vector<16xf32> to vector<16x1xf32>
    %cst_113 = arith.constant 3.200000e+01 : f32
    %322 = vector.broadcast %cst_113 : f32 to vector<16x1xf32>
    %323 = arith.divf %321, %322 : vector<16x1xf32>
    %324 = vector.broadcast %323 : vector<16x1xf32> to vector<16x32xf32>
    %325 = arith.subf %319, %324 : vector<16x32xf32>
    %326 = arith.mulf %325, %325 : vector<16x32xf32>
    %cst_114 = arith.constant dense<0.000000e+00> : vector<16xf32>
    %327 = vector.multi_reduction <add>, %326, %cst_114 [1] : vector<16x32xf32> to vector<16xf32>
    %328 = vector.shape_cast %327 : vector<16xf32> to vector<16x1xf32>
    %cst_115 = arith.constant 3.200000e+01 : f32
    %329 = vector.broadcast %cst_115 : f32 to vector<16x1xf32>
    %330 = arith.divf %328, %329 : vector<16x1xf32>
    %331 = vector.broadcast %323 : vector<16x1xf32> to vector<16x32xf32>
    %332 = arith.subf %319, %331 : vector<16x32xf32>
    %cst_116 = arith.constant 9.99999974E-6 : f32
    %333 = vector.broadcast %cst_116 : f32 to vector<16x1xf32>
    %334 = arith.addf %330, %333 : vector<16x1xf32>
    %335 = math.rsqrt %334 : vector<16x1xf32>
    %336 = vector.broadcast %335 : vector<16x1xf32> to vector<16x32xf32>
    %337 = arith.mulf %332, %336 : vector<16x32xf32>
    %338 = vector.broadcast %28 : vector<1x32xf32> to vector<16x32xf32>
    %339 = arith.mulf %337, %338 : vector<16x32xf32>
    %340 = vector.broadcast %29 : vector<1x32xf32> to vector<16x32xf32>
    %341 = arith.addf %339, %340 : vector<16x32xf32>
    %342 = arith.truncf %341 : vector<16x32xf32> to vector<16x32xbf16>
    %cst_117 = arith.constant dense<0.000000e+00> : vector<16x128xf32>
    %343 = tpu.matmul %342, %16, %cst_117 {dimension_numbers = #tpu.dot_dimension_numbers<[1], [0], [0], [1], [0, 0, 1, 1], [], []>} : vector<16x32xbf16>, vector<32x128xbf16>, vector<16x128xf32> -> vector<16x128xf32>
    %344 = vector.broadcast %23 : vector<1x128xf32> to vector<16x128xf32>
    %345 = arith.addf %343, %344 : vector<16x128xf32>
    %c0_118 = arith.constant 0 : index
    %c0_119 = arith.constant 0 : index
    %346 = vector.load %arg10[%c0_118, %c0_119] : memref<16x128xf32, #tpu.memory_space<vmem>>, vector<16x128xf32>
    tpu.vector_store %arg10[%c0_118, %c0_119], %345 {strides = array<i32>} : memref<16x128xf32, #tpu.memory_space<vmem>>, vector<16x128xf32>,
    return
  }
  func.func @transform_0(%arg0: i32) -> (i32, i32) {
    %c0_i32 = arith.constant 0 : i32
    %c0_i32_0 = arith.constant 0 : i32
    %c0_i32_1 = arith.constant 0 : i32
    return %c0_i32, %c0_i32_0 : i32, i32
  }
  func.func @transform_1(%arg0: i32) -> (i32, i32) {
    %c0_i32 = arith.constant 0 : i32
    %c0_i32_0 = arith.constant 0 : i32
    %c0_i32_1 = arith.constant 0 : i32
    return %c0_i32, %c0_i32_0 : i32, i32
  }
  func.func @transform_2(%arg0: i32) -> (i32, i32) {
    %c0_i32 = arith.constant 0 : i32
    %c0_i32_0 = arith.constant 0 : i32
    %c0_i32_1 = arith.constant 0 : i32
    return %c0_i32, %c0_i32_0 : i32, i32
  }
  func.func @transform_3(%arg0: i32) -> (i32, i32, i32) {
    %c0_i32 = arith.constant 0 : i32
    %c0_i32_0 = arith.constant 0 : i32
    %c0_i32_1 = arith.constant 0 : i32
    %c0_i32_2 = arith.constant 0 : i32
    return %c0_i32, %c0_i32_0, %c0_i32_1 : i32, i32, i32
  }
  func.func @transform_4(%arg0: i32) -> (i32, i32) {
    %c0_i32 = arith.constant 0 : i32
    %c0_i32_0 = arith.constant 0 : i32
    %c0_i32_1 = arith.constant 0 : i32
    return %c0_i32, %c0_i32_0 : i32, i32
  }
  func.func @transform_5(%arg0: i32) -> (i32, i32) {
    %c0_i32 = arith.constant 0 : i32
    %c0_i32_0 = arith.constant 0 : i32
    %c0_i32_1 = arith.constant 0 : i32
    return %c0_i32, %c0_i32_0 : i32, i32
  }
  func.func @transform_6(%arg0: i32) -> (i32, i32) {
    %c0_i32 = arith.constant 0 : i32
    %c0_i32_0 = arith.constant 0 : i32
    %c0_i32_1 = arith.constant 0 : i32
    return %c0_i32, %c0_i32_0 : i32, i32
  }
  func.func @transform_7(%arg0: i32) -> (i32, i32) {
    %c0_i32 = arith.constant 0 : i32
    %c0_i32_0 = arith.constant 0 : i32
    %c0_i32_1 = arith.constant 0 : i32
    return %c0_i32, %c0_i32_0 : i32, i32
  }
  func.func @transform_8(%arg0: i32) -> (i32, i32) {
    %c0_i32 = arith.constant 0 : i32
    %c0_i32_0 = arith.constant 0 : i32
    %c0_i32_1 = arith.constant 0 : i32
    return %c0_i32, %c0_i32_0 : i32, i32
  }
  func.func @transform_9(%arg0: i32) -> (i32, i32) {
    %c0_i32 = arith.constant 0 : i32
    %c0_i32_0 = arith.constant 0 : i32
    %c0_i32_1 = arith.constant 0 : i32
    return %c0_i32, %c0_i32_0 : i32, i32
  }
}

</mosaic_0001>

<llo_original>
// kernel: decoder_transformer_forward.1
$region0: #{decoder_transformer_forward.1}
  #allocation0 [shape = 'u32[]', space=smem, size = 0x4, offset = 0x4, fixed_abs, tag = 'smem constant byte address 0x4 - core index']
  #allocation1 [shape = 'u32[144,128]{1,0:T(1,128)}', space=vmem, size = 0x12000, scoped, tag = 'internal scratch']
  %s0 = inlined_call_operand.vmem [shape: s32[16,1], index: 0, kind: input, shape index: {}]
  %s1 = inlined_call_operand.vmem [shape: f32[32,32], index: 1, kind: input, shape index: {}]
  %s2 = inlined_call_operand.vmem [shape: f32[32,32], index: 2, kind: input, shape index: {}]
  %s3 = inlined_call_operand.vmem [shape: bf16[6,32,128], index: 3, kind: input, shape index: {}]
  %s4 = inlined_call_operand.vmem [shape: bf16[32,2048], index: 4, kind: input, shape index: {}]
  %s5 = inlined_call_operand.vmem [shape: f32[1,2048], index: 5, kind: input, shape index: {}]
  %s6 = inlined_call_operand.vmem [shape: bf16[2048,32], index: 6, kind: input, shape index: {}]
  %s7 = inlined_call_operand.vmem [shape: f32[8,128], index: 7, kind: input, shape index: {}]
  %s8 = inlined_call_operand.vmem [shape: f32[6,32], index: 8, kind: input, shape index: {}]
  %s9 = inlined_call_operand.hbm [shape: f32[16,128], index: 9, kind: output, shape index: {}]
  %s10 = sld [smem:[#allocation0]]
  $region46: #{decoder_transformer_forward.1} parent=0
    _
  %s12 = ssub.s32 1, %s10
  %s13 = scalar_select 0, %s12, %s10
  $region1: #{decoder_transformer_forward.1} parent=0
    #allocation2 [shape = 'u8[8192]{0}', space=vmem, size = 0x2000, scoped, tag = 'output window, operand 0, single buffered']
    #allocation3 [shape = 's32[1]{0}', space=sflag, size = 0x4, scoped, tag = 'scoped memory for decoder_transformer_forward.1']
    %14 = vsyncpa [#allocation3], 0
    // Predicated region
    $region2: #{decoder_transformer_forward.1} parent=1 // pred_check
      _
    $region3: #{decoder_transformer_forward.1} parent=1 // pred_check_branch
      %16 = sbr.rel (0) target = $region5
    $region4: #{decoder_transformer_forward.1} parent=1 // pred_region
      _
    $region5: #{decoder_transformer_forward.1} parent=1 // pred_fallthru
      _
    // Predicated region
    $region6: #{decoder_transformer_forward.1} parent=1 // pred_check
      _
    $region7: #{decoder_transformer_forward.1} parent=1 // pred_check_branch
      %18 = sbr.rel (0) target = $region9
    $region8: #{decoder_transformer_forward.1} parent=1 // pred_region
      _
    $region9: #{decoder_transformer_forward.1} parent=1 // pred_fallthru
      _
    // Predicated region
    $region10: #{decoder_transformer_forward.1} parent=1 // pred_check
      _
    $region11: #{decoder_transformer_forward.1} parent=1 // pred_check_branch
      %20 = sbr.rel (0) target = $region13
    $region12: #{decoder_transformer_forward.1} parent=1 // pred_region
      _
    $region13: #{decoder_transformer_forward.1} parent=1 // pred_fallthru
      _
    // Predicated region
    $region14: #{decoder_transformer_forward.1} parent=1 // pred_check
      _
    $region15: #{decoder_transformer_forward.1} parent=1 // pred_check_branch
      %22 = sbr.rel (0) target = $region17
    $region16: #{decoder_transformer_forward.1} parent=1 // pred_region
      _
    $region17: #{decoder_transformer_forward.1} parent=1 // pred_fallthru
      _
    // Predicated region
    $region18: #{decoder_transformer_forward.1} parent=1 // pred_check
      _
    $region19: #{decoder_transformer_forward.1} parent=1 // pred_check_branch
      %24 = sbr.rel (0) target = $region21
    $region20: #{decoder_transformer_forward.1} parent=1 // pred_region
      _
    $region21: #{decoder_transformer_forward.1} parent=1 // pred_fallthru
      _
    // Predicated region
    $region22: #{decoder_transformer_forward.1} parent=1 // pred_check
      _
    $region23: #{decoder_transformer_forward.1} parent=1 // pred_check_branch
      %26 = sbr.rel (0) target = $region25
    $region24: #{decoder_transformer_forward.1} parent=1 // pred_region
      _
    $region25: #{decoder_transformer_forward.1} parent=1 // pred_fallthru
      _
    // Predicated region
    $region26: #{decoder_transformer_forward.1} parent=1 // pred_check
      _
    $region27: #{decoder_transformer_forward.1} parent=1 // pred_check_branch
      %28 = sbr.rel (0) target = $region29
    $region28: #{decoder_transformer_forward.1} parent=1 // pred_region
      _
    $region29: #{decoder_transformer_forward.1} parent=1 // pred_fallthru
      _
    // Predicated region
    $region30: #{decoder_transformer_forward.1} parent=1 // pred_check
      _
    $region31: #{decoder_transformer_forward.1} parent=1 // pred_check_branch
      %30 = sbr.rel (0) target = $region33
    $region32: #{decoder_transformer_forward.1} parent=1 // pred_region
      _
    $region33: #{decoder_transformer_forward.1} parent=1 // pred_fallthru
      _
    // Predicated region
    $region34: #{decoder_transformer_forward.1} parent=1 // pred_check
      _
    $region35: #{decoder_transformer_forward.1} parent=1 // pred_check_branch
      %32 = sbr.rel (0) target = $region37
    $region36: #{decoder_transformer_forward.1} parent=1 // pred_region
      _
    $region37: #{decoder_transformer_forward.1} parent=1 // pred_fallthru
      _
    %v34 = vld [vmem:[%s3] sm:$0xf]
    %v35 = vld [vmem:[%s3 + $0x4] sm:$0xf]
    %v36 = vld [vmem:[%s3 + $0x8] sm:$0xf]
    %v37 = vld [vmem:[%s3 + $0xc] sm:$0xf]
    %s38 = scalar_lea.vmem %s3, 16
    %v39 = vld [vmem:[%s38] sm:$0xf]
    %v40 = vld [vmem:[%s38 + $0x4] sm:$0xf]
    %v41 = vld [vmem:[%s38 + $0x8] sm:$0xf]
    %v42 = vld [vmem:[%s38 + $0xc] sm:$0xf]
    %s43 = scalar_lea.vmem %s3, 32
    %v44 = vld [vmem:[%s43] sm:$0xf]
    %v45 = vld [vmem:[%s43 + $0x4] sm:$0xf]
    %v46 = vld [vmem:[%s43 + $0x8] sm:$0xf]
    %v47 = vld [vmem:[%s43 + $0xc] sm:$0xf]
    %s48 = scalar_lea.vmem %s3, 48
    %v49 = vld [vmem:[%s48] sm:$0xf]
    %v50 = vld [vmem:[%s48 + $0x4] sm:$0xf]
    %v51 = vld [vmem:[%s48 + $0x8] sm:$0xf]
    %v52 = vld [vmem:[%s48 + $0xc] sm:$0xf]
    %s53 = scalar_lea.vmem %s3, 64
    %v54 = vld [vmem:[%s53] sm:$0xf]
    %v55 = vld [vmem:[%s53 + $0x4] sm:$0xf]
    %v56 = vld [vmem:[%s53 + $0x8] sm:$0xf]
    %v57 = vld [vmem:[%s53 + $0xc] sm:$0xf]
    %s58 = scalar_lea.vmem %s3, 80
    %v59 = vld [vmem:[%s58] sm:$0xf]
    %v60 = vld [vmem:[%s58 + $0x4] sm:$0xf]
    %v61 = vld [vmem:[%s58 + $0x8] sm:$0xf]
    %v62 = vld [vmem:[%s58 + $0xc] sm:$0xf]
    %v63 = vld [vmem:[%s7] sm:$0x1]
    %v64 = vld [vmem:[%s7 + $0x1] sm:$0x1]
    %v65 = vld [vmem:[%s7 + $0x2] sm:$0x1]
    %v66 = vld [vmem:[%s7 + $0x3] sm:$0x1]
    %v67 = vld [vmem:[%s7 + $0x4] sm:$0x1]
    %v68 = vld [vmem:[%s7 + $0x5] sm:$0x1]
    %v69 = vld [vmem:[%s7 + $0x6] sm:$0x1]
    %v70 = vld [vmem:[%s8] sm:$0x1]
    %v71 = vld [vmem:[%s8 + $0x1] sm:$0x1]
    %v72 = vld [vmem:[%s8 + $0x2] sm:$0x1]
    %v73 = vld [vmem:[%s8 + $0x3] sm:$0x1]
    %v74 = vld [vmem:[%s8 + $0x4] sm:$0x1]
    %v75 = vld [vmem:[%s8 + $0x5] sm:$0x1]
    %v76 = vld [vmem:[%s0] sm:$0xff]
    %v77 = vld [vmem:[%s0 + $0x8] sm:$0xff]
    %v78 = vlaneseq
    %v79 = vand.u32 %v78, 127
    %80 = vset.pattern.permute.xlu0 0
    %81 = vperm.xlu0 %80, %v76
    %v82 = vpop.permute.xlu0 %81
    %83 = vset.pattern.permute.xlu0 0
    %84 = vperm.xlu0 %83, %v77
    %v85 = vpop.permute.xlu0 %84
    %vm86 = vcmp.eq.s32.totalorder %v79, %v82
    %vm87 = vcmp.eq.s32.totalorder %v79, %v85
    %v88 = vsel %vm86, 1, 0
    %v89 = vsel %vm87, 1, 0
    %v90 = vcvt.s32.f32 %v88
    %v91 = vcvt.s32.f32 %v89
    %v92 = vld [vmem:[%s2] sm:$0xff]
    %v93 = vld [vmem:[%s2 + $0x8] sm:$0xff]
    %v94 = vld [vmem:[%s2 + $0x10] sm:$0xff]
    %v95 = vld [vmem:[%s2 + $0x18] sm:$0xff]
    %vm96 = vcmask 261120
    %v98 = vsel %vm96, %v90, 0
    %v101 = vsel %vm96, %v91, 0
    %103 = vmatprep.subr.mxu0 0.0
    %104 = vmatpush1.msra.mxu0 0.0
    %105 = vmatprep.subr.mxu0 0.0
    %106 = vmatpush1.msra.mxu0 0.0
    %107 = vmatprep.subr.mxu0 0.0
    %108 = vmatpush1.msra.mxu0 0.0
    %109 = vmatprep.subr.mxu0 0.0
    %110 = vmatpush1.msra.mxu0 0.0
    %111 = vmatprep.subr.mxu0 0.0
    %112 = vmatpush1.msra.mxu0 0.0
    %113 = vmatprep.subr.mxu0 0.0
    %114 = vmatpush1.msra.mxu0 0.0
    %115 = vmatprep.subr.mxu0 0.0
    %116 = vmatpush1.msra.mxu0 0.0
    %117 = vmatprep.subr.mxu0 0.0
    %118 = vmatpush1.msra.mxu0 0.0
    %119 = vmatprep.subr.mxu0 0.0
    %120 = vmatpush1.msra.mxu0 0.0
    %121 = vmatprep.subr.mxu0 0.0
    %122 = vmatpush1.msra.mxu0 0.0
    %123 = vmatprep.subr.mxu0 0.0
    %124 = vmatpush1.msra.mxu0 0.0
    %125 = vmatprep.subr.mxu0 0.0
    %126 = vmatpush1.msra.mxu0 0.0
    %127 = vmatprep.subr.mxu0 0.0
    %128 = vmatpush1.msra.mxu0 %v95
    %129 = vmatprep.subr.mxu0 0.0
    %130 = vmatpush1.msra.mxu0 %v94
    %131 = vmatprep.subr.mxu0 0.0
    %132 = vmatpush1.msra.mxu0 %v93
    %133 = vmatprep.subr.mxu0 0.0
    %134 = vmatpush1.msra.mxu0 %v92
    %135 = vmatprep.subr.mxu0 0.0
    %136 = vmatpush2.msra.mxu0 0.0
    %137 = vmatprep.subr.mxu0 0.0
    %138 = vmatpush2.msra.mxu0 0.0
    %139 = vmatprep.subr.mxu0 0.0
    %140 = vmatpush2.msra.mxu0 0.0
    %141 = vmatprep.subr.mxu0 0.0
    %142 = vmatpush2.msra.mxu0 0.0
    %143 = vmatprep.subr.mxu0 0.0
    %144 = vmatpush2.msra.mxu0 0.0
    %145 = vmatprep.subr.mxu0 0.0
    %146 = vmatpush2.msra.mxu0 0.0
    %147 = vmatprep.subr.mxu0 0.0
    %148 = vmatpush2.msra.mxu0 0.0
    %149 = vmatprep.subr.mxu0 0.0
    %150 = vmatpush2.msra.mxu0 0.0
    %151 = vmatprep.subr.mxu0 0.0
    %152 = vmatpush2.msra.mxu0 0.0
    %153 = vmatprep.subr.mxu0 0.0
    %154 = vmatpush2.msra.mxu0 0.0
    %155 = vmatprep.subr.mxu0 0.0
    %156 = vmatpush2.msra.mxu0 0.0
    %157 = vmatprep.subr.mxu0 0.0
    %158 = vmatpush2.msra.mxu0 0.0
    %159 = vmatprep.subr.mxu0 0.0
    %160 = vmatpush2.msra.mxu0 0.0
    %161 = vmatprep.subr.mxu0 0.0
    %162 = vmatpush2.msra.mxu0 0.0
    %163 = vmatprep.subr.mxu0 0.0
    %164 = vmatpush2.msra.mxu0 0.0
    %165 = vmatprep.subr.mxu0 0.0
    %166 = vmatpush2.msra.mxu0 0.0
    %167 = vmatprep.mubr.f32.mxu0 0.0
    %168 = vmatmul.mubr.f32.gmra.mxu0 %v98
    %v169 = vpop.f32.mrf.mxu0
    %v170 = vadd.f32 0.0, %v169
    %v171 = vpop.f32.mrf.mxu0
    %172 = vmatprep.mubr.f32.mxu0 0.0
    %173 = vmatmul.mubr.f32.gmra.mxu0 %v101
    %v174 = vpop.f32.mrf.mxu0
    %v175 = vadd.f32 0.0, %v174
    %v176 = vpop.f32.mrf.mxu0
    %177 = vdwg.mxu0
    %v178 = vpack.c.bf16 %v175, %v170
    %v179 = vlaneseq
    %v180 = vshrl.u32 %v179, 7
    %v181 = vsub.s32 0, %v180
    %v182 = vrot.slane %v63, %v181
    %v187 = vunpack.c.l.b16 %v34
    %v188 = vunpack.c.l.b16 %v35
    %v189 = vunpack.c.l.b16 %v36
    %v190 = vunpack.c.l.b16 %v37
    %v191 = vpack.c.b16 %v188, %v187
    %v192 = vpack.c.b16 %v190, %v189
    %v196 = vsel %vm96, %v178, 0
    %198 = vmatprep.subr.bf16.mxu0 0
    %199 = vmatpush1.bf16.msra.mxu0 0
    %200 = vmatprep.subr.bf16.mxu0 0
    %201 = vmatpush1.bf16.msra.mxu0 0
    %202 = vmatprep.subr.bf16.mxu0 0
    %203 = vmatpush1.bf16.msra.mxu0 0
    %204 = vmatprep.subr.bf16.mxu0 0
    %205 = vmatpush1.bf16.msra.mxu0 0
    %206 = vmatprep.subr.bf16.mxu0 0
    %207 = vmatpush1.bf16.msra.mxu0 0
    %208 = vmatprep.subr.bf16.mxu0 0
    %209 = vmatpush1.bf16.msra.mxu0 0
    %210 = vmatprep.subr.bf16.mxu0 0
    %211 = vmatpush1.bf16.msra.mxu0 %v192
    %212 = vmatprep.subr.bf16.mxu0 0
    %213 = vmatpush1.bf16.msra.mxu0 %v191
    %214 = vmatprep.subr.bf16.mxu0 0
    %215 = vmatpush2.bf16.msra.mxu0 0
    %216 = vmatprep.subr.bf16.mxu0 0
    %217 = vmatpush2.bf16.msra.mxu0 0
    %218 = vmatprep.subr.bf16.mxu0 0
    %219 = vmatpush2.bf16.msra.mxu0 0
    %220 = vmatprep.subr.bf16.mxu0 0
    %221 = vmatpush2.bf16.msra.mxu0 0
    %222 = vmatprep.subr.bf16.mxu0 0
    %223 = vmatpush2.bf16.msra.mxu0 0
    %224 = vmatprep.subr.bf16.mxu0 0
    %225 = vmatpush2.bf16.msra.mxu0 0
    %226 = vmatprep.subr.bf16.mxu0 0
    %227 = vmatpush2.bf16.msra.mxu0 0
    %228 = vmatprep.subr.bf16.mxu0 0
    %229 = vmatpush2.bf16.msra.mxu0 0
    %230 = vmatprep.mubr.bf16.mxu0 0
    %231 = vmatmul.mubr.bf16.gmra.mxu0 %v196
    %v232 = vpop.f32.mrf.mxu0
    %v233 = vadd.f32 %v182, %v232
    %v234 = vpop.f32.mrf.mxu0
    %v235 = vpop.f32.mrf.mxu0
    %v236 = vadd.f32 %v182, %v235
    %v237 = vpop.f32.mrf.mxu0
    %238 = vdwg.mxu0
    %vm239 = vcmp.ge.s32.totalorder %v79, 0
    %vm240 = vcmp.lt.s32.totalorder %v79, 8
    %vm241 = vmand %vm239, %vm240
    %v242 = vsel %vm241, 1, 0
    %v243 = vcvt.s32.f32 %v242
    %245 = vrot.lane.b32.xlu0 %v243, 32
    %v246 = vpop.permute.xlu0 %245
    %v248 = vmul.f32 %v233, %v246
    %v249 = vmul.f32 %v236, %v246
    %250 = vrot.lane.b32.xlu0 %v243, 64
    %v251 = vpop.permute.xlu0 %250
    %v253 = vmul.f32 %v233, %v251
    %v254 = vmul.f32 %v236, %v251
    %256 = vrot.lane.b32.xlu0 %v248, 96
    %v257 = vpop.permute.xlu0 %256
    %v259 = vsel %vm96, %v233, 0
    %v261 = vsel %vm96, %v257, 0
    %263 = vmatprep.subr.mxu0 0.0
    %264 = vmatpush1.xpose.msra.mxu0 0.0
    %265 = vmatprep.subr.mxu0 0.0
    %266 = vmatpush1.xpose.msra.mxu0 0.0
    %267 = vmatprep.subr.mxu0 0.0
    %268 = vmatpush1.xpose.msra.mxu0 0.0
    %269 = vmatprep.subr.mxu0 0.0
    %270 = vmatpush1.xpose.msra.mxu0 0.0
    %271 = vmatprep.subr.mxu0 0.0
    %272 = vmatpush1.xpose.msra.mxu0 0.0
    %273 = vmatprep.subr.mxu0 0.0
    %274 = vmatpush1.xpose.msra.mxu0 0.0
    %275 = vmatprep.subr.mxu0 0.0
    %276 = vmatpush1.xpose.msra.mxu0 0.0
    %277 = vmatprep.subr.mxu0 0.0
    %278 = vmatpush1.xpose.msra.mxu0 0.0
    %279 = vmatprep.subr.mxu0 0.0
    %280 = vmatpush1.xpose.msra.mxu0 0.0
    %281 = vmatprep.subr.mxu0 0.0
    %282 = vmatpush1.xpose.msra.mxu0 0.0
    %283 = vmatprep.subr.mxu0 0.0
    %284 = vmatpush1.xpose.msra.mxu0 0.0
    %285 = vmatprep.subr.mxu0 0.0
    %286 = vmatpush1.xpose.msra.mxu0 0.0
    %287 = vmatprep.subr.mxu0 0.0
    %288 = vmatpush1.xpose.msra.mxu0 0.0
    %289 = vmatprep.subr.mxu0 0.0
    %290 = vmatpush1.xpose.msra.mxu0 0.0
    %291 = vmatprep.subr.mxu0 0.0
    %292 = vmatpush1.xpose.msra.mxu0 0.0
    %293 = vmatprep.subr.mxu0 0.0
    %294 = vmatpush1.xpose.msra.mxu0 %v261
    %295 = vmatprep.subr.mxu0 0.0
    %296 = vmatpush2.xpose.msra.mxu0 0.0
    %297 = vmatprep.subr.mxu0 0.0
    %298 = vmatpush2.xpose.msra.mxu0 0.0
    %299 = vmatprep.subr.mxu0 0.0
    %300 = vmatpush2.xpose.msra.mxu0 0.0
    %301 = vmatprep.subr.mxu0 0.0
    %302 = vmatpush2.xpose.msra.mxu0 0.0
    %303 = vmatprep.subr.mxu0 0.0
    %304 = vmatpush2.xpose.msra.mxu0 0.0
    %305 = vmatprep.subr.mxu0 0.0
    %306 = vmatpush2.xpose.msra.mxu0 0.0
    %307 = vmatprep.subr.mxu0 0.0
    %308 = vmatpush2.xpose.msra.mxu0 0.0
    %309 = vmatprep.subr.mxu0 0.0
    %310 = vmatpush2.xpose.msra.mxu0 0.0
    %311 = vmatprep.subr.mxu0 0.0
    %312 = vmatpush2.xpose.msra.mxu0 0.0
    %313 = vmatprep.subr.mxu0 0.0
    %314 = vmatpush2.xpose.msra.mxu0 0.0
    %315 = vmatprep.subr.mxu0 0.0
    %316 = vmatpush2.xpose.msra.mxu0 0.0
    %317 = vmatprep.subr.mxu0 0.0
    %318 = vmatpush2.xpose.msra.mxu0 0.0
    %319 = vmatprep.subr.mxu0 0.0
    %320 = vmatpush2.xpose.msra.mxu0 0.0
    %321 = vmatprep.subr.mxu0 0.0
    %322 = vmatpush2.xpose.msra.mxu0 0.0
    %323 = vmatprep.subr.mxu0 0.0
    %324 = vmatpush2.xpose.msra.mxu0 0.0
    %325 = vmatprep.subr.mxu0 0.0
    %326 = vmatpush2.xpose.msra.mxu0 0.0
    %327 = vmatprep.mubr.f32.mxu0 0.0
    %328 = vmatmul.mubr.f32.gmra.mxu0 %v259
    %v329 = vpop.f32.mrf.mxu0
    %v330 = vadd.f32 0.0, %v329
    %v331 = vpop.f32.mrf.mxu0
    %332 = vdwg.mxu0
    %334 = vrot.lane.b32.xlu0 %v249, 96
    %v335 = vpop.permute.xlu0 %334
    %v337 = vsel %vm96, %v236, 0
    %v339 = vsel %vm96, %v335, 0
    %341 = vmatprep.subr.mxu0 0.0
    %342 = vmatpush1.xpose.msra.mxu0 0.0
    %343 = vmatprep.subr.mxu0 0.0
    %344 = vmatpush1.xpose.msra.mxu0 0.0
    %345 = vmatprep.subr.mxu0 0.0
    %346 = vmatpush1.xpose.msra.mxu0 0.0
    %347 = vmatprep.subr.mxu0 0.0
    %348 = vmatpush1.xpose.msra.mxu0 0.0
    %349 = vmatprep.subr.mxu0 0.0
    %350 = vmatpush1.xpose.msra.mxu0 0.0
    %351 = vmatprep.subr.mxu0 0.0
    %352 = vmatpush1.xpose.msra.mxu0 0.0
    %353 = vmatprep.subr.mxu0 0.0
    %354 = vmatpush1.xpose.msra.mxu0 0.0
    %355 = vmatprep.subr.mxu0 0.0
    %356 = vmatpush1.xpose.msra.mxu0 0.0
    %357 = vmatprep.subr.mxu0 0.0
    %358 = vmatpush1.xpose.msra.mxu0 0.0
    %359 = vmatprep.subr.mxu0 0.0
    %360 = vmatpush1.xpose.msra.mxu0 0.0
    %361 = vmatprep.subr.mxu0 0.0
    %362 = vmatpush1.xpose.msra.mxu0 0.0
    %363 = vmatprep.subr.mxu0 0.0
    %364 = vmatpush1.xpose.msra.mxu0 0.0
    %365 = vmatprep.subr.mxu0 0.0
    %366 = vmatpush1.xpose.msra.mxu0 0.0
    %367 = vmatprep.subr.mxu0 0.0
    %368 = vmatpush1.xpose.msra.mxu0 0.0
    %369 = vmatprep.subr.mxu0 0.0
    %370 = vmatpush1.xpose.msra.mxu0 0.0
    %371 = vmatprep.subr.mxu0 0.0
    %372 = vmatpush1.xpose.msra.mxu0 %v339
    %373 = vmatprep.subr.mxu0 0.0
    %374 = vmatpush2.xpose.msra.mxu0 0.0
    %375 = vmatprep.subr.mxu0 0.0
    %376 = vmatpush2.xpose.msra.mxu0 0.0
    %377 = vmatprep.subr.mxu0 0.0
    %378 = vmatpush2.xpose.msra.mxu0 0.0
    %379 = vmatprep.subr.mxu0 0.0
    %380 = vmatpush2.xpose.msra.mxu0 0.0
    %381 = vmatprep.subr.mxu0 0.0
    %382 = vmatpush2.xpose.msra.mxu0 0.0
    %383 = vmatprep.subr.mxu0 0.0
    %384 = vmatpush2.xpose.msra.mxu0 0.0
    %385 = vmatprep.subr.mxu0 0.0
    %386 = vmatpush2.xpose.msra.mxu0 0.0
    %387 = vmatprep.subr.mxu0 0.0
    %388 = vmatpush2.xpose.msra.mxu0 0.0
    %389 = vmatprep.subr.mxu0 0.0
    %390 = vmatpush2.xpose.msra.mxu0 0.0
    %391 = vmatprep.subr.mxu0 0.0
    %392 = vmatpush2.xpose.msra.mxu0 0.0
    %393 = vmatprep.subr.mxu0 0.0
    %394 = vmatpush2.xpose.msra.mxu0 0.0
    %395 = vmatprep.subr.mxu0 0.0
    %396 = vmatpush2.xpose.msra.mxu0 0.0
    %397 = vmatprep.subr.mxu0 0.0
    %398 = vmatpush2.xpose.msra.mxu0 0.0
    %399 = vmatprep.subr.mxu0 0.0
    %400 = vmatpush2.xpose.msra.mxu0 0.0
    %401 = vmatprep.subr.mxu0 0.0
    %402 = vmatpush2.xpose.msra.mxu0 0.0
    %403 = vmatprep.subr.mxu0 0.0
    %404 = vmatpush2.xpose.msra.mxu0 0.0
    %405 = vmatprep.mubr.f32.mxu0 0.0
    %406 = vmatmul.mubr.f32.gmra.mxu0 %v337
    %v407 = vpop.f32.mrf.mxu0
    %v408 = vadd.f32 0.0, %v407
    %v409 = vpop.f32.mrf.mxu0
    %410 = vdwg.mxu0
    %vm411 = vcmask 64512
    %v412 = vsel %vm411, %v330, -inf
    %413 = vmax.xlane.f32.xlu0 %v412
    %v414 = vpop.xlane.xlu0 %413
    %v415 = vsel %vm411, %v408, -inf
    %416 = vmax.xlane.f32.xlu0 %v415
    %v417 = vpop.xlane.xlu0 %416
    %v418 = vsub.f32 %v330, %v414
    %v419 = vsub.f32 %v408, %v417
    %v420 = vmul.f32 %v418, 1.442695
    %v421 = vpow.pop %v420
    %v422 = vmul.f32 %v419, 1.442695
    %v423 = vpow.pop %v422
    %v424 = vsel %vm411, %v421, 0.0
    %425 = vadd.xlane.f32.xlu0 %v424
    %v426 = vpop.xlane.xlu0 %425
    %v427 = vsel %vm411, %v423, 0.0
    %428 = vadd.xlane.f32.xlu0 %v427
    %v429 = vpop.xlane.xlu0 %428
    %v430 = vrcp.pop %v426
    %v431 = vmul.f32 %v421, %v430
    %v432 = vrcp.pop %v429
    %v433 = vmul.f32 %v423, %v432
    %vm434 = vcmp.ge.s32.totalorder %v79, 8
    %vm435 = vcmp.lt.s32.totalorder %v79, 16
    %vm436 = vmand %vm434, %vm435
    %v437 = vsel %vm436, 1, 0
    %v438 = vcvt.s32.f32 %v437
    %440 = vrot.lane.b32.xlu0 %v438, 32
    %v441 = vpop.permute.xlu0 %440
    %v443 = vmul.f32 %v233, %v441
    %v444 = vmul.f32 %v236, %v441
    %445 = vrot.lane.b32.xlu0 %v438, 64
    %v446 = vpop.permute.xlu0 %445
    %v448 = vmul.f32 %v233, %v446
    %v449 = vmul.f32 %v236, %v446
    %451 = vrot.lane.b32.xlu0 %v443, 96
    %v452 = vpop.permute.xlu0 %451
    %v453 = vsel %vm96, %v452, 0
    %455 = vmatprep.subr.mxu0 0.0
    %456 = vmatpush1.xpose.msra.mxu0 0.0
    %457 = vmatprep.subr.mxu0 0.0
    %458 = vmatpush1.xpose.msra.mxu0 0.0
    %459 = vmatprep.subr.mxu0 0.0
    %460 = vmatpush1.xpose.msra.mxu0 0.0
    %461 = vmatprep.subr.mxu0 0.0
    %462 = vmatpush1.xpose.msra.mxu0 0.0
    %463 = vmatprep.subr.mxu0 0.0
    %464 = vmatpush1.xpose.msra.mxu0 0.0
    %465 = vmatprep.subr.mxu0 0.0
    %466 = vmatpush1.xpose.msra.mxu0 0.0
    %467 = vmatprep.subr.mxu0 0.0
    %468 = vmatpush1.xpose.msra.mxu0 0.0
    %469 = vmatprep.subr.mxu0 0.0
    %470 = vmatpush1.xpose.msra.mxu0 0.0
    %471 = vmatprep.subr.mxu0 0.0
    %472 = vmatpush1.xpose.msra.mxu0 0.0
    %473 = vmatprep.subr.mxu0 0.0
    %474 = vmatpush1.xpose.msra.mxu0 0.0
    %475 = vmatprep.subr.mxu0 0.0
    %476 = vmatpush1.xpose.msra.mxu0 0.0
    %477 = vmatprep.subr.mxu0 0.0
    %478 = vmatpush1.xpose.msra.mxu0 0.0
    %479 = vmatprep.subr.mxu0 0.0
    %480 = vmatpush1.xpose.msra.mxu0 0.0
    %481 = vmatprep.subr.mxu0 0.0
    %482 = vmatpush1.xpose.msra.mxu0 0.0
    %483 = vmatprep.subr.mxu0 0.0
    %484 = vmatpush1.xpose.msra.mxu0 0.0
    %485 = vmatprep.subr.mxu0 0.0
    %486 = vmatpush1.xpose.msra.mxu0 %v453
    %487 = vmatprep.subr.mxu0 0.0
    %488 = vmatpush2.xpose.msra.mxu0 0.0
    %489 = vmatprep.subr.mxu0 0.0
    %490 = vmatpush2.xpose.msra.mxu0 0.0
    %491 = vmatprep.subr.mxu0 0.0
    %492 = vmatpush2.xpose.msra.mxu0 0.0
    %493 = vmatprep.subr.mxu0 0.0
    %494 = vmatpush2.xpose.msra.mxu0 0.0
    %495 = vmatprep.subr.mxu0 0.0
    %496 = vmatpush2.xpose.msra.mxu0 0.0
    %497 = vmatprep.subr.mxu0 0.0
    %498 = vmatpush2.xpose.msra.mxu0 0.0
    %499 = vmatprep.subr.mxu0 0.0
    %500 = vmatpush2.xpose.msra.mxu0 0.0
    %501 = vmatprep.subr.mxu0 0.0
    %502 = vmatpush2.xpose.msra.mxu0 0.0
    %503 = vmatprep.subr.mxu0 0.0
    %504 = vmatpush2.xpose.msra.mxu0 0.0
    %505 = vmatprep.subr.mxu0 0.0
    %506 = vmatpush2.xpose.msra.mxu0 0.0
    %507 = vmatprep.subr.mxu0 0.0
    %508 = vmatpush2.xpose.msra.mxu0 0.0
    %509 = vmatprep.subr.mxu0 0.0
    %510 = vmatpush2.xpose.msra.mxu0 0.0
    %511 = vmatprep.subr.mxu0 0.0
    %512 = vmatpush2.xpose.msra.mxu0 0.0
    %513 = vmatprep.subr.mxu0 0.0
    %514 = vmatpush2.xpose.msra.mxu0 0.0
    %515 = vmatprep.subr.mxu0 0.0
    %516 = vmatpush2.xpose.msra.mxu0 0.0
    %517 = vmatprep.subr.mxu0 0.0
    %518 = vmatpush2.xpose.msra.mxu0 0.0
    %519 = vmatprep.mubr.f32.mxu0 0.0
    %520 = vmatmul.mubr.f32.gmra.mxu0 %v259
    %v521 = vpop.f32.mrf.mxu0
    %v522 = vadd.f32 0.0, %v521
    %v523 = vpop.f32.mrf.mxu0
    %524 = vdwg.mxu0
    %526 = vrot.lane.b32.xlu0 %v444, 96
    %v527 = vpop.permute.xlu0 %526
    %v528 = vsel %vm96, %v527, 0
    %530 = vmatprep.subr.mxu0 0.0
    %531 = vmatpush1.xpose.msra.mxu0 0.0
    %532 = vmatprep.subr.mxu0 0.0
    %533 = vmatpush1.xpose.msra.mxu0 0.0
    %534 = vmatprep.subr.mxu0 0.0
    %535 = vmatpush1.xpose.msra.mxu0 0.0
    %536 = vmatprep.subr.mxu0 0.0
    %537 = vmatpush1.xpose.msra.mxu0 0.0
    %538 = vmatprep.subr.mxu0 0.0
    %539 = vmatpush1.xpose.msra.mxu0 0.0
    %540 = vmatprep.subr.mxu0 0.0
    %541 = vmatpush1.xpose.msra.mxu0 0.0
    %542 = vmatprep.subr.mxu0 0.0
    %543 = vmatpush1.xpose.msra.mxu0 0.0
    %544 = vmatprep.subr.mxu0 0.0
    %545 = vmatpush1.xpose.msra.mxu0 0.0
    %546 = vmatprep.subr.mxu0 0.0
    %547 = vmatpush1.xpose.msra.mxu0 0.0
    %548 = vmatprep.subr.mxu0 0.0
    %549 = vmatpush1.xpose.msra.mxu0 0.0
    %550 = vmatprep.subr.mxu0 0.0
    %551 = vmatpush1.xpose.msra.mxu0 0.0
    %552 = vmatprep.subr.mxu0 0.0
    %553 = vmatpush1.xpose.msra.mxu0 0.0
    %554 = vmatprep.subr.mxu0 0.0
    %555 = vmatpush1.xpose.msra.mxu0 0.0
    %556 = vmatprep.subr.mxu0 0.0
    %557 = vmatpush1.xpose.msra.mxu0 0.0
    %558 = vmatprep.subr.mxu0 0.0
    %559 = vmatpush1.xpose.msra.mxu0 0.0
    %560 = vmatprep.subr.mxu0 0.0
    %561 = vmatpush1.xpose.msra.mxu0 %v528
    %562 = vmatprep.subr.mxu0 0.0
    %563 = vmatpush2.xpose.msra.mxu0 0.0
    %564 = vmatprep.subr.mxu0 0.0
    %565 = vmatpush2.xpose.msra.mxu0 0.0
    %566 = vmatprep.subr.mxu0 0.0
    %567 = vmatpush2.xpose.msra.mxu0 0.0
    %568 = vmatprep.subr.mxu0 0.0
    %569 = vmatpush2.xpose.msra.mxu0 0.0
    %570 = vmatprep.subr.mxu0 0.0
    %571 = vmatpush2.xpose.msra.mxu0 0.0
    %572 = vmatprep.subr.mxu0 0.0
    %573 = vmatpush2.xpose.msra.mxu0 0.0
    %574 = vmatprep.subr.mxu0 0.0
    %575 = vmatpush2.xpose.msra.mxu0 0.0
    %576 = vmatprep.subr.mxu0 0.0
    %577 = vmatpush2.xpose.msra.mxu0 0.0
    %578 = vmatprep.subr.mxu0 0.0
    %579 = vmatpush2.xpose.msra.mxu0 0.0
    %580 = vmatprep.subr.mxu0 0.0
    %581 = vmatpush2.xpose.msra.mxu0 0.0
    %582 = vmatprep.subr.mxu0 0.0
    %583 = vmatpush2.xpose.msra.mxu0 0.0
    %584 = vmatprep.subr.mxu0 0.0
    %585 = vmatpush2.xpose.msra.mxu0 0.0
    %586 = vmatprep.subr.mxu0 0.0
    %587 = vmatpush2.xpose.msra.mxu0 0.0
    %588 = vmatprep.subr.mxu0 0.0
    %589 = vmatpush2.xpose.msra.mxu0 0.0
    %590 = vmatprep.subr.mxu0 0.0
    %591 = vmatpush2.xpose.msra.mxu0 0.0
    %592 = vmatprep.subr.mxu0 0.0
    %593 = vmatpush2.xpose.msra.mxu0 0.0
    %594 = vmatprep.mubr.f32.mxu0 0.0
    %595 = vmatmul.mubr.f32.gmra.mxu0 %v337
    %v596 = vpop.f32.mrf.mxu0
    %v597 = vadd.f32 0.0, %v596
    %v598 = vpop.f32.mrf.mxu0
    %599 = vdwg.mxu0
    %v600 = vsel %vm411, %v522, -inf
    %601 = vmax.xlane.f32.xlu0 %v600
    %v602 = vpop.xlane.xlu0 %601
    %v603 = vsel %vm411, %v597, -inf
    %604 = vmax.xlane.f32.xlu0 %v603
    %v605 = vpop.xlane.xlu0 %604
    %v606 = vsub.f32 %v522, %v602
    %v607 = vsub.f32 %v597, %v605
    %v608 = vmul.f32 %v606, 1.442695
    %v609 = vpow.pop %v608
    %v610 = vmul.f32 %v607, 1.442695
    %v611 = vpow.pop %v610
    %v612 = vsel %vm411, %v609, 0.0
    %613 = vadd.xlane.f32.xlu0 %v612
    %v614 = vpop.xlane.xlu0 %613
    %v615 = vsel %vm411, %v611, 0.0
    %616 = vadd.xlane.f32.xlu0 %v615
    %v617 = vpop.xlane.xlu0 %616
    %v618 = vrcp.pop %v614
    %v619 = vmul.f32 %v609, %v618
    %v620 = vrcp.pop %v617
    %v621 = vmul.f32 %v611, %v620
    %623 = vrot.lane.b32.xlu0 %v448, 64
    %v624 = vpop.permute.xlu0 %623
    %v627 = vsel %vm411, %v619, 0
    %629 = vmatprep.subr.mxu0 0.0
    %630 = vmatpush1.msra.mxu0 0.0
    %631 = vmatprep.subr.mxu0 0.0
    %632 = vmatpush1.msra.mxu0 0.0
    %633 = vmatprep.subr.mxu0 0.0
    %634 = vmatpush1.msra.mxu0 0.0
    %635 = vmatprep.subr.mxu0 0.0
    %636 = vmatpush1.msra.mxu0 0.0
    %637 = vmatprep.subr.mxu0 0.0
    %638 = vmatpush1.msra.mxu0 0.0
    %639 = vmatprep.subr.mxu0 0.0
    %640 = vmatpush1.msra.mxu0 0.0
    %641 = vmatprep.subr.mxu0 0.0
    %642 = vmatpush1.msra.mxu0 0.0
    %643 = vmatprep.subr.mxu0 0.0
    %644 = vmatpush1.msra.mxu0 0.0
    %645 = vmatprep.subr.mxu0 0.0
    %646 = vmatpush1.msra.mxu0 0.0
    %647 = vmatprep.subr.mxu0 0.0
    %648 = vmatpush1.msra.mxu0 0.0
    %649 = vmatprep.subr.mxu0 0.0
    %650 = vmatpush1.msra.mxu0 0.0
    %651 = vmatprep.subr.mxu0 0.0
    %652 = vmatpush1.msra.mxu0 0.0
    %653 = vmatprep.subr.mxu0 0.0
    %654 = vmatpush1.msra.mxu0 0.0
    %655 = vmatprep.subr.mxu0 0.0
    %656 = vmatpush1.msra.mxu0 0.0
    %657 = vmatprep.subr.mxu0 0.0
    %658 = vmatpush1.msra.mxu0 0.0
    %659 = vmatprep.subr.mxu0 0.0
    %660 = vmatpush1.msra.mxu0 %v624
    %661 = vmatprep.subr.mxu0 0.0
    %662 = vmatpush2.msra.mxu0 0.0
    %663 = vmatprep.subr.mxu0 0.0
    %664 = vmatpush2.msra.mxu0 0.0
    %665 = vmatprep.subr.mxu0 0.0
    %666 = vmatpush2.msra.mxu0 0.0
    %667 = vmatprep.subr.mxu0 0.0
    %668 = vmatpush2.msra.mxu0 0.0
    %669 = vmatprep.subr.mxu0 0.0
    %670 = vmatpush2.msra.mxu0 0.0
    %671 = vmatprep.subr.mxu0 0.0
    %672 = vmatpush2.msra.mxu0 0.0
    %673 = vmatprep.subr.mxu0 0.0
    %674 = vmatpush2.msra.mxu0 0.0
    %675 = vmatprep.subr.mxu0 0.0
    %676 = vmatpush2.msra.mxu0 0.0
    %677 = vmatprep.subr.mxu0 0.0
    %678 = vmatpush2.msra.mxu0 0.0
    %679 = vmatprep.subr.mxu0 0.0
    %680 = vmatpush2.msra.mxu0 0.0
    %681 = vmatprep.subr.mxu0 0.0
    %682 = vmatpush2.msra.mxu0 0.0
    %683 = vmatprep.subr.mxu0 0.0
    %684 = vmatpush2.msra.mxu0 0.0
    %685 = vmatprep.subr.mxu0 0.0
    %686 = vmatpush2.msra.mxu0 0.0
    %687 = vmatprep.subr.mxu0 0.0
    %688 = vmatpush2.msra.mxu0 0.0
    %689 = vmatprep.subr.mxu0 0.0
    %690 = vmatpush2.msra.mxu0 0.0
    %691 = vmatprep.subr.mxu0 0.0
    %692 = vmatpush2.msra.mxu0 0.0
    %693 = vmatprep.mubr.f32.mxu0 0.0
    %694 = vmatmul.mubr.f32.gmra.mxu0 %v627
    %v695 = vpop.f32.mrf.mxu0
    %v696 = vadd.f32 0.0, %v695
    %v697 = vpop.f32.mrf.mxu0
    %698 = vdwg.mxu0
    %700 = vrot.lane.b32.xlu0 %v449, 64
    %v701 = vpop.permute.xlu0 %700
    %v704 = vsel %vm411, %v621, 0
    %706 = vmatprep.subr.mxu0 0.0
    %707 = vmatpush1.msra.mxu0 0.0
    %708 = vmatprep.subr.mxu0 0.0
    %709 = vmatpush1.msra.mxu0 0.0
    %710 = vmatprep.subr.mxu0 0.0
    %711 = vmatpush1.msra.mxu0 0.0
    %712 = vmatprep.subr.mxu0 0.0
    %713 = vmatpush1.msra.mxu0 0.0
    %714 = vmatprep.subr.mxu0 0.0
    %715 = vmatpush1.msra.mxu0 0.0
    %716 = vmatprep.subr.mxu0 0.0
    %717 = vmatpush1.msra.mxu0 0.0
    %718 = vmatprep.subr.mxu0 0.0
    %719 = vmatpush1.msra.mxu0 0.0
    %720 = vmatprep.subr.mxu0 0.0
    %721 = vmatpush1.msra.mxu0 0.0
    %722 = vmatprep.subr.mxu0 0.0
    %723 = vmatpush1.msra.mxu0 0.0
    %724 = vmatprep.subr.mxu0 0.0
    %725 = vmatpush1.msra.mxu0 0.0
    %726 = vmatprep.subr.mxu0 0.0
    %727 = vmatpush1.msra.mxu0 0.0
    %728 = vmatprep.subr.mxu0 0.0
    %729 = vmatpush1.msra.mxu0 0.0
    %730 = vmatprep.subr.mxu0 0.0
    %731 = vmatpush1.msra.mxu0 0.0
    %732 = vmatprep.subr.mxu0 0.0
    %733 = vmatpush1.msra.mxu0 0.0
    %734 = vmatprep.subr.mxu0 0.0
    %735 = vmatpush1.msra.mxu0 0.0
    %736 = vmatprep.subr.mxu0 0.0
    %737 = vmatpush1.msra.mxu0 %v701
    %738 = vmatprep.subr.mxu0 0.0
    %739 = vmatpush2.msra.mxu0 0.0
    %740 = vmatprep.subr.mxu0 0.0
    %741 = vmatpush2.msra.mxu0 0.0
    %742 = vmatprep.subr.mxu0 0.0
    %743 = vmatpush2.msra.mxu0 0.0
    %744 = vmatprep.subr.mxu0 0.0
    %745 = vmatpush2.msra.mxu0 0.0
    %746 = vmatprep.subr.mxu0 0.0
    %747 = vmatpush2.msra.mxu0 0.0
    %748 = vmatprep.subr.mxu0 0.0
    %749 = vmatpush2.msra.mxu0 0.0
    %750 = vmatprep.subr.mxu0 0.0
    %751 = vmatpush2.msra.mxu0 0.0
    %752 = vmatprep.subr.mxu0 0.0
    %753 = vmatpush2.msra.mxu0 0.0
    %754 = vmatprep.subr.mxu0 0.0
    %755 = vmatpush2.msra.mxu0 0.0
    %756 = vmatprep.subr.mxu0 0.0
    %757 = vmatpush2.msra.mxu0 0.0
    %758 = vmatprep.subr.mxu0 0.0
    %759 = vmatpush2.msra.mxu0 0.0
    %760 = vmatprep.subr.mxu0 0.0
    %761 = vmatpush2.msra.mxu0 0.0
    %762 = vmatprep.subr.mxu0 0.0
    %763 = vmatpush2.msra.mxu0 0.0
    %764 = vmatprep.subr.mxu0 0.0
    %765 = vmatpush2.msra.mxu0 0.0
    %766 = vmatprep.subr.mxu0 0.0
    %767 = vmatpush2.msra.mxu0 0.0
    %768 = vmatprep.subr.mxu0 0.0
    %769 = vmatpush2.msra.mxu0 0.0
    %770 = vmatprep.mubr.f32.mxu0 0.0
    %771 = vmatmul.mubr.f32.gmra.mxu0 %v704
    %v772 = vpop.f32.mrf.mxu0
    %v773 = vadd.f32 0.0, %v772
    %v774 = vpop.f32.mrf.mxu0
    %775 = vdwg.mxu0
    %777 = vrot.lane.b32.xlu0 %v253, 64
    %v778 = vpop.permute.xlu0 %777
    %v781 = vsel %vm411, %v431, 0
    %783 = vmatprep.subr.mxu0 0.0
    %784 = vmatpush1.msra.mxu0 0.0
    %785 = vmatprep.subr.mxu0 0.0
    %786 = vmatpush1.msra.mxu0 0.0
    %787 = vmatprep.subr.mxu0 0.0
    %788 = vmatpush1.msra.mxu0 0.0
    %789 = vmatprep.subr.mxu0 0.0
    %790 = vmatpush1.msra.mxu0 0.0
    %791 = vmatprep.subr.mxu0 0.0
    %792 = vmatpush1.msra.mxu0 0.0
    %793 = vmatprep.subr.mxu0 0.0
    %794 = vmatpush1.msra.mxu0 0.0
    %795 = vmatprep.subr.mxu0 0.0
    %796 = vmatpush1.msra.mxu0 0.0
    %797 = vmatprep.subr.mxu0 0.0
    %798 = vmatpush1.msra.mxu0 0.0
    %799 = vmatprep.subr.mxu0 0.0
    %800 = vmatpush1.msra.mxu0 0.0
    %801 = vmatprep.subr.mxu0 0.0
    %802 = vmatpush1.msra.mxu0 0.0
    %803 = vmatprep.subr.mxu0 0.0
    %804 = vmatpush1.msra.mxu0 0.0
    %805 = vmatprep.subr.mxu0 0.0
    %806 = vmatpush1.msra.mxu0 0.0
    %807 = vmatprep.subr.mxu0 0.0
    %808 = vmatpush1.msra.mxu0 0.0
    %809 = vmatprep.subr.mxu0 0.0
    %810 = vmatpush1.msra.mxu0 0.0
    %811 = vmatprep.subr.mxu0 0.0
    %812 = vmatpush1.msra.mxu0 0.0
    %813 = vmatprep.subr.mxu0 0.0
    %814 = vmatpush1.msra.mxu0 %v778
    %815 = vmatprep.subr.mxu0 0.0
    %816 = vmatpush2.msra.mxu0 0.0
    %817 = vmatprep.subr.mxu0 0.0
    %818 = vmatpush2.msra.mxu0 0.0
    %819 = vmatprep.subr.mxu0 0.0
    %820 = vmatpush2.msra.mxu0 0.0
    %821 = vmatprep.subr.mxu0 0.0
    %822 = vmatpush2.msra.mxu0 0.0
    %823 = vmatprep.subr.mxu0 0.0
    %824 = vmatpush2.msra.mxu0 0.0
    %825 = vmatprep.subr.mxu0 0.0
    %826 = vmatpush2.msra.mxu0 0.0
    %827 = vmatprep.subr.mxu0 0.0
    %828 = vmatpush2.msra.mxu0 0.0
    %829 = vmatprep.subr.mxu0 0.0
    %830 = vmatpush2.msra.mxu0 0.0
    %831 = vmatprep.subr.mxu0 0.0
    %832 = vmatpush2.msra.mxu0 0.0
    %833 = vmatprep.subr.mxu0 0.0
    %834 = vmatpush2.msra.mxu0 0.0
    %835 = vmatprep.subr.mxu0 0.0
    %836 = vmatpush2.msra.mxu0 0.0
    %837 = vmatprep.subr.mxu0 0.0
    %838 = vmatpush2.msra.mxu0 0.0
    %839 = vmatprep.subr.mxu0 0.0
    %840 = vmatpush2.msra.mxu0 0.0
    %841 = vmatprep.subr.mxu0 0.0
    %842 = vmatpush2.msra.mxu0 0.0
    %843 = vmatprep.subr.mxu0 0.0
    %844 = vmatpush2.msra.mxu0 0.0
    %845 = vmatprep.subr.mxu0 0.0
    %846 = vmatpush2.msra.mxu0 0.0
    %847 = vmatprep.mubr.f32.mxu0 0.0
    %848 = vmatmul.mubr.f32.gmra.mxu0 %v781
    %v849 = vpop.f32.mrf.mxu0
    %v850 = vadd.f32 %v696, %v849
    %v851 = vpop.f32.mrf.mxu0
    %852 = vdwg.mxu0
    %854 = vrot.lane.b32.xlu0 %v254, 64
    %v855 = vpop.permute.xlu0 %854
    %v858 = vsel %vm411, %v433, 0
    %860 = vmatprep.subr.mxu0 0.0
    %861 = vmatpush1.msra.mxu0 0.0
    %862 = vmatprep.subr.mxu0 0.0
    %863 = vmatpush1.msra.mxu0 0.0
    %864 = vmatprep.subr.mxu0 0.0
    %865 = vmatpush1.msra.mxu0 0.0
    %866 = vmatprep.subr.mxu0 0.0
    %867 = vmatpush1.msra.mxu0 0.0
    %868 = vmatprep.subr.mxu0 0.0
    %869 = vmatpush1.msra.mxu0 0.0
    %870 = vmatprep.subr.mxu0 0.0
    %871 = vmatpush1.msra.mxu0 0.0
    %872 = vmatprep.subr.mxu0 0.0
    %873 = vmatpush1.msra.mxu0 0.0
    %874 = vmatprep.subr.mxu0 0.0
    %875 = vmatpush1.msra.mxu0 0.0
    %876 = vmatprep.subr.mxu0 0.0
    %877 = vmatpush1.msra.mxu0 0.0
    %878 = vmatprep.subr.mxu0 0.0
    %879 = vmatpush1.msra.mxu0 0.0
    %880 = vmatprep.subr.mxu0 0.0
    %881 = vmatpush1.msra.mxu0 0.0
    %882 = vmatprep.subr.mxu0 0.0
    %883 = vmatpush1.msra.mxu0 0.0
    %884 = vmatprep.subr.mxu0 0.0
    %885 = vmatpush1.msra.mxu0 0.0
    %886 = vmatprep.subr.mxu0 0.0
    %887 = vmatpush1.msra.mxu0 0.0
    %888 = vmatprep.subr.mxu0 0.0
    %889 = vmatpush1.msra.mxu0 0.0
    %890 = vmatprep.subr.mxu0 0.0
    %891 = vmatpush1.msra.mxu0 %v855
    %892 = vmatprep.subr.mxu0 0.0
    %893 = vmatpush2.msra.mxu0 0.0
    %894 = vmatprep.subr.mxu0 0.0
    %895 = vmatpush2.msra.mxu0 0.0
    %896 = vmatprep.subr.mxu0 0.0
    %897 = vmatpush2.msra.mxu0 0.0
    %898 = vmatprep.subr.mxu0 0.0
    %899 = vmatpush2.msra.mxu0 0.0
    %900 = vmatprep.subr.mxu0 0.0
    %901 = vmatpush2.msra.mxu0 0.0
    %902 = vmatprep.subr.mxu0 0.0
    %903 = vmatpush2.msra.mxu0 0.0
    %904 = vmatprep.subr.mxu0 0.0
    %905 = vmatpush2.msra.mxu0 0.0
    %906 = vmatprep.subr.mxu0 0.0
    %907 = vmatpush2.msra.mxu0 0.0
    %908 = vmatprep.subr.mxu0 0.0
    %909 = vmatpush2.msra.mxu0 0.0
    %910 = vmatprep.subr.mxu0 0.0
    %911 = vmatpush2.msra.mxu0 0.0
    %912 = vmatprep.subr.mxu0 0.0
    %913 = vmatpush2.msra.mxu0 0.0
    %914 = vmatprep.subr.mxu0 0.0
    %915 = vmatpush2.msra.mxu0 0.0
    %916 = vmatprep.subr.mxu0 0.0
    %917 = vmatpush2.msra.mxu0 0.0
    %918 = vmatprep.subr.mxu0 0.0
    %919 = vmatpush2.msra.mxu0 0.0
    %920 = vmatprep.subr.mxu0 0.0
    %921 = vmatpush2.msra.mxu0 0.0
    %922 = vmatprep.subr.mxu0 0.0
    %923 = vmatpush2.msra.mxu0 0.0
    %924 = vmatprep.mubr.f32.mxu0 0.0
    %925 = vmatmul.mubr.f32.gmra.mxu0 %v858
    %v926 = vpop.f32.mrf.mxu0
    %v927 = vadd.f32 %v773, %v926
    %v928 = vpop.f32.mrf.mxu0
    %929 = vdwg.mxu0
    %vm930 = vcmp.ge.s32.totalorder %v79, 16
    %vm931 = vcmp.lt.s32.totalorder %v79, 24
    %vm932 = vmand %vm930, %vm931
    %v933 = vsel %vm932, 1, 0
    %v934 = vcvt.s32.f32 %v933
    %936 = vrot.lane.b32.xlu0 %v934, 32
    %v937 = vpop.permute.xlu0 %936
    %v939 = vmul.f32 %v233, %v937
    %v940 = vmul.f32 %v236, %v937
    %941 = vrot.lane.b32.xlu0 %v934, 64
    %v942 = vpop.permute.xlu0 %941
    %v944 = vmul.f32 %v233, %v942
    %v945 = vmul.f32 %v236, %v942
    %947 = vrot.lane.b32.xlu0 %v939, 96
    %v948 = vpop.permute.xlu0 %947
    %v949 = vsel %vm96, %v948, 0
    %951 = vmatprep.subr.mxu0 0.0
    %952 = vmatpush1.xpose.msra.mxu0 0.0
    %953 = vmatprep.subr.mxu0 0.0
    %954 = vmatpush1.xpose.msra.mxu0 0.0
    %955 = vmatprep.subr.mxu0 0.0
    %956 = vmatpush1.xpose.msra.mxu0 0.0
    %957 = vmatprep.subr.mxu0 0.0
    %958 = vmatpush1.xpose.msra.mxu0 0.0
    %959 = vmatprep.subr.mxu0 0.0
    %960 = vmatpush1.xpose.msra.mxu0 0.0
    %961 = vmatprep.subr.mxu0 0.0
    %962 = vmatpush1.xpose.msra.mxu0 0.0
    %963 = vmatprep.subr.mxu0 0.0
    %964 = vmatpush1.xpose.msra.mxu0 0.0
    %965 = vmatprep.subr.mxu0 0.0
    %966 = vmatpush1.xpose.msra.mxu0 0.0
    %967 = vmatprep.subr.mxu0 0.0
    %968 = vmatpush1.xpose.msra.mxu0 0.0
    %969 = vmatprep.subr.mxu0 0.0
    %970 = vmatpush1.xpose.msra.mxu0 0.0
    %971 = vmatprep.subr.mxu0 0.0
    %972 = vmatpush1.xpose.msra.mxu0 0.0
    %973 = vmatprep.subr.mxu0 0.0
    %974 = vmatpush1.xpose.msra.mxu0 0.0
    %975 = vmatprep.subr.mxu0 0.0
    %976 = vmatpush1.xpose.msra.mxu0 0.0
    %977 = vmatprep.subr.mxu0 0.0
    %978 = vmatpush1.xpose.msra.mxu0 0.0
    %979 = vmatprep.subr.mxu0 0.0
    %980 = vmatpush1.xpose.msra.mxu0 0.0
    %981 = vmatprep.subr.mxu0 0.0
    %982 = vmatpush1.xpose.msra.mxu0 %v949
    %983 = vmatprep.subr.mxu0 0.0
    %984 = vmatpush2.xpose.msra.mxu0 0.0
    %985 = vmatprep.subr.mxu0 0.0
    %986 = vmatpush2.xpose.msra.mxu0 0.0
    %987 = vmatprep.subr.mxu0 0.0
    %988 = vmatpush2.xpose.msra.mxu0 0.0
    %989 = vmatprep.subr.mxu0 0.0
    %990 = vmatpush2.xpose.msra.mxu0 0.0
    %991 = vmatprep.subr.mxu0 0.0
    %992 = vmatpush2.xpose.msra.mxu0 0.0
    %993 = vmatprep.subr.mxu0 0.0
    %994 = vmatpush2.xpose.msra.mxu0 0.0
    %995 = vmatprep.subr.mxu0 0.0
    %996 = vmatpush2.xpose.msra.mxu0 0.0
    %997 = vmatprep.subr.mxu0 0.0
    %998 = vmatpush2.xpose.msra.mxu0 0.0
    %999 = vmatprep.subr.mxu0 0.0
    %1000 = vmatpush2.xpose.msra.mxu0 0.0
    %1001 = vmatprep.subr.mxu0 0.0
    %1002 = vmatpush2.xpose.msra.mxu0 0.0
    %1003 = vmatprep.subr.mxu0 0.0
    %1004 = vmatpush2.xpose.msra.mxu0 0.0
    %1005 = vmatprep.subr.mxu0 0.0
    %1006 = vmatpush2.xpose.msra.mxu0 0.0
    %1007 = vmatprep.subr.mxu0 0.0
    %1008 = vmatpush2.xpose.msra.mxu0 0.0
    %1009 = vmatprep.subr.mxu0 0.0
    %1010 = vmatpush2.xpose.msra.mxu0 0.0
    %1011 = vmatprep.subr.mxu0 0.0
    %1012 = vmatpush2.xpose.msra.mxu0 0.0
    %1013 = vmatprep.subr.mxu0 0.0
    %1014 = vmatpush2.xpose.msra.mxu0 0.0
    %1015 = vmatprep.mubr.f32.mxu0 0.0
    %1016 = vmatmul.mubr.f32.gmra.mxu0 %v259
    %v1017 = vpop.f32.mrf.mxu0
    %v1018 = vadd.f32 0.0, %v1017
    %v1019 = vpop.f32.mrf.mxu0
    %1020 = vdwg.mxu0
    %1022 = vrot.lane.b32.xlu0 %v940, 96
    %v1023 = vpop.permute.xlu0 %1022
    %v1024 = vsel %vm96, %v1023, 0
    %1026 = vmatprep.subr.mxu0 0.0
    %1027 = vmatpush1.xpose.msra.mxu0 0.0
    %1028 = vmatprep.subr.mxu0 0.0
    %1029 = vmatpush1.xpose.msra.mxu0 0.0
    %1030 = vmatprep.subr.mxu0 0.0
    %1031 = vmatpush1.xpose.msra.mxu0 0.0
    %1032 = vmatprep.subr.mxu0 0.0
    %1033 = vmatpush1.xpose.msra.mxu0 0.0
    %1034 = vmatprep.subr.mxu0 0.0
    %1035 = vmatpush1.xpose.msra.mxu0 0.0
    %1036 = vmatprep.subr.mxu0 0.0
    %1037 = vmatpush1.xpose.msra.mxu0 0.0
    %1038 = vmatprep.subr.mxu0 0.0
    %1039 = vmatpush1.xpose.msra.mxu0 0.0
    %1040 = vmatprep.subr.mxu0 0.0
    %1041 = vmatpush1.xpose.msra.mxu0 0.0
    %1042 = vmatprep.subr.mxu0 0.0
    %1043 = vmatpush1.xpose.msra.mxu0 0.0
    %1044 = vmatprep.subr.mxu0 0.0
    %1045 = vmatpush1.xpose.msra.mxu0 0.0
    %1046 = vmatprep.subr.mxu0 0.0
    %1047 = vmatpush1.xpose.msra.mxu0 0.0
    %1048 = vmatprep.subr.mxu0 0.0
    %1049 = vmatpush1.xpose.msra.mxu0 0.0
    %1050 = vmatprep.subr.mxu0 0.0
    %1051 = vmatpush1.xpose.msra.mxu0 0.0
    %1052 = vmatprep.subr.mxu0 0.0
    %1053 = vmatpush1.xpose.msra.mxu0 0.0
    %1054 = vmatprep.subr.mxu0 0.0
    %1055 = vmatpush1.xpose.msra.mxu0 0.0
    %1056 = vmatprep.subr.mxu0 0.0
    %1057 = vmatpush1.xpose.msra.mxu0 %v1024
    %1058 = vmatprep.subr.mxu0 0.0
    %1059 = vmatpush2.xpose.msra.mxu0 0.0
    %1060 = vmatprep.subr.mxu0 0.0
    %1061 = vmatpush2.xpose.msra.mxu0 0.0
    %1062 = vmatprep.subr.mxu0 0.0
    %1063 = vmatpush2.xpose.msra.mxu0 0.0
    %1064 = vmatprep.subr.mxu0 0.0
    %1065 = vmatpush2.xpose.msra.mxu0 0.0
    %1066 = vmatprep.subr.mxu0 0.0
    %1067 = vmatpush2.xpose.msra.mxu0 0.0
    %1068 = vmatprep.subr.mxu0 0.0
    %1069 = vmatpush2.xpose.msra.mxu0 0.0
    %1070 = vmatprep.subr.mxu0 0.0
    %1071 = vmatpush2.xpose.msra.mxu0 0.0
    %1072 = vmatprep.subr.mxu0 0.0
    %1073 = vmatpush2.xpose.msra.mxu0 0.0
    %1074 = vmatprep.subr.mxu0 0.0
    %1075 = vmatpush2.xpose.msra.mxu0 0.0
    %1076 = vmatprep.subr.mxu0 0.0
    %1077 = vmatpush2.xpose.msra.mxu0 0.0
    %1078 = vmatprep.subr.mxu0 0.0
    %1079 = vmatpush2.xpose.msra.mxu0 0.0
    %1080 = vmatprep.subr.mxu0 0.0
    %1081 = vmatpush2.xpose.msra.mxu0 0.0
    %1082 = vmatprep.subr.mxu0 0.0
    %1083 = vmatpush2.xpose.msra.mxu0 0.0
    %1084 = vmatprep.subr.mxu0 0.0
    %1085 = vmatpush2.xpose.msra.mxu0 0.0
    %1086 = vmatprep.subr.mxu0 0.0
    %1087 = vmatpush2.xpose.msra.mxu0 0.0
    %1088 = vmatprep.subr.mxu0 0.0
    %1089 = vmatpush2.xpose.msra.mxu0 0.0
    %1090 = vmatprep.mubr.f32.mxu0 0.0
    %1091 = vmatmul.mubr.f32.gmra.mxu0 %v337
    %v1092 = vpop.f32.mrf.mxu0
    %v1093 = vadd.f32 0.0, %v1092
    %v1094 = vpop.f32.mrf.mxu0
    %1095 = vdwg.mxu0
    %v1096 = vsel %vm411, %v1018, -inf
    %1097 = vmax.xlane.f32.xlu0 %v1096
    %v1098 = vpop.xlane.xlu0 %1097
    %v1099 = vsel %vm411, %v1093, -inf
    %1100 = vmax.xlane.f32.xlu0 %v1099
    %v1101 = vpop.xlane.xlu0 %1100
    %v1102 = vsub.f32 %v1018, %v1098
    %v1103 = vsub.f32 %v1093, %v1101
    %v1104 = vmul.f32 %v1102, 1.442695
    %v1105 = vpow.pop %v1104
    %v1106 = vmul.f32 %v1103, 1.442695
    %v1107 = vpow.pop %v1106
    %v1108 = vsel %vm411, %v1105, 0.0
    %1109 = vadd.xlane.f32.xlu0 %v1108
    %v1110 = vpop.xlane.xlu0 %1109
    %v1111 = vsel %vm411, %v1107, 0.0
    %1112 = vadd.xlane.f32.xlu0 %v1111
    %v1113 = vpop.xlane.xlu0 %1112
    %v1114 = vrcp.pop %v1110
    %v1115 = vmul.f32 %v1105, %v1114
    %v1116 = vrcp.pop %v1113
    %v1117 = vmul.f32 %v1107, %v1116
    %1119 = vrot.lane.b32.xlu0 %v944, 64
    %v1120 = vpop.permute.xlu0 %1119
    %v1123 = vsel %vm411, %v1115, 0
    %1125 = vmatprep.subr.mxu0 0.0
    %1126 = vmatpush1.msra.mxu0 0.0
    %1127 = vmatprep.subr.mxu0 0.0
    %1128 = vmatpush1.msra.mxu0 0.0
    %1129 = vmatprep.subr.mxu0 0.0
    %1130 = vmatpush1.msra.mxu0 0.0
    %1131 = vmatprep.subr.mxu0 0.0
    %1132 = vmatpush1.msra.mxu0 0.0
    %1133 = vmatprep.subr.mxu0 0.0
    %1134 = vmatpush1.msra.mxu0 0.0
    %1135 = vmatprep.subr.mxu0 0.0
    %1136 = vmatpush1.msra.mxu0 0.0
    %1137 = vmatprep.subr.mxu0 0.0
    %1138 = vmatpush1.msra.mxu0 0.0
    %1139 = vmatprep.subr.mxu0 0.0
    %1140 = vmatpush1.msra.mxu0 0.0
    %1141 = vmatprep.subr.mxu0 0.0
    %1142 = vmatpush1.msra.mxu0 0.0
    %1143 = vmatprep.subr.mxu0 0.0
    %1144 = vmatpush1.msra.mxu0 0.0
    %1145 = vmatprep.subr.mxu0 0.0
    %1146 = vmatpush1.msra.mxu0 0.0
    %1147 = vmatprep.subr.mxu0 0.0
    %1148 = vmatpush1.msra.mxu0 0.0
    %1149 = vmatprep.subr.mxu0 0.0
    %1150 = vmatpush1.msra.mxu0 0.0
    %1151 = vmatprep.subr.mxu0 0.0
    %1152 = vmatpush1.msra.mxu0 0.0
    %1153 = vmatprep.subr.mxu0 0.0
    %1154 = vmatpush1.msra.mxu0 0.0
    %1155 = vmatprep.subr.mxu0 0.0
    %1156 = vmatpush1.msra.mxu0 %v1120
    %1157 = vmatprep.subr.mxu0 0.0
    %1158 = vmatpush2.msra.mxu0 0.0
    %1159 = vmatprep.subr.mxu0 0.0
    %1160 = vmatpush2.msra.mxu0 0.0
    %1161 = vmatprep.subr.mxu0 0.0
    %1162 = vmatpush2.msra.mxu0 0.0
    %1163 = vmatprep.subr.mxu0 0.0
    %1164 = vmatpush2.msra.mxu0 0.0
    %1165 = vmatprep.subr.mxu0 0.0
    %1166 = vmatpush2.msra.mxu0 0.0
    %1167 = vmatprep.subr.mxu0 0.0
    %1168 = vmatpush2.msra.mxu0 0.0
    %1169 = vmatprep.subr.mxu0 0.0
    %1170 = vmatpush2.msra.mxu0 0.0
    %1171 = vmatprep.subr.mxu0 0.0
    %1172 = vmatpush2.msra.mxu0 0.0
    %1173 = vmatprep.subr.mxu0 0.0
    %1174 = vmatpush2.msra.mxu0 0.0
    %1175 = vmatprep.subr.mxu0 0.0
    %1176 = vmatpush2.msra.mxu0 0.0
    %1177 = vmatprep.subr.mxu0 0.0
    %1178 = vmatpush2.msra.mxu0 0.0
    %1179 = vmatprep.subr.mxu0 0.0
    %1180 = vmatpush2.msra.mxu0 0.0
    %1181 = vmatprep.subr.mxu0 0.0
    %1182 = vmatpush2.msra.mxu0 0.0
    %1183 = vmatprep.subr.mxu0 0.0
    %1184 = vmatpush2.msra.mxu0 0.0
    %1185 = vmatprep.subr.mxu0 0.0
    %1186 = vmatpush2.msra.mxu0 0.0
    %1187 = vmatprep.subr.mxu0 0.0
    %1188 = vmatpush2.msra.mxu0 0.0
    %1189 = vmatprep.mubr.f32.mxu0 0.0
    %1190 = vmatmul.mubr.f32.gmra.mxu0 %v1123
    %v1191 = vpop.f32.mrf.mxu0
    %v1192 = vadd.f32 0.0, %v1191
    %v1193 = vpop.f32.mrf.mxu0
    %1194 = vdwg.mxu0
    %1196 = vrot.lane.b32.xlu0 %v945, 64
    %v1197 = vpop.permute.xlu0 %1196
    %v1200 = vsel %vm411, %v1117, 0
    %1202 = vmatprep.subr.mxu0 0.0
    %1203 = vmatpush1.msra.mxu0 0.0
    %1204 = vmatprep.subr.mxu0 0.0
    %1205 = vmatpush1.msra.mxu0 0.0
    %1206 = vmatprep.subr.mxu0 0.0
    %1207 = vmatpush1.msra.mxu0 0.0
    %1208 = vmatprep.subr.mxu0 0.0
    %1209 = vmatpush1.msra.mxu0 0.0
    %1210 = vmatprep.subr.mxu0 0.0
    %1211 = vmatpush1.msra.mxu0 0.0
    %1212 = vmatprep.subr.mxu0 0.0
    %1213 = vmatpush1.msra.mxu0 0.0
    %1214 = vmatprep.subr.mxu0 0.0
    %1215 = vmatpush1.msra.mxu0 0.0
    %1216 = vmatprep.subr.mxu0 0.0
    %1217 = vmatpush1.msra.mxu0 0.0
    %1218 = vmatprep.subr.mxu0 0.0
    %1219 = vmatpush1.msra.mxu0 0.0
    %1220 = vmatprep.subr.mxu0 0.0
    %1221 = vmatpush1.msra.mxu0 0.0
    %1222 = vmatprep.subr.mxu0 0.0
    %1223 = vmatpush1.msra.mxu0 0.0
    %1224 = vmatprep.subr.mxu0 0.0
    %1225 = vmatpush1.msra.mxu0 0.0
    %1226 = vmatprep.subr.mxu0 0.0
    %1227 = vmatpush1.msra.mxu0 0.0
    %1228 = vmatprep.subr.mxu0 0.0
    %1229 = vmatpush1.msra.mxu0 0.0
    %1230 = vmatprep.subr.mxu0 0.0
    %1231 = vmatpush1.msra.mxu0 0.0
    %1232 = vmatprep.subr.mxu0 0.0
    %1233 = vmatpush1.msra.mxu0 %v1197
    %1234 = vmatprep.subr.mxu0 0.0
    %1235 = vmatpush2.msra.mxu0 0.0
    %1236 = vmatprep.subr.mxu0 0.0
    %1237 = vmatpush2.msra.mxu0 0.0
    %1238 = vmatprep.subr.mxu0 0.0
    %1239 = vmatpush2.msra.mxu0 0.0
    %1240 = vmatprep.subr.mxu0 0.0
    %1241 = vmatpush2.msra.mxu0 0.0
    %1242 = vmatprep.subr.mxu0 0.0
    %1243 = vmatpush2.msra.mxu0 0.0
    %1244 = vmatprep.subr.mxu0 0.0
    %1245 = vmatpush2.msra.mxu0 0.0
    %1246 = vmatprep.subr.mxu0 0.0
    %1247 = vmatpush2.msra.mxu0 0.0
    %1248 = vmatprep.subr.mxu0 0.0
    %1249 = vmatpush2.msra.mxu0 0.0
    %1250 = vmatprep.subr.mxu0 0.0
    %1251 = vmatpush2.msra.mxu0 0.0
    %1252 = vmatprep.subr.mxu0 0.0
    %1253 = vmatpush2.msra.mxu0 0.0
    %1254 = vmatprep.subr.mxu0 0.0
    %1255 = vmatpush2.msra.mxu0 0.0
    %1256 = vmatprep.subr.mxu0 0.0
    %1257 = vmatpush2.msra.mxu0 0.0
    %1258 = vmatprep.subr.mxu0 0.0
    %1259 = vmatpush2.msra.mxu0 0.0
    %1260 = vmatprep.subr.mxu0 0.0
    %1261 = vmatpush2.msra.mxu0 0.0
    %1262 = vmatprep.subr.mxu0 0.0
    %1263 = vmatpush2.msra.mxu0 0.0
    %1264 = vmatprep.subr.mxu0 0.0
    %1265 = vmatpush2.msra.mxu0 0.0
    %1266 = vmatprep.mubr.f32.mxu0 0.0
    %1267 = vmatmul.mubr.f32.gmra.mxu0 %v1200
    %v1268 = vpop.f32.mrf.mxu0
    %v1269 = vadd.f32 0.0, %v1268
    %v1270 = vpop.f32.mrf.mxu0
    %1271 = vdwg.mxu0
    %v1272 = vadd.f32 %v850, %v1192
    %v1273 = vadd.f32 %v927, %v1269
    %vm1274 = vcmp.ge.s32.totalorder %v79, 24
    %vm1275 = vcmp.lt.s32.totalorder %v79, 32
    %vm1276 = vmand %vm1274, %vm1275
    %v1277 = vsel %vm1276, 1, 0
    %v1278 = vcvt.s32.f32 %v1277
    %1280 = vrot.lane.b32.xlu0 %v1278, 32
    %v1281 = vpop.permute.xlu0 %1280
    %v1283 = vmul.f32 %v233, %v1281
    %v1284 = vmul.f32 %v236, %v1281
    %1285 = vrot.lane.b32.xlu0 %v1278, 64
    %v1286 = vpop.permute.xlu0 %1285
    %v1288 = vmul.f32 %v233, %v1286
    %v1289 = vmul.f32 %v236, %v1286
    %1291 = vrot.lane.b32.xlu0 %v1283, 96
    %v1292 = vpop.permute.xlu0 %1291
    %v1293 = vsel %vm96, %v1292, 0
    %1295 = vmatprep.subr.mxu0 0.0
    %1296 = vmatpush1.xpose.msra.mxu0 0.0
    %1297 = vmatprep.subr.mxu0 0.0
    %1298 = vmatpush1.xpose.msra.mxu0 0.0
    %1299 = vmatprep.subr.mxu0 0.0
    %1300 = vmatpush1.xpose.msra.mxu0 0.0
    %1301 = vmatprep.subr.mxu0 0.0
    %1302 = vmatpush1.xpose.msra.mxu0 0.0
    %1303 = vmatprep.subr.mxu0 0.0
    %1304 = vmatpush1.xpose.msra.mxu0 0.0
    %1305 = vmatprep.subr.mxu0 0.0
    %1306 = vmatpush1.xpose.msra.mxu0 0.0
    %1307 = vmatprep.subr.mxu0 0.0
    %1308 = vmatpush1.xpose.msra.mxu0 0.0
    %1309 = vmatprep.subr.mxu0 0.0
    %1310 = vmatpush1.xpose.msra.mxu0 0.0
    %1311 = vmatprep.subr.mxu0 0.0
    %1312 = vmatpush1.xpose.msra.mxu0 0.0
    %1313 = vmatprep.subr.mxu0 0.0
    %1314 = vmatpush1.xpose.msra.mxu0 0.0
    %1315 = vmatprep.subr.mxu0 0.0
    %1316 = vmatpush1.xpose.msra.mxu0 0.0
    %1317 = vmatprep.subr.mxu0 0.0
    %1318 = vmatpush1.xpose.msra.mxu0 0.0
    %1319 = vmatprep.subr.mxu0 0.0
    %1320 = vmatpush1.xpose.msra.mxu0 0.0
    %1321 = vmatprep.subr.mxu0 0.0
    %1322 = vmatpush1.xpose.msra.mxu0 0.0
    %1323 = vmatprep.subr.mxu0 0.0
    %1324 = vmatpush1.xpose.msra.mxu0 0.0
    %1325 = vmatprep.subr.mxu0 0.0
    %1326 = vmatpush1.xpose.msra.mxu0 %v1293
    %1327 = vmatprep.subr.mxu0 0.0
    %1328 = vmatpush2.xpose.msra.mxu0 0.0
    %1329 = vmatprep.subr.mxu0 0.0
    %1330 = vmatpush2.xpose.msra.mxu0 0.0
    %1331 = vmatprep.subr.mxu0 0.0
    %1332 = vmatpush2.xpose.msra.mxu0 0.0
    %1333 = vmatprep.subr.mxu0 0.0
    %1334 = vmatpush2.xpose.msra.mxu0 0.0
    %1335 = vmatprep.subr.mxu0 0.0
    %1336 = vmatpush2.xpose.msra.mxu0 0.0
    %1337 = vmatprep.subr.mxu0 0.0
    %1338 = vmatpush2.xpose.msra.mxu0 0.0
    %1339 = vmatprep.subr.mxu0 0.0
    %1340 = vmatpush2.xpose.msra.mxu0 0.0
    %1341 = vmatprep.subr.mxu0 0.0
    %1342 = vmatpush2.xpose.msra.mxu0 0.0
    %1343 = vmatprep.subr.mxu0 0.0
    %1344 = vmatpush2.xpose.msra.mxu0 0.0
    %1345 = vmatprep.subr.mxu0 0.0
    %1346 = vmatpush2.xpose.msra.mxu0 0.0
    %1347 = vmatprep.subr.mxu0 0.0
    %1348 = vmatpush2.xpose.msra.mxu0 0.0
    %1349 = vmatprep.subr.mxu0 0.0
    %1350 = vmatpush2.xpose.msra.mxu0 0.0
    %1351 = vmatprep.subr.mxu0 0.0
    %1352 = vmatpush2.xpose.msra.mxu0 0.0
    %1353 = vmatprep.subr.mxu0 0.0
    %1354 = vmatpush2.xpose.msra.mxu0 0.0
    %1355 = vmatprep.subr.mxu0 0.0
    %1356 = vmatpush2.xpose.msra.mxu0 0.0
    %1357 = vmatprep.subr.mxu0 0.0
    %1358 = vmatpush2.xpose.msra.mxu0 0.0
    %1359 = vmatprep.mubr.f32.mxu0 0.0
    %1360 = vmatmul.mubr.f32.gmra.mxu0 %v259
    %v1361 = vpop.f32.mrf.mxu0
    %v1362 = vadd.f32 0.0, %v1361
    %v1363 = vpop.f32.mrf.mxu0
    %1364 = vdwg.mxu0
    %1366 = vrot.lane.b32.xlu0 %v1284, 96
    %v1367 = vpop.permute.xlu0 %1366
    %v1368 = vsel %vm96, %v1367, 0
    %1370 = vmatprep.subr.mxu0 0.0
    %1371 = vmatpush1.xpose.msra.mxu0 0.0
    %1372 = vmatprep.subr.mxu0 0.0
    %1373 = vmatpush1.xpose.msra.mxu0 0.0
    %1374 = vmatprep.subr.mxu0 0.0
    %1375 = vmatpush1.xpose.msra.mxu0 0.0
    %1376 = vmatprep.subr.mxu0 0.0
    %1377 = vmatpush1.xpose.msra.mxu0 0.0
    %1378 = vmatprep.subr.mxu0 0.0
    %1379 = vmatpush1.xpose.msra.mxu0 0.0
    %1380 = vmatprep.subr.mxu0 0.0
    %1381 = vmatpush1.xpose.msra.mxu0 0.0
    %1382 = vmatprep.subr.mxu0 0.0
    %1383 = vmatpush1.xpose.msra.mxu0 0.0
    %1384 = vmatprep.subr.mxu0 0.0
    %1385 = vmatpush1.xpose.msra.mxu0 0.0
    %1386 = vmatprep.subr.mxu0 0.0
    %1387 = vmatpush1.xpose.msra.mxu0 0.0
    %1388 = vmatprep.subr.mxu0 0.0
    %1389 = vmatpush1.xpose.msra.mxu0 0.0
    %1390 = vmatprep.subr.mxu0 0.0
    %1391 = vmatpush1.xpose.msra.mxu0 0.0
    %1392 = vmatprep.subr.mxu0 0.0
    %1393 = vmatpush1.xpose.msra.mxu0 0.0
    %1394 = vmatprep.subr.mxu0 0.0
    %1395 = vmatpush1.xpose.msra.mxu0 0.0
    %1396 = vmatprep.subr.mxu0 0.0
    %1397 = vmatpush1.xpose.msra.mxu0 0.0
    %1398 = vmatprep.subr.mxu0 0.0
    %1399 = vmatpush1.xpose.msra.mxu0 0.0
    %1400 = vmatprep.subr.mxu0 0.0
    %1401 = vmatpush1.xpose.msra.mxu0 %v1368
    %1402 = vmatprep.subr.mxu0 0.0
    %1403 = vmatpush2.xpose.msra.mxu0 0.0
    %1404 = vmatprep.subr.mxu0 0.0
    %1405 = vmatpush2.xpose.msra.mxu0 0.0
    %1406 = vmatprep.subr.mxu0 0.0
    %1407 = vmatpush2.xpose.msra.mxu0 0.0
    %1408 = vmatprep.subr.mxu0 0.0
    %1409 = vmatpush2.xpose.msra.mxu0 0.0
    %1410 = vmatprep.subr.mxu0 0.0
    %1411 = vmatpush2.xpose.msra.mxu0 0.0
    %1412 = vmatprep.subr.mxu0 0.0
    %1413 = vmatpush2.xpose.msra.mxu0 0.0
    %1414 = vmatprep.subr.mxu0 0.0
    %1415 = vmatpush2.xpose.msra.mxu0 0.0
    %1416 = vmatprep.subr.mxu0 0.0
    %1417 = vmatpush2.xpose.msra.mxu0 0.0
    %1418 = vmatprep.subr.mxu0 0.0
    %1419 = vmatpush2.xpose.msra.mxu0 0.0
    %1420 = vmatprep.subr.mxu0 0.0
    %1421 = vmatpush2.xpose.msra.mxu0 0.0
    %1422 = vmatprep.subr.mxu0 0.0
    %1423 = vmatpush2.xpose.msra.mxu0 0.0
    %1424 = vmatprep.subr.mxu0 0.0
    %1425 = vmatpush2.xpose.msra.mxu0 0.0
    %1426 = vmatprep.subr.mxu0 0.0
    %1427 = vmatpush2.xpose.msra.mxu0 0.0
    %1428 = vmatprep.subr.mxu0 0.0
    %1429 = vmatpush2.xpose.msra.mxu0 0.0
    %1430 = vmatprep.subr.mxu0 0.0
    %1431 = vmatpush2.xpose.msra.mxu0 0.0
    %1432 = vmatprep.subr.mxu0 0.0
    %1433 = vmatpush2.xpose.msra.mxu0 0.0
    %1434 = vmatprep.mubr.f32.mxu0 0.0
    %1435 = vmatmul.mubr.f32.gmra.mxu0 %v337
    %v1436 = vpop.f32.mrf.mxu0
    %v1437 = vadd.f32 0.0, %v1436
    %v1438 = vpop.f32.mrf.mxu0
    %1439 = vdwg.mxu0
    %v1440 = vsel %vm411, %v1362, -inf
    %1441 = vmax.xlane.f32.xlu0 %v1440
    %v1442 = vpop.xlane.xlu0 %1441
    %v1443 = vsel %vm411, %v1437, -inf
    %1444 = vmax.xlane.f32.xlu0 %v1443
    %v1445 = vpop.xlane.xlu0 %1444
    %v1446 = vsub.f32 %v1362, %v1442
    %v1447 = vsub.f32 %v1437, %v1445
    %v1448 = vmul.f32 %v1446, 1.442695
    %v1449 = vpow.pop %v1448
    %v1450 = vmul.f32 %v1447, 1.442695
    %v1451 = vpow.pop %v1450
    %v1452 = vsel %vm411, %v1449, 0.0
    %1453 = vadd.xlane.f32.xlu0 %v1452
    %v1454 = vpop.xlane.xlu0 %1453
    %v1455 = vsel %vm411, %v1451, 0.0
    %1456 = vadd.xlane.f32.xlu0 %v1455
    %v1457 = vpop.xlane.xlu0 %1456
    %v1458 = vrcp.pop %v1454
    %v1459 = vmul.f32 %v1449, %v1458
    %v1460 = vrcp.pop %v1457
    %v1461 = vmul.f32 %v1451, %v1460
    %1463 = vrot.lane.b32.xlu0 %v1288, 64
    %v1464 = vpop.permute.xlu0 %1463
    %v1467 = vsel %vm411, %v1459, 0
    %1469 = vmatprep.subr.mxu0 0.0
    %1470 = vmatpush1.msra.mxu0 0.0
    %1471 = vmatprep.subr.mxu0 0.0
    %1472 = vmatpush1.msra.mxu0 0.0
    %1473 = vmatprep.subr.mxu0 0.0
    %1474 = vmatpush1.msra.mxu0 0.0
    %1475 = vmatprep.subr.mxu0 0.0
    %1476 = vmatpush1.msra.mxu0 0.0
    %1477 = vmatprep.subr.mxu0 0.0
    %1478 = vmatpush1.msra.mxu0 0.0
    %1479 = vmatprep.subr.mxu0 0.0
    %1480 = vmatpush1.msra.mxu0 0.0
    %1481 = vmatprep.subr.mxu0 0.0
    %1482 = vmatpush1.msra.mxu0 0.0
    %1483 = vmatprep.subr.mxu0 0.0
    %1484 = vmatpush1.msra.mxu0 0.0
    %1485 = vmatprep.subr.mxu0 0.0
    %1486 = vmatpush1.msra.mxu0 0.0
    %1487 = vmatprep.subr.mxu0 0.0
    %1488 = vmatpush1.msra.mxu0 0.0
    %1489 = vmatprep.subr.mxu0 0.0
    %1490 = vmatpush1.msra.mxu0 0.0
    %1491 = vmatprep.subr.mxu0 0.0
    %1492 = vmatpush1.msra.mxu0 0.0
    %1493 = vmatprep.subr.mxu0 0.0
    %1494 = vmatpush1.msra.mxu0 0.0
    %1495 = vmatprep.subr.mxu0 0.0
    %1496 = vmatpush1.msra.mxu0 0.0
    %1497 = vmatprep.subr.mxu0 0.0
    %1498 = vmatpush1.msra.mxu0 0.0
    %1499 = vmatprep.subr.mxu0 0.0
    %1500 = vmatpush1.msra.mxu0 %v1464
    %1501 = vmatprep.subr.mxu0 0.0
    %1502 = vmatpush2.msra.mxu0 0.0
    %1503 = vmatprep.subr.mxu0 0.0
    %1504 = vmatpush2.msra.mxu0 0.0
    %1505 = vmatprep.subr.mxu0 0.0
    %1506 = vmatpush2.msra.mxu0 0.0
    %1507 = vmatprep.subr.mxu0 0.0
    %1508 = vmatpush2.msra.mxu0 0.0
    %1509 = vmatprep.subr.mxu0 0.0
    %1510 = vmatpush2.msra.mxu0 0.0
    %1511 = vmatprep.subr.mxu0 0.0
    %1512 = vmatpush2.msra.mxu0 0.0
    %1513 = vmatprep.subr.mxu0 0.0
    %1514 = vmatpush2.msra.mxu0 0.0
    %1515 = vmatprep.subr.mxu0 0.0
    %1516 = vmatpush2.msra.mxu0 0.0
    %1517 = vmatprep.subr.mxu0 0.0
    %1518 = vmatpush2.msra.mxu0 0.0
    %1519 = vmatprep.subr.mxu0 0.0
    %1520 = vmatpush2.msra.mxu0 0.0
    %1521 = vmatprep.subr.mxu0 0.0
    %1522 = vmatpush2.msra.mxu0 0.0
    %1523 = vmatprep.subr.mxu0 0.0
    %1524 = vmatpush2.msra.mxu0 0.0
    %1525 = vmatprep.subr.mxu0 0.0
    %1526 = vmatpush2.msra.mxu0 0.0
    %1527 = vmatprep.subr.mxu0 0.0
    %1528 = vmatpush2.msra.mxu0 0.0
    %1529 = vmatprep.subr.mxu0 0.0
    %1530 = vmatpush2.msra.mxu0 0.0
    %1531 = vmatprep.subr.mxu0 0.0
    %1532 = vmatpush2.msra.mxu0 0.0
    %1533 = vmatprep.mubr.f32.mxu0 0.0
    %1534 = vmatmul.mubr.f32.gmra.mxu0 %v1467
    %v1535 = vpop.f32.mrf.mxu0
    %v1536 = vadd.f32 0.0, %v1535
    %v1537 = vpop.f32.mrf.mxu0
    %1538 = vdwg.mxu0
    %1540 = vrot.lane.b32.xlu0 %v1289, 64
    %v1541 = vpop.permute.xlu0 %1540
    %v1544 = vsel %vm411, %v1461, 0
    %1546 = vmatprep.subr.mxu0 0.0
    %1547 = vmatpush1.msra.mxu0 0.0
    %1548 = vmatprep.subr.mxu0 0.0
    %1549 = vmatpush1.msra.mxu0 0.0
    %1550 = vmatprep.subr.mxu0 0.0
    %1551 = vmatpush1.msra.mxu0 0.0
    %1552 = vmatprep.subr.mxu0 0.0
    %1553 = vmatpush1.msra.mxu0 0.0
    %1554 = vmatprep.subr.mxu0 0.0
    %1555 = vmatpush1.msra.mxu0 0.0
    %1556 = vmatprep.subr.mxu0 0.0
    %1557 = vmatpush1.msra.mxu0 0.0
    %1558 = vmatprep.subr.mxu0 0.0
    %1559 = vmatpush1.msra.mxu0 0.0
    %1560 = vmatprep.subr.mxu0 0.0
    %1561 = vmatpush1.msra.mxu0 0.0
    %1562 = vmatprep.subr.mxu0 0.0
    %1563 = vmatpush1.msra.mxu0 0.0
    %1564 = vmatprep.subr.mxu0 0.0
    %1565 = vmatpush1.msra.mxu0 0.0
    %1566 = vmatprep.subr.mxu0 0.0
    %1567 = vmatpush1.msra.mxu0 0.0
    %1568 = vmatprep.subr.mxu0 0.0
    %1569 = vmatpush1.msra.mxu0 0.0
    %1570 = vmatprep.subr.mxu0 0.0
    %1571 = vmatpush1.msra.mxu0 0.0
    %1572 = vmatprep.subr.mxu0 0.0
    %1573 = vmatpush1.msra.mxu0 0.0
    %1574 = vmatprep.subr.mxu0 0.0
    %1575 = vmatpush1.msra.mxu0 0.0
    %1576 = vmatprep.subr.mxu0 0.0
    %1577 = vmatpush1.msra.mxu0 %v1541
    %1578 = vmatprep.subr.mxu0 0.0
    %1579 = vmatpush2.msra.mxu0 0.0
    %1580 = vmatprep.subr.mxu0 0.0
    %1581 = vmatpush2.msra.mxu0 0.0
    %1582 = vmatprep.subr.mxu0 0.0
    %1583 = vmatpush2.msra.mxu0 0.0
    %1584 = vmatprep.subr.mxu0 0.0
    %1585 = vmatpush2.msra.mxu0 0.0
    %1586 = vmatprep.subr.mxu0 0.0
    %1587 = vmatpush2.msra.mxu0 0.0
    %1588 = vmatprep.subr.mxu0 0.0
    %1589 = vmatpush2.msra.mxu0 0.0
    %1590 = vmatprep.subr.mxu0 0.0
    %1591 = vmatpush2.msra.mxu0 0.0
    %1592 = vmatprep.subr.mxu0 0.0
    %1593 = vmatpush2.msra.mxu0 0.0
    %1594 = vmatprep.subr.mxu0 0.0
    %1595 = vmatpush2.msra.mxu0 0.0
    %1596 = vmatprep.subr.mxu0 0.0
    %1597 = vmatpush2.msra.mxu0 0.0
    %1598 = vmatprep.subr.mxu0 0.0
    %1599 = vmatpush2.msra.mxu0 0.0
    %1600 = vmatprep.subr.mxu0 0.0
    %1601 = vmatpush2.msra.mxu0 0.0
    %1602 = vmatprep.subr.mxu0 0.0
    %1603 = vmatpush2.msra.mxu0 0.0
    %1604 = vmatprep.subr.mxu0 0.0
    %1605 = vmatpush2.msra.mxu0 0.0
    %1606 = vmatprep.subr.mxu0 0.0
    %1607 = vmatpush2.msra.mxu0 0.0
    %1608 = vmatprep.subr.mxu0 0.0
    %1609 = vmatpush2.msra.mxu0 0.0
    %1610 = vmatprep.mubr.f32.mxu0 0.0
    %1611 = vmatmul.mubr.f32.gmra.mxu0 %v1544
    %v1612 = vpop.f32.mrf.mxu0
    %v1613 = vadd.f32 0.0, %v1612
    %v1614 = vpop.f32.mrf.mxu0
    %1615 = vdwg.mxu0
    %v1616 = vadd.f32 %v1272, %v1536
    %v1617 = vadd.f32 %v1273, %v1613
    %v1618 = vpack.c.bf16 %v1617, %v1616
    %v1619 = vlaneseq
    %v1620 = vshrl.u32 %v1619, 7
    %v1621 = vsub.s32 0, %v1620
    %v1622 = vrot.slane %v66, %v1621
    %v1627 = vunpack.c.l.b16 %v49
    %v1628 = vunpack.c.l.b16 %v50
    %v1629 = vunpack.c.l.b16 %v51
    %v1630 = vunpack.c.l.b16 %v52
    %v1631 = vpack.c.b16 %v1628, %v1627
    %v1632 = vpack.c.b16 %v1630, %v1629
    %v1636 = vsel %vm96, %v1618, 0
    %1638 = vmatprep.subr.bf16.mxu0 0
    %1639 = vmatpush1.bf16.msra.mxu0 0
    %1640 = vmatprep.subr.bf16.mxu0 0
    %1641 = vmatpush1.bf16.msra.mxu0 0
    %1642 = vmatprep.subr.bf16.mxu0 0
    %1643 = vmatpush1.bf16.msra.mxu0 0
    %1644 = vmatprep.subr.bf16.mxu0 0
    %1645 = vmatpush1.bf16.msra.mxu0 0
    %1646 = vmatprep.subr.bf16.mxu0 0
    %1647 = vmatpush1.bf16.msra.mxu0 0
    %1648 = vmatprep.subr.bf16.mxu0 0
    %1649 = vmatpush1.bf16.msra.mxu0 0
    %1650 = vmatprep.subr.bf16.mxu0 0
    %1651 = vmatpush1.bf16.msra.mxu0 %v1632
    %1652 = vmatprep.subr.bf16.mxu0 0
    %1653 = vmatpush1.bf16.msra.mxu0 %v1631
    %1654 = vmatprep.subr.bf16.mxu0 0
    %1655 = vmatpush2.bf16.msra.mxu0 0
    %1656 = vmatprep.subr.bf16.mxu0 0
    %1657 = vmatpush2.bf16.msra.mxu0 0
    %1658 = vmatprep.subr.bf16.mxu0 0
    %1659 = vmatpush2.bf16.msra.mxu0 0
    %1660 = vmatprep.subr.bf16.mxu0 0
    %1661 = vmatpush2.bf16.msra.mxu0 0
    %1662 = vmatprep.subr.bf16.mxu0 0
    %1663 = vmatpush2.bf16.msra.mxu0 0
    %1664 = vmatprep.subr.bf16.mxu0 0
    %1665 = vmatpush2.bf16.msra.mxu0 0
    %1666 = vmatprep.subr.bf16.mxu0 0
    %1667 = vmatpush2.bf16.msra.mxu0 0
    %1668 = vmatprep.subr.bf16.mxu0 0
    %1669 = vmatpush2.bf16.msra.mxu0 0
    %1670 = vmatprep.mubr.bf16.mxu0 0
    %1671 = vmatmul.mubr.bf16.gmra.mxu0 %v1636
    %v1672 = vpop.f32.mrf.mxu0
    %v1673 = vadd.f32 %v1622, %v1672
    %v1674 = vpop.f32.mrf.mxu0
    %v1675 = vpop.f32.mrf.mxu0
    %v1676 = vadd.f32 %v1622, %v1675
    %v1677 = vpop.f32.mrf.mxu0
    %1678 = vdwg.mxu0
    %v1679 = vadd.f32 %v170, %v1673
    %v1680 = vadd.f32 %v175, %v1676
    %v1681 = vsel %vm96, %v1679, 0.0
    %1682 = vadd.xlane.f32.xlu0 %v1681
    %v1683 = vpop.xlane.xlu0 %1682
    %v1684 = vsel %vm96, %v1680, 0.0
    %1685 = vadd.xlane.f32.xlu0 %v1684
    %v1686 = vpop.xlane.xlu0 %1685
    %v1687 = vrcp.pop 32.0
    %v1688 = vmul.f32 %v1683, %v1687
    %v1689 = vmul.f32 %v1686, %v1687
    %v1690 = vsub.f32 %v1679, %v1688
    %v1691 = vsub.f32 %v1680, %v1689
    %v1692 = vmul.f32 %v1690, %v1690
    %v1693 = vmul.f32 %v1691, %v1691
    %v1694 = vsel %vm96, %v1692, 0.0
    %1695 = vadd.xlane.f32.xlu0 %v1694
    %v1696 = vpop.xlane.xlu0 %1695
    %v1697 = vsel %vm96, %v1693, 0.0
    %1698 = vadd.xlane.f32.xlu0 %v1697
    %v1699 = vpop.xlane.xlu0 %1698
    %v1700 = vmul.f32 %v1696, %v1687
    %v1701 = vmul.f32 %v1699, %v1687
    %v1702 = vadd.f32 %v1700, 1e-05
    %v1703 = vadd.f32 %v1701, 1e-05
    %v1704 = vrsqrt.pop %v1702
    %v1705 = vrsqrt.pop %v1703
    %v1706 = vmul.f32 %v1690, %v1704
    %v1707 = vmul.f32 %v1691, %v1705
    %v1708 = vlaneseq
    %v1709 = vshrl.u32 %v1708, 7
    %v1710 = vsub.s32 0, %v1709
    %v1711 = vrot.slane %v70, %v1710
    %v1712 = vmul.f32 %v1706, %v1711
    %v1713 = vmul.f32 %v1707, %v1711
    %v1714 = vlaneseq
    %v1715 = vshrl.u32 %v1714, 7
    %v1716 = vsub.s32 0, %v1715
    %v1717 = vrot.slane %v71, %v1716
    %v1718 = vadd.f32 %v1712, %v1717
    %v1719 = vadd.f32 %v1713, %v1717
    %v1720 = vld [vmem:[%s1] sm:$0xff]
    %v1721 = vld [vmem:[%s1 + $0x8] sm:$0xff]
    %v1722 = vld [vmem:[%s1 + $0x10] sm:$0xff]
    %v1723 = vld [vmem:[%s1 + $0x18] sm:$0xff]
    %v1724 = vpack.c.bf16 %v1719, %v1718
    %v1725 = vlaneseq
    %v1726 = vshrl.u32 %v1725, 7
    %v1727 = vsub.s32 0, %v1726
    %v1728 = vrot.slane %v64, %v1727
    %v1733 = vunpack.c.l.b16 %v39
    %v1734 = vunpack.c.l.b16 %v40
    %v1735 = vunpack.c.l.b16 %v41
    %v1736 = vunpack.c.l.b16 %v42
    %v1737 = vpack.c.b16 %v1734, %v1733
    %v1738 = vpack.c.b16 %v1736, %v1735
    %v1742 = vsel %vm96, %v1724, 0
    %1744 = vmatprep.subr.bf16.mxu0 0
    %1745 = vmatpush1.bf16.msra.mxu0 0
    %1746 = vmatprep.subr.bf16.mxu0 0
    %1747 = vmatpush1.bf16.msra.mxu0 0
    %1748 = vmatprep.subr.bf16.mxu0 0
    %1749 = vmatpush1.bf16.msra.mxu0 0
    %1750 = vmatprep.subr.bf16.mxu0 0
    %1751 = vmatpush1.bf16.msra.mxu0 0
    %1752 = vmatprep.subr.bf16.mxu0 0
    %1753 = vmatpush1.bf16.msra.mxu0 0
    %1754 = vmatprep.subr.bf16.mxu0 0
    %1755 = vmatpush1.bf16.msra.mxu0 0
    %1756 = vmatprep.subr.bf16.mxu0 0
    %1757 = vmatpush1.bf16.msra.mxu0 %v1738
    %1758 = vmatprep.subr.bf16.mxu0 0
    %1759 = vmatpush1.bf16.msra.mxu0 %v1737
    %1760 = vmatprep.subr.bf16.mxu0 0
    %1761 = vmatpush2.bf16.msra.mxu0 0
    %1762 = vmatprep.subr.bf16.mxu0 0
    %1763 = vmatpush2.bf16.msra.mxu0 0
    %1764 = vmatprep.subr.bf16.mxu0 0
    %1765 = vmatpush2.bf16.msra.mxu0 0
    %1766 = vmatprep.subr.bf16.mxu0 0
    %1767 = vmatpush2.bf16.msra.mxu0 0
    %1768 = vmatprep.subr.bf16.mxu0 0
    %1769 = vmatpush2.bf16.msra.mxu0 0
    %1770 = vmatprep.subr.bf16.mxu0 0
    %1771 = vmatpush2.bf16.msra.mxu0 0
    %1772 = vmatprep.subr.bf16.mxu0 0
    %1773 = vmatpush2.bf16.msra.mxu0 0
    %1774 = vmatprep.subr.bf16.mxu0 0
    %1775 = vmatpush2.bf16.msra.mxu0 0
    %1776 = vmatprep.mubr.bf16.mxu0 0
    %1777 = vmatmul.mubr.bf16.gmra.mxu0 %v1742
    %v1778 = vpop.f32.mrf.mxu0
    %v1779 = vadd.f32 %v1728, %v1778
    %v1780 = vpop.f32.mrf.mxu0
    %v1781 = vpop.f32.mrf.mxu0
    %v1782 = vadd.f32 %v1728, %v1781
    %v1783 = vpop.f32.mrf.mxu0
    %1784 = vdwg.mxu0
    %v1785 = vpack.c.bf16 %v1721, %v1720
    %v1786 = vpack.c.bf16 %v1723, %v1722
    %v1787 = vlaneseq
    %v1788 = vshrl.u32 %v1787, 7
    %v1789 = vsub.s32 0, %v1788
    %v1790 = vrot.slane %v65, %v1789
    %v1795 = vunpack.c.l.b16 %v44
    %v1796 = vunpack.c.l.b16 %v45
    %v1797 = vunpack.c.l.b16 %v46
    %v1798 = vunpack.c.l.b16 %v47
    %v1799 = vpack.c.b16 %v1796, %v1795
    %v1800 = vpack.c.b16 %v1798, %v1797
    %v1804 = vsel %vm96, %v1785, 0
    %v1807 = vsel %vm96, %v1786, 0
    %1809 = vmatprep.subr.bf16.mxu0 0
    %1810 = vmatpush1.bf16.msra.mxu0 0
    %1811 = vmatprep.subr.bf16.mxu0 0
    %1812 = vmatpush1.bf16.msra.mxu0 0
    %1813 = vmatprep.subr.bf16.mxu0 0
    %1814 = vmatpush1.bf16.msra.mxu0 0
    %1815 = vmatprep.subr.bf16.mxu0 0
    %1816 = vmatpush1.bf16.msra.mxu0 0
    %1817 = vmatprep.subr.bf16.mxu0 0
    %1818 = vmatpush1.bf16.msra.mxu0 0
    %1819 = vmatprep.subr.bf16.mxu0 0
    %1820 = vmatpush1.bf16.msra.mxu0 0
    %1821 = vmatprep.subr.bf16.mxu0 0
    %1822 = vmatpush1.bf16.msra.mxu0 %v1800
    %1823 = vmatprep.subr.bf16.mxu0 0
    %1824 = vmatpush1.bf16.msra.mxu0 %v1799
    %1825 = vmatprep.subr.bf16.mxu0 0
    %1826 = vmatpush2.bf16.msra.mxu0 0
    %1827 = vmatprep.subr.bf16.mxu0 0
    %1828 = vmatpush2.bf16.msra.mxu0 0
    %1829 = vmatprep.subr.bf16.mxu0 0
    %1830 = vmatpush2.bf16.msra.mxu0 0
    %1831 = vmatprep.subr.bf16.mxu0 0
    %1832 = vmatpush2.bf16.msra.mxu0 0
    %1833 = vmatprep.subr.bf16.mxu0 0
    %1834 = vmatpush2.bf16.msra.mxu0 0
    %1835 = vmatprep.subr.bf16.mxu0 0
    %1836 = vmatpush2.bf16.msra.mxu0 0
    %1837 = vmatprep.subr.bf16.mxu0 0
    %1838 = vmatpush2.bf16.msra.mxu0 0
    %1839 = vmatprep.subr.bf16.mxu0 0
    %1840 = vmatpush2.bf16.msra.mxu0 0
    %1841 = vmatprep.mubr.bf16.mxu0 0
    %1842 = vmatmul.mubr.bf16.gmra.mxu0 %v1804
    %v1843 = vpop.f32.mrf.mxu0
    %v1844 = vadd.f32 %v1790, %v1843
    %v1845 = vpop.f32.mrf.mxu0
    %v1846 = vpop.f32.mrf.mxu0
    %v1847 = vadd.f32 %v1790, %v1846
    %v1848 = vpop.f32.mrf.mxu0
    %1849 = vmatprep.mubr.bf16.mxu0 0
    %1850 = vmatmul.mubr.bf16.gmra.mxu0 %v1807
    %v1851 = vpop.f32.mrf.mxu0
    %v1852 = vadd.f32 %v1790, %v1851
    %v1853 = vpop.f32.mrf.mxu0
    %v1854 = vpop.f32.mrf.mxu0
    %v1855 = vadd.f32 %v1790, %v1854
    %v1856 = vpop.f32.mrf.mxu0
    %1857 = vdwg.mxu0
    %v1858 = vmul.f32 %v1844, %v243
    %v1859 = vmul.f32 %v1847, %v243
    %v1860 = vmul.f32 %v1852, %v243
    %v1861 = vmul.f32 %v1855, %v243
    %v1862 = vmul.f32 %v1844, %v246
    %v1863 = vmul.f32 %v1847, %v246
    %v1864 = vmul.f32 %v1852, %v246
    %v1865 = vmul.f32 %v1855, %v246
    %v1867 = vsel %vm96, %v1779, 0
    %v1870 = vsel %vm96, %v1858, 0
    %v1873 = vsel %vm96, %v1859, 0
    %1875 = vmatprep.subr.mxu0 0.0
    %1876 = vmatpush1.xpose.msra.mxu0 0.0
    %1877 = vmatprep.subr.mxu0 0.0
    %1878 = vmatpush1.xpose.msra.mxu0 0.0
    %1879 = vmatprep.subr.mxu0 0.0
    %1880 = vmatpush1.xpose.msra.mxu0 0.0
    %1881 = vmatprep.subr.mxu0 0.0
    %1882 = vmatpush1.xpose.msra.mxu0 0.0
    %1883 = vmatprep.subr.mxu0 0.0
    %1884 = vmatpush1.xpose.msra.mxu0 0.0
    %1885 = vmatprep.subr.mxu0 0.0
    %1886 = vmatpush1.xpose.msra.mxu0 0.0
    %1887 = vmatprep.subr.mxu0 0.0
    %1888 = vmatpush1.xpose.msra.mxu0 0.0
    %1889 = vmatprep.subr.mxu0 0.0
    %1890 = vmatpush1.xpose.msra.mxu0 0.0
    %1891 = vmatprep.subr.mxu0 0.0
    %1892 = vmatpush1.xpose.msra.mxu0 0.0
    %1893 = vmatprep.subr.mxu0 0.0
    %1894 = vmatpush1.xpose.msra.mxu0 0.0
    %1895 = vmatprep.subr.mxu0 0.0
    %1896 = vmatpush1.xpose.msra.mxu0 0.0
    %1897 = vmatprep.subr.mxu0 0.0
    %1898 = vmatpush1.xpose.msra.mxu0 0.0
    %1899 = vmatprep.subr.mxu0 0.0
    %1900 = vmatpush1.xpose.msra.mxu0 0.0
    %1901 = vmatprep.subr.mxu0 0.0
    %1902 = vmatpush1.xpose.msra.mxu0 0.0
    %1903 = vmatprep.subr.mxu0 0.0
    %1904 = vmatpush1.xpose.msra.mxu0 %v1873
    %1905 = vmatprep.subr.mxu0 0.0
    %1906 = vmatpush1.xpose.msra.mxu0 %v1870
    %1907 = vmatprep.subr.mxu0 0.0
    %1908 = vmatpush2.xpose.msra.mxu0 0.0
    %1909 = vmatprep.subr.mxu0 0.0
    %1910 = vmatpush2.xpose.msra.mxu0 0.0
    %1911 = vmatprep.subr.mxu0 0.0
    %1912 = vmatpush2.xpose.msra.mxu0 0.0
    %1913 = vmatprep.subr.mxu0 0.0
    %1914 = vmatpush2.xpose.msra.mxu0 0.0
    %1915 = vmatprep.subr.mxu0 0.0
    %1916 = vmatpush2.xpose.msra.mxu0 0.0
    %1917 = vmatprep.subr.mxu0 0.0
    %1918 = vmatpush2.xpose.msra.mxu0 0.0
    %1919 = vmatprep.subr.mxu0 0.0
    %1920 = vmatpush2.xpose.msra.mxu0 0.0
    %1921 = vmatprep.subr.mxu0 0.0
    %1922 = vmatpush2.xpose.msra.mxu0 0.0
    %1923 = vmatprep.subr.mxu0 0.0
    %1924 = vmatpush2.xpose.msra.mxu0 0.0
    %1925 = vmatprep.subr.mxu0 0.0
    %1926 = vmatpush2.xpose.msra.mxu0 0.0
    %1927 = vmatprep.subr.mxu0 0.0
    %1928 = vmatpush2.xpose.msra.mxu0 0.0
    %1929 = vmatprep.subr.mxu0 0.0
    %1930 = vmatpush2.xpose.msra.mxu0 0.0
    %1931 = vmatprep.subr.mxu0 0.0
    %1932 = vmatpush2.xpose.msra.mxu0 0.0
    %1933 = vmatprep.subr.mxu0 0.0
    %1934 = vmatpush2.xpose.msra.mxu0 0.0
    %1935 = vmatprep.subr.mxu0 0.0
    %1936 = vmatpush2.xpose.msra.mxu0 0.0
    %1937 = vmatprep.subr.mxu0 0.0
    %1938 = vmatpush2.xpose.msra.mxu0 0.0
    %1939 = vmatprep.mubr.f32.mxu0 0.0
    %1940 = vmatmul.mubr.f32.gmra.mxu0 %v1867
    %v1941 = vpop.f32.mrf.mxu0
    %v1942 = vadd.f32 0.0, %v1941
    %v1943 = vpop.f32.mrf.mxu0
    %1944 = vdwg.mxu0
    %v1946 = vsel %vm96, %v1782, 0
    %v1949 = vsel %vm96, %v1860, 0
    %v1952 = vsel %vm96, %v1861, 0
    %1954 = vmatprep.subr.mxu0 0.0
    %1955 = vmatpush1.xpose.msra.mxu0 0.0
    %1956 = vmatprep.subr.mxu0 0.0
    %1957 = vmatpush1.xpose.msra.mxu0 0.0
    %1958 = vmatprep.subr.mxu0 0.0
    %1959 = vmatpush1.xpose.msra.mxu0 0.0
    %1960 = vmatprep.subr.mxu0 0.0
    %1961 = vmatpush1.xpose.msra.mxu0 0.0
    %1962 = vmatprep.subr.mxu0 0.0
    %1963 = vmatpush1.xpose.msra.mxu0 0.0
    %1964 = vmatprep.subr.mxu0 0.0
    %1965 = vmatpush1.xpose.msra.mxu0 0.0
    %1966 = vmatprep.subr.mxu0 0.0
    %1967 = vmatpush1.xpose.msra.mxu0 0.0
    %1968 = vmatprep.subr.mxu0 0.0
    %1969 = vmatpush1.xpose.msra.mxu0 0.0
    %1970 = vmatprep.subr.mxu0 0.0
    %1971 = vmatpush1.xpose.msra.mxu0 0.0
    %1972 = vmatprep.subr.mxu0 0.0
    %1973 = vmatpush1.xpose.msra.mxu0 0.0
    %1974 = vmatprep.subr.mxu0 0.0
    %1975 = vmatpush1.xpose.msra.mxu0 0.0
    %1976 = vmatprep.subr.mxu0 0.0
    %1977 = vmatpush1.xpose.msra.mxu0 0.0
    %1978 = vmatprep.subr.mxu0 0.0
    %1979 = vmatpush1.xpose.msra.mxu0 0.0
    %1980 = vmatprep.subr.mxu0 0.0
    %1981 = vmatpush1.xpose.msra.mxu0 0.0
    %1982 = vmatprep.subr.mxu0 0.0
    %1983 = vmatpush1.xpose.msra.mxu0 %v1952
    %1984 = vmatprep.subr.mxu0 0.0
    %1985 = vmatpush1.xpose.msra.mxu0 %v1949
    %1986 = vmatprep.subr.mxu0 0.0
    %1987 = vmatpush2.xpose.msra.mxu0 0.0
    %1988 = vmatprep.subr.mxu0 0.0
    %1989 = vmatpush2.xpose.msra.mxu0 0.0
    %1990 = vmatprep.subr.mxu0 0.0
    %1991 = vmatpush2.xpose.msra.mxu0 0.0
    %1992 = vmatprep.subr.mxu0 0.0
    %1993 = vmatpush2.xpose.msra.mxu0 0.0
    %1994 = vmatprep.subr.mxu0 0.0
    %1995 = vmatpush2.xpose.msra.mxu0 0.0
    %1996 = vmatprep.subr.mxu0 0.0
    %1997 = vmatpush2.xpose.msra.mxu0 0.0
    %1998 = vmatprep.subr.mxu0 0.0
    %1999 = vmatpush2.xpose.msra.mxu0 0.0
    %2000 = vmatprep.subr.mxu0 0.0
    %2001 = vmatpush2.xpose.msra.mxu0 0.0
    %2002 = vmatprep.subr.mxu0 0.0
    %2003 = vmatpush2.xpose.msra.mxu0 0.0
    %2004 = vmatprep.subr.mxu0 0.0
    %2005 = vmatpush2.xpose.msra.mxu0 0.0
    %2006 = vmatprep.subr.mxu0 0.0
    %2007 = vmatpush2.xpose.msra.mxu0 0.0
    %2008 = vmatprep.subr.mxu0 0.0
    %2009 = vmatpush2.xpose.msra.mxu0 0.0
    %2010 = vmatprep.subr.mxu0 0.0
    %2011 = vmatpush2.xpose.msra.mxu0 0.0
    %2012 = vmatprep.subr.mxu0 0.0
    %2013 = vmatpush2.xpose.msra.mxu0 0.0
    %2014 = vmatprep.subr.mxu0 0.0
    %2015 = vmatpush2.xpose.msra.mxu0 0.0
    %2016 = vmatprep.subr.mxu0 0.0
    %2017 = vmatpush2.xpose.msra.mxu0 0.0
    %2018 = vmatprep.mubr.f32.mxu0 0.0
    %2019 = vmatmul.mubr.f32.gmra.mxu0 %v1946
    %v2020 = vpop.f32.mrf.mxu0
    %v2021 = vadd.f32 0.0, %v2020
    %v2022 = vpop.f32.mrf.mxu0
    %2023 = vdwg.mxu0
    %vm2024 = vcmask 130048
    %v2025 = vsel %vm2024, %v1942, -inf
    %2026 = vmax.xlane.f32.xlu0 %v2025
    %v2027 = vpop.xlane.xlu0 %2026
    %v2028 = vsel %vm2024, %v2021, -inf
    %2029 = vmax.xlane.f32.xlu0 %v2028
    %v2030 = vpop.xlane.xlu0 %2029
    %v2031 = vsub.f32 %v1942, %v2027
    %v2032 = vsub.f32 %v2021, %v2030
    %v2033 = vmul.f32 %v2031, 1.442695
    %v2034 = vpow.pop %v2033
    %v2035 = vmul.f32 %v2032, 1.442695
    %v2036 = vpow.pop %v2035
    %v2037 = vsel %vm2024, %v2034, 0.0
    %2038 = vadd.xlane.f32.xlu0 %v2037
    %v2039 = vpop.xlane.xlu0 %2038
    %v2040 = vsel %vm2024, %v2036, 0.0
    %2041 = vadd.xlane.f32.xlu0 %v2040
    %v2042 = vpop.xlane.xlu0 %2041
    %v2043 = vrcp.pop %v2039
    %v2044 = vmul.f32 %v2034, %v2043
    %v2045 = vrcp.pop %v2042
    %v2046 = vmul.f32 %v2036, %v2045
    %v2047 = vmul.f32 %v1844, %v438
    %v2048 = vmul.f32 %v1847, %v438
    %v2049 = vmul.f32 %v1852, %v438
    %v2050 = vmul.f32 %v1855, %v438
    %v2051 = vmul.f32 %v1844, %v441
    %v2052 = vmul.f32 %v1847, %v441
    %v2053 = vmul.f32 %v1852, %v441
    %v2054 = vmul.f32 %v1855, %v441
    %v2056 = vsel %vm96, %v2047, 0
    %v2059 = vsel %vm96, %v2048, 0
    %2061 = vmatprep.subr.mxu0 0.0
    %2062 = vmatpush1.xpose.msra.mxu0 0.0
    %2063 = vmatprep.subr.mxu0 0.0
    %2064 = vmatpush1.xpose.msra.mxu0 0.0
    %2065 = vmatprep.subr.mxu0 0.0
    %2066 = vmatpush1.xpose.msra.mxu0 0.0
    %2067 = vmatprep.subr.mxu0 0.0
    %2068 = vmatpush1.xpose.msra.mxu0 0.0
    %2069 = vmatprep.subr.mxu0 0.0
    %2070 = vmatpush1.xpose.msra.mxu0 0.0
    %2071 = vmatprep.subr.mxu0 0.0
    %2072 = vmatpush1.xpose.msra.mxu0 0.0
    %2073 = vmatprep.subr.mxu0 0.0
    %2074 = vmatpush1.xpose.msra.mxu0 0.0
    %2075 = vmatprep.subr.mxu0 0.0
    %2076 = vmatpush1.xpose.msra.mxu0 0.0
    %2077 = vmatprep.subr.mxu0 0.0
    %2078 = vmatpush1.xpose.msra.mxu0 0.0
    %2079 = vmatprep.subr.mxu0 0.0
    %2080 = vmatpush1.xpose.msra.mxu0 0.0
    %2081 = vmatprep.subr.mxu0 0.0
    %2082 = vmatpush1.xpose.msra.mxu0 0.0
    %2083 = vmatprep.subr.mxu0 0.0
    %2084 = vmatpush1.xpose.msra.mxu0 0.0
    %2085 = vmatprep.subr.mxu0 0.0
    %2086 = vmatpush1.xpose.msra.mxu0 0.0
    %2087 = vmatprep.subr.mxu0 0.0
    %2088 = vmatpush1.xpose.msra.mxu0 0.0
    %2089 = vmatprep.subr.mxu0 0.0
    %2090 = vmatpush1.xpose.msra.mxu0 %v2059
    %2091 = vmatprep.subr.mxu0 0.0
    %2092 = vmatpush1.xpose.msra.mxu0 %v2056
    %2093 = vmatprep.subr.mxu0 0.0
    %2094 = vmatpush2.xpose.msra.mxu0 0.0
    %2095 = vmatprep.subr.mxu0 0.0
    %2096 = vmatpush2.xpose.msra.mxu0 0.0
    %2097 = vmatprep.subr.mxu0 0.0
    %2098 = vmatpush2.xpose.msra.mxu0 0.0
    %2099 = vmatprep.subr.mxu0 0.0
    %2100 = vmatpush2.xpose.msra.mxu0 0.0
    %2101 = vmatprep.subr.mxu0 0.0
    %2102 = vmatpush2.xpose.msra.mxu0 0.0
    %2103 = vmatprep.subr.mxu0 0.0
    %2104 = vmatpush2.xpose.msra.mxu0 0.0
    %2105 = vmatprep.subr.mxu0 0.0
    %2106 = vmatpush2.xpose.msra.mxu0 0.0
    %2107 = vmatprep.subr.mxu0 0.0
    %2108 = vmatpush2.xpose.msra.mxu0 0.0
    %2109 = vmatprep.subr.mxu0 0.0
    %2110 = vmatpush2.xpose.msra.mxu0 0.0
    %2111 = vmatprep.subr.mxu0 0.0
    %2112 = vmatpush2.xpose.msra.mxu0 0.0
    %2113 = vmatprep.subr.mxu0 0.0
    %2114 = vmatpush2.xpose.msra.mxu0 0.0
    %2115 = vmatprep.subr.mxu0 0.0
    %2116 = vmatpush2.xpose.msra.mxu0 0.0
    %2117 = vmatprep.subr.mxu0 0.0
    %2118 = vmatpush2.xpose.msra.mxu0 0.0
    %2119 = vmatprep.subr.mxu0 0.0
    %2120 = vmatpush2.xpose.msra.mxu0 0.0
    %2121 = vmatprep.subr.mxu0 0.0
    %2122 = vmatpush2.xpose.msra.mxu0 0.0
    %2123 = vmatprep.subr.mxu0 0.0
    %2124 = vmatpush2.xpose.msra.mxu0 0.0
    %2125 = vmatprep.mubr.f32.mxu0 0.0
    %2126 = vmatmul.mubr.f32.gmra.mxu0 %v1867
    %v2127 = vpop.f32.mrf.mxu0
    %v2128 = vadd.f32 0.0, %v2127
    %v2129 = vpop.f32.mrf.mxu0
    %2130 = vdwg.mxu0
    %v2132 = vsel %vm96, %v2049, 0
    %v2135 = vsel %vm96, %v2050, 0
    %2137 = vmatprep.subr.mxu0 0.0
    %2138 = vmatpush1.xpose.msra.mxu0 0.0
    %2139 = vmatprep.subr.mxu0 0.0
    %2140 = vmatpush1.xpose.msra.mxu0 0.0
    %2141 = vmatprep.subr.mxu0 0.0
    %2142 = vmatpush1.xpose.msra.mxu0 0.0
    %2143 = vmatprep.subr.mxu0 0.0
    %2144 = vmatpush1.xpose.msra.mxu0 0.0
    %2145 = vmatprep.subr.mxu0 0.0
    %2146 = vmatpush1.xpose.msra.mxu0 0.0
    %2147 = vmatprep.subr.mxu0 0.0
    %2148 = vmatpush1.xpose.msra.mxu0 0.0
    %2149 = vmatprep.subr.mxu0 0.0
    %2150 = vmatpush1.xpose.msra.mxu0 0.0
    %2151 = vmatprep.subr.mxu0 0.0
    %2152 = vmatpush1.xpose.msra.mxu0 0.0
    %2153 = vmatprep.subr.mxu0 0.0
    %2154 = vmatpush1.xpose.msra.mxu0 0.0
    %2155 = vmatprep.subr.mxu0 0.0
    %2156 = vmatpush1.xpose.msra.mxu0 0.0
    %2157 = vmatprep.subr.mxu0 0.0
    %2158 = vmatpush1.xpose.msra.mxu0 0.0
    %2159 = vmatprep.subr.mxu0 0.0
    %2160 = vmatpush1.xpose.msra.mxu0 0.0
    %2161 = vmatprep.subr.mxu0 0.0
    %2162 = vmatpush1.xpose.msra.mxu0 0.0
    %2163 = vmatprep.subr.mxu0 0.0
    %2164 = vmatpush1.xpose.msra.mxu0 0.0
    %2165 = vmatprep.subr.mxu0 0.0
    %2166 = vmatpush1.xpose.msra.mxu0 %v2135
    %2167 = vmatprep.subr.mxu0 0.0
    %2168 = vmatpush1.xpose.msra.mxu0 %v2132
    %2169 = vmatprep.subr.mxu0 0.0
    %2170 = vmatpush2.xpose.msra.mxu0 0.0
    %2171 = vmatprep.subr.mxu0 0.0
    %2172 = vmatpush2.xpose.msra.mxu0 0.0
    %2173 = vmatprep.subr.mxu0 0.0
    %2174 = vmatpush2.xpose.msra.mxu0 0.0
    %2175 = vmatprep.subr.mxu0 0.0
    %2176 = vmatpush2.xpose.msra.mxu0 0.0
    %2177 = vmatprep.subr.mxu0 0.0
    %2178 = vmatpush2.xpose.msra.mxu0 0.0
    %2179 = vmatprep.subr.mxu0 0.0
    %2180 = vmatpush2.xpose.msra.mxu0 0.0
    %2181 = vmatprep.subr.mxu0 0.0
    %2182 = vmatpush2.xpose.msra.mxu0 0.0
    %2183 = vmatprep.subr.mxu0 0.0
    %2184 = vmatpush2.xpose.msra.mxu0 0.0
    %2185 = vmatprep.subr.mxu0 0.0
    %2186 = vmatpush2.xpose.msra.mxu0 0.0
    %2187 = vmatprep.subr.mxu0 0.0
    %2188 = vmatpush2.xpose.msra.mxu0 0.0
    %2189 = vmatprep.subr.mxu0 0.0
    %2190 = vmatpush2.xpose.msra.mxu0 0.0
    %2191 = vmatprep.subr.mxu0 0.0
    %2192 = vmatpush2.xpose.msra.mxu0 0.0
    %2193 = vmatprep.subr.mxu0 0.0
    %2194 = vmatpush2.xpose.msra.mxu0 0.0
    %2195 = vmatprep.subr.mxu0 0.0
    %2196 = vmatpush2.xpose.msra.mxu0 0.0
    %2197 = vmatprep.subr.mxu0 0.0
    %2198 = vmatpush2.xpose.msra.mxu0 0.0
    %2199 = vmatprep.subr.mxu0 0.0
    %2200 = vmatpush2.xpose.msra.mxu0 0.0
    %2201 = vmatprep.mubr.f32.mxu0 0.0
    %2202 = vmatmul.mubr.f32.gmra.mxu0 %v1946
    %v2203 = vpop.f32.mrf.mxu0
    %v2204 = vadd.f32 0.0, %v2203
    %v2205 = vpop.f32.mrf.mxu0
    %2206 = vdwg.mxu0
    %v2207 = vsel %vm2024, %v2128, -inf
    %2208 = vmax.xlane.f32.xlu0 %v2207
    %v2209 = vpop.xlane.xlu0 %2208
    %v2210 = vsel %vm2024, %v2204, -inf
    %2211 = vmax.xlane.f32.xlu0 %v2210
    %v2212 = vpop.xlane.xlu0 %2211
    %v2213 = vsub.f32 %v2128, %v2209
    %v2214 = vsub.f32 %v2204, %v2212
    %v2215 = vmul.f32 %v2213, 1.442695
    %v2216 = vpow.pop %v2215
    %v2217 = vmul.f32 %v2214, 1.442695
    %v2218 = vpow.pop %v2217
    %v2219 = vsel %vm2024, %v2216, 0.0
    %2220 = vadd.xlane.f32.xlu0 %v2219
    %v2221 = vpop.xlane.xlu0 %2220
    %v2222 = vsel %vm2024, %v2218, 0.0
    %2223 = vadd.xlane.f32.xlu0 %v2222
    %v2224 = vpop.xlane.xlu0 %2223
    %v2225 = vrcp.pop %v2221
    %v2226 = vmul.f32 %v2216, %v2225
    %v2227 = vrcp.pop %v2224
    %v2228 = vmul.f32 %v2218, %v2227
    %2231 = vrot.lane.b32.xlu0 %v2051, 96
    %v2232 = vpop.permute.xlu0 %2231
    %2233 = vrot.lane.b32.xlu0 %v2052, 96
    %v2234 = vpop.permute.xlu0 %2233
    %v2238 = vsel %vm2024, %v2226, 0
    %2240 = vmatprep.subr.mxu0 0.0
    %2241 = vmatpush1.msra.mxu0 0.0
    %2242 = vmatprep.subr.mxu0 0.0
    %2243 = vmatpush1.msra.mxu0 0.0
    %2244 = vmatprep.subr.mxu0 0.0
    %2245 = vmatpush1.msra.mxu0 0.0
    %2246 = vmatprep.subr.mxu0 0.0
    %2247 = vmatpush1.msra.mxu0 0.0
    %2248 = vmatprep.subr.mxu0 0.0
    %2249 = vmatpush1.msra.mxu0 0.0
    %2250 = vmatprep.subr.mxu0 0.0
    %2251 = vmatpush1.msra.mxu0 0.0
    %2252 = vmatprep.subr.mxu0 0.0
    %2253 = vmatpush1.msra.mxu0 0.0
    %2254 = vmatprep.subr.mxu0 0.0
    %2255 = vmatpush1.msra.mxu0 0.0
    %2256 = vmatprep.subr.mxu0 0.0
    %2257 = vmatpush1.msra.mxu0 0.0
    %2258 = vmatprep.subr.mxu0 0.0
    %2259 = vmatpush1.msra.mxu0 0.0
    %2260 = vmatprep.subr.mxu0 0.0
    %2261 = vmatpush1.msra.mxu0 0.0
    %2262 = vmatprep.subr.mxu0 0.0
    %2263 = vmatpush1.msra.mxu0 0.0
    %2264 = vmatprep.subr.mxu0 0.0
    %2265 = vmatpush1.msra.mxu0 0.0
    %2266 = vmatprep.subr.mxu0 0.0
    %2267 = vmatpush1.msra.mxu0 0.0
    %2268 = vmatprep.subr.mxu0 0.0
    %2269 = vmatpush1.msra.mxu0 %v2234
    %2270 = vmatprep.subr.mxu0 0.0
    %2271 = vmatpush1.msra.mxu0 %v2232
    %2272 = vmatprep.subr.mxu0 0.0
    %2273 = vmatpush2.msra.mxu0 0.0
    %2274 = vmatprep.subr.mxu0 0.0
    %2275 = vmatpush2.msra.mxu0 0.0
    %2276 = vmatprep.subr.mxu0 0.0
    %2277 = vmatpush2.msra.mxu0 0.0
    %2278 = vmatprep.subr.mxu0 0.0
    %2279 = vmatpush2.msra.mxu0 0.0
    %2280 = vmatprep.subr.mxu0 0.0
    %2281 = vmatpush2.msra.mxu0 0.0
    %2282 = vmatprep.subr.mxu0 0.0
    %2283 = vmatpush2.msra.mxu0 0.0
    %2284 = vmatprep.subr.mxu0 0.0
    %2285 = vmatpush2.msra.mxu0 0.0
    %2286 = vmatprep.subr.mxu0 0.0
    %2287 = vmatpush2.msra.mxu0 0.0
    %2288 = vmatprep.subr.mxu0 0.0
    %2289 = vmatpush2.msra.mxu0 0.0
    %2290 = vmatprep.subr.mxu0 0.0
    %2291 = vmatpush2.msra.mxu0 0.0
    %2292 = vmatprep.subr.mxu0 0.0
    %2293 = vmatpush2.msra.mxu0 0.0
    %2294 = vmatprep.subr.mxu0 0.0
    %2295 = vmatpush2.msra.mxu0 0.0
    %2296 = vmatprep.subr.mxu0 0.0
    %2297 = vmatpush2.msra.mxu0 0.0
    %2298 = vmatprep.subr.mxu0 0.0
    %2299 = vmatpush2.msra.mxu0 0.0
    %2300 = vmatprep.subr.mxu0 0.0
    %2301 = vmatpush2.msra.mxu0 0.0
    %2302 = vmatprep.subr.mxu0 0.0
    %2303 = vmatpush2.msra.mxu0 0.0
    %2304 = vmatprep.mubr.f32.mxu0 0.0
    %2305 = vmatmul.mubr.f32.gmra.mxu0 %v2238
    %v2306 = vpop.f32.mrf.mxu0
    %v2307 = vadd.f32 0.0, %v2306
    %v2308 = vpop.f32.mrf.mxu0
    %2309 = vdwg.mxu0
    %2312 = vrot.lane.b32.xlu0 %v2053, 96
    %v2313 = vpop.permute.xlu0 %2312
    %2314 = vrot.lane.b32.xlu0 %v2054, 96
    %v2315 = vpop.permute.xlu0 %2314
    %v2319 = vsel %vm2024, %v2228, 0
    %2321 = vmatprep.subr.mxu0 0.0
    %2322 = vmatpush1.msra.mxu0 0.0
    %2323 = vmatprep.subr.mxu0 0.0
    %2324 = vmatpush1.msra.mxu0 0.0
    %2325 = vmatprep.subr.mxu0 0.0
    %2326 = vmatpush1.msra.mxu0 0.0
    %2327 = vmatprep.subr.mxu0 0.0
    %2328 = vmatpush1.msra.mxu0 0.0
    %2329 = vmatprep.subr.mxu0 0.0
    %2330 = vmatpush1.msra.mxu0 0.0
    %2331 = vmatprep.subr.mxu0 0.0
    %2332 = vmatpush1.msra.mxu0 0.0
    %2333 = vmatprep.subr.mxu0 0.0
    %2334 = vmatpush1.msra.mxu0 0.0
    %2335 = vmatprep.subr.mxu0 0.0
    %2336 = vmatpush1.msra.mxu0 0.0
    %2337 = vmatprep.subr.mxu0 0.0
    %2338 = vmatpush1.msra.mxu0 0.0
    %2339 = vmatprep.subr.mxu0 0.0
    %2340 = vmatpush1.msra.mxu0 0.0
    %2341 = vmatprep.subr.mxu0 0.0
    %2342 = vmatpush1.msra.mxu0 0.0
    %2343 = vmatprep.subr.mxu0 0.0
    %2344 = vmatpush1.msra.mxu0 0.0
    %2345 = vmatprep.subr.mxu0 0.0
    %2346 = vmatpush1.msra.mxu0 0.0
    %2347 = vmatprep.subr.mxu0 0.0
    %2348 = vmatpush1.msra.mxu0 0.0
    %2349 = vmatprep.subr.mxu0 0.0
    %2350 = vmatpush1.msra.mxu0 %v2315
    %2351 = vmatprep.subr.mxu0 0.0
    %2352 = vmatpush1.msra.mxu0 %v2313
    %2353 = vmatprep.subr.mxu0 0.0
    %2354 = vmatpush2.msra.mxu0 0.0
    %2355 = vmatprep.subr.mxu0 0.0
    %2356 = vmatpush2.msra.mxu0 0.0
    %2357 = vmatprep.subr.mxu0 0.0
    %2358 = vmatpush2.msra.mxu0 0.0
    %2359 = vmatprep.subr.mxu0 0.0
    %2360 = vmatpush2.msra.mxu0 0.0
    %2361 = vmatprep.subr.mxu0 0.0
    %2362 = vmatpush2.msra.mxu0 0.0
    %2363 = vmatprep.subr.mxu0 0.0
    %2364 = vmatpush2.msra.mxu0 0.0
    %2365 = vmatprep.subr.mxu0 0.0
    %2366 = vmatpush2.msra.mxu0 0.0
    %2367 = vmatprep.subr.mxu0 0.0
    %2368 = vmatpush2.msra.mxu0 0.0
    %2369 = vmatprep.subr.mxu0 0.0
    %2370 = vmatpush2.msra.mxu0 0.0
    %2371 = vmatprep.subr.mxu0 0.0
    %2372 = vmatpush2.msra.mxu0 0.0
    %2373 = vmatprep.subr.mxu0 0.0
    %2374 = vmatpush2.msra.mxu0 0.0
    %2375 = vmatprep.subr.mxu0 0.0
    %2376 = vmatpush2.msra.mxu0 0.0
    %2377 = vmatprep.subr.mxu0 0.0
    %2378 = vmatpush2.msra.mxu0 0.0
    %2379 = vmatprep.subr.mxu0 0.0
    %2380 = vmatpush2.msra.mxu0 0.0
    %2381 = vmatprep.subr.mxu0 0.0
    %2382 = vmatpush2.msra.mxu0 0.0
    %2383 = vmatprep.subr.mxu0 0.0
    %2384 = vmatpush2.msra.mxu0 0.0
    %2385 = vmatprep.mubr.f32.mxu0 0.0
    %2386 = vmatmul.mubr.f32.gmra.mxu0 %v2319
    %v2387 = vpop.f32.mrf.mxu0
    %v2388 = vadd.f32 0.0, %v2387
    %v2389 = vpop.f32.mrf.mxu0
    %2390 = vdwg.mxu0
    %2393 = vrot.lane.b32.xlu0 %v1862, 96
    %v2394 = vpop.permute.xlu0 %2393
    %2395 = vrot.lane.b32.xlu0 %v1863, 96
    %v2396 = vpop.permute.xlu0 %2395
    %v2400 = vsel %vm2024, %v2044, 0
    %2402 = vmatprep.subr.mxu0 0.0
    %2403 = vmatpush1.msra.mxu0 0.0
    %2404 = vmatprep.subr.mxu0 0.0
    %2405 = vmatpush1.msra.mxu0 0.0
    %2406 = vmatprep.subr.mxu0 0.0
    %2407 = vmatpush1.msra.mxu0 0.0
    %2408 = vmatprep.subr.mxu0 0.0
    %2409 = vmatpush1.msra.mxu0 0.0
    %2410 = vmatprep.subr.mxu0 0.0
    %2411 = vmatpush1.msra.mxu0 0.0
    %2412 = vmatprep.subr.mxu0 0.0
    %2413 = vmatpush1.msra.mxu0 0.0
    %2414 = vmatprep.subr.mxu0 0.0
    %2415 = vmatpush1.msra.mxu0 0.0
    %2416 = vmatprep.subr.mxu0 0.0
    %2417 = vmatpush1.msra.mxu0 0.0
    %2418 = vmatprep.subr.mxu0 0.0
    %2419 = vmatpush1.msra.mxu0 0.0
    %2420 = vmatprep.subr.mxu0 0.0
    %2421 = vmatpush1.msra.mxu0 0.0
    %2422 = vmatprep.subr.mxu0 0.0
    %2423 = vmatpush1.msra.mxu0 0.0
    %2424 = vmatprep.subr.mxu0 0.0
    %2425 = vmatpush1.msra.mxu0 0.0
    %2426 = vmatprep.subr.mxu0 0.0
    %2427 = vmatpush1.msra.mxu0 0.0
    %2428 = vmatprep.subr.mxu0 0.0
    %2429 = vmatpush1.msra.mxu0 0.0
    %2430 = vmatprep.subr.mxu0 0.0
    %2431 = vmatpush1.msra.mxu0 %v2396
    %2432 = vmatprep.subr.mxu0 0.0
    %2433 = vmatpush1.msra.mxu0 %v2394
    %2434 = vmatprep.subr.mxu0 0.0
    %2435 = vmatpush2.msra.mxu0 0.0
    %2436 = vmatprep.subr.mxu0 0.0
    %2437 = vmatpush2.msra.mxu0 0.0
    %2438 = vmatprep.subr.mxu0 0.0
    %2439 = vmatpush2.msra.mxu0 0.0
    %2440 = vmatprep.subr.mxu0 0.0
    %2441 = vmatpush2.msra.mxu0 0.0
    %2442 = vmatprep.subr.mxu0 0.0
    %2443 = vmatpush2.msra.mxu0 0.0
    %2444 = vmatprep.subr.mxu0 0.0
    %2445 = vmatpush2.msra.mxu0 0.0
    %2446 = vmatprep.subr.mxu0 0.0
    %2447 = vmatpush2.msra.mxu0 0.0
    %2448 = vmatprep.subr.mxu0 0.0
    %2449 = vmatpush2.msra.mxu0 0.0
    %2450 = vmatprep.subr.mxu0 0.0
    %2451 = vmatpush2.msra.mxu0 0.0
    %2452 = vmatprep.subr.mxu0 0.0
    %2453 = vmatpush2.msra.mxu0 0.0
    %2454 = vmatprep.subr.mxu0 0.0
    %2455 = vmatpush2.msra.mxu0 0.0
    %2456 = vmatprep.subr.mxu0 0.0
    %2457 = vmatpush2.msra.mxu0 0.0
    %2458 = vmatprep.subr.mxu0 0.0
    %2459 = vmatpush2.msra.mxu0 0.0
    %2460 = vmatprep.subr.mxu0 0.0
    %2461 = vmatpush2.msra.mxu0 0.0
    %2462 = vmatprep.subr.mxu0 0.0
    %2463 = vmatpush2.msra.mxu0 0.0
    %2464 = vmatprep.subr.mxu0 0.0
    %2465 = vmatpush2.msra.mxu0 0.0
    %2466 = vmatprep.mubr.f32.mxu0 0.0
    %2467 = vmatmul.mubr.f32.gmra.mxu0 %v2400
    %v2468 = vpop.f32.mrf.mxu0
    %v2469 = vadd.f32 %v2307, %v2468
    %v2470 = vpop.f32.mrf.mxu0
    %2471 = vdwg.mxu0
    %2474 = vrot.lane.b32.xlu0 %v1864, 96
    %v2475 = vpop.permute.xlu0 %2474
    %2476 = vrot.lane.b32.xlu0 %v1865, 96
    %v2477 = vpop.permute.xlu0 %2476
    %v2481 = vsel %vm2024, %v2046, 0
    %2483 = vmatprep.subr.mxu0 0.0
    %2484 = vmatpush1.msra.mxu0 0.0
    %2485 = vmatprep.subr.mxu0 0.0
    %2486 = vmatpush1.msra.mxu0 0.0
    %2487 = vmatprep.subr.mxu0 0.0
    %2488 = vmatpush1.msra.mxu0 0.0
    %2489 = vmatprep.subr.mxu0 0.0
    %2490 = vmatpush1.msra.mxu0 0.0
    %2491 = vmatprep.subr.mxu0 0.0
    %2492 = vmatpush1.msra.mxu0 0.0
    %2493 = vmatprep.subr.mxu0 0.0
    %2494 = vmatpush1.msra.mxu0 0.0
    %2495 = vmatprep.subr.mxu0 0.0
    %2496 = vmatpush1.msra.mxu0 0.0
    %2497 = vmatprep.subr.mxu0 0.0
    %2498 = vmatpush1.msra.mxu0 0.0
    %2499 = vmatprep.subr.mxu0 0.0
    %2500 = vmatpush1.msra.mxu0 0.0
    %2501 = vmatprep.subr.mxu0 0.0
    %2502 = vmatpush1.msra.mxu0 0.0
    %2503 = vmatprep.subr.mxu0 0.0
    %2504 = vmatpush1.msra.mxu0 0.0
    %2505 = vmatprep.subr.mxu0 0.0
    %2506 = vmatpush1.msra.mxu0 0.0
    %2507 = vmatprep.subr.mxu0 0.0
    %2508 = vmatpush1.msra.mxu0 0.0
    %2509 = vmatprep.subr.mxu0 0.0
    %2510 = vmatpush1.msra.mxu0 0.0
    %2511 = vmatprep.subr.mxu0 0.0
    %2512 = vmatpush1.msra.mxu0 %v2477
    %2513 = vmatprep.subr.mxu0 0.0
    %2514 = vmatpush1.msra.mxu0 %v2475
    %2515 = vmatprep.subr.mxu0 0.0
    %2516 = vmatpush2.msra.mxu0 0.0
    %2517 = vmatprep.subr.mxu0 0.0
    %2518 = vmatpush2.msra.mxu0 0.0
    %2519 = vmatprep.subr.mxu0 0.0
    %2520 = vmatpush2.msra.mxu0 0.0
    %2521 = vmatprep.subr.mxu0 0.0
    %2522 = vmatpush2.msra.mxu0 0.0
    %2523 = vmatprep.subr.mxu0 0.0
    %2524 = vmatpush2.msra.mxu0 0.0
    %2525 = vmatprep.subr.mxu0 0.0
    %2526 = vmatpush2.msra.mxu0 0.0
    %2527 = vmatprep.subr.mxu0 0.0
    %2528 = vmatpush2.msra.mxu0 0.0
    %2529 = vmatprep.subr.mxu0 0.0
    %2530 = vmatpush2.msra.mxu0 0.0
    %2531 = vmatprep.subr.mxu0 0.0
    %2532 = vmatpush2.msra.mxu0 0.0
    %2533 = vmatprep.subr.mxu0 0.0
    %2534 = vmatpush2.msra.mxu0 0.0
    %2535 = vmatprep.subr.mxu0 0.0
    %2536 = vmatpush2.msra.mxu0 0.0
    %2537 = vmatprep.subr.mxu0 0.0
    %2538 = vmatpush2.msra.mxu0 0.0
    %2539 = vmatprep.subr.mxu0 0.0
    %2540 = vmatpush2.msra.mxu0 0.0
    %2541 = vmatprep.subr.mxu0 0.0
    %2542 = vmatpush2.msra.mxu0 0.0
    %2543 = vmatprep.subr.mxu0 0.0
    %2544 = vmatpush2.msra.mxu0 0.0
    %2545 = vmatprep.subr.mxu0 0.0
    %2546 = vmatpush2.msra.mxu0 0.0
    %2547 = vmatprep.mubr.f32.mxu0 0.0
    %2548 = vmatmul.mubr.f32.gmra.mxu0 %v2481
    %v2549 = vpop.f32.mrf.mxu0
    %v2550 = vadd.f32 %v2388, %v2549
    %v2551 = vpop.f32.mrf.mxu0
    %2552 = vdwg.mxu0
    %v2553 = vmul.f32 %v1844, %v934
    %v2554 = vmul.f32 %v1847, %v934
    %v2555 = vmul.f32 %v1852, %v934
    %v2556 = vmul.f32 %v1855, %v934
    %v2557 = vmul.f32 %v1844, %v937
    %v2558 = vmul.f32 %v1847, %v937
    %v2559 = vmul.f32 %v1852, %v937
    %v2560 = vmul.f32 %v1855, %v937
    %v2562 = vsel %vm96, %v2553, 0
    %v2565 = vsel %vm96, %v2554, 0
    %2567 = vmatprep.subr.mxu0 0.0
    %2568 = vmatpush1.xpose.msra.mxu0 0.0
    %2569 = vmatprep.subr.mxu0 0.0
    %2570 = vmatpush1.xpose.msra.mxu0 0.0
    %2571 = vmatprep.subr.mxu0 0.0
    %2572 = vmatpush1.xpose.msra.mxu0 0.0
    %2573 = vmatprep.subr.mxu0 0.0
    %2574 = vmatpush1.xpose.msra.mxu0 0.0
    %2575 = vmatprep.subr.mxu0 0.0
    %2576 = vmatpush1.xpose.msra.mxu0 0.0
    %2577 = vmatprep.subr.mxu0 0.0
    %2578 = vmatpush1.xpose.msra.mxu0 0.0
    %2579 = vmatprep.subr.mxu0 0.0
    %2580 = vmatpush1.xpose.msra.mxu0 0.0
    %2581 = vmatprep.subr.mxu0 0.0
    %2582 = vmatpush1.xpose.msra.mxu0 0.0
    %2583 = vmatprep.subr.mxu0 0.0
    %2584 = vmatpush1.xpose.msra.mxu0 0.0
    %2585 = vmatprep.subr.mxu0 0.0
    %2586 = vmatpush1.xpose.msra.mxu0 0.0
    %2587 = vmatprep.subr.mxu0 0.0
    %2588 = vmatpush1.xpose.msra.mxu0 0.0
    %2589 = vmatprep.subr.mxu0 0.0
    %2590 = vmatpush1.xpose.msra.mxu0 0.0
    %2591 = vmatprep.subr.mxu0 0.0
    %2592 = vmatpush1.xpose.msra.mxu0 0.0
    %2593 = vmatprep.subr.mxu0 0.0
    %2594 = vmatpush1.xpose.msra.mxu0 0.0
    %2595 = vmatprep.subr.mxu0 0.0
    %2596 = vmatpush1.xpose.msra.mxu0 %v2565
    %2597 = vmatprep.subr.mxu0 0.0
    %2598 = vmatpush1.xpose.msra.mxu0 %v2562
    %2599 = vmatprep.subr.mxu0 0.0
    %2600 = vmatpush2.xpose.msra.mxu0 0.0
    %2601 = vmatprep.subr.mxu0 0.0
    %2602 = vmatpush2.xpose.msra.mxu0 0.0
    %2603 = vmatprep.subr.mxu0 0.0
    %2604 = vmatpush2.xpose.msra.mxu0 0.0
    %2605 = vmatprep.subr.mxu0 0.0
    %2606 = vmatpush2.xpose.msra.mxu0 0.0
    %2607 = vmatprep.subr.mxu0 0.0
    %2608 = vmatpush2.xpose.msra.mxu0 0.0
    %2609 = vmatprep.subr.mxu0 0.0
    %2610 = vmatpush2.xpose.msra.mxu0 0.0
    %2611 = vmatprep.subr.mxu0 0.0
    %2612 = vmatpush2.xpose.msra.mxu0 0.0
    %2613 = vmatprep.subr.mxu0 0.0
    %2614 = vmatpush2.xpose.msra.mxu0 0.0
    %2615 = vmatprep.subr.mxu0 0.0
    %2616 = vmatpush2.xpose.msra.mxu0 0.0
    %2617 = vmatprep.subr.mxu0 0.0
    %2618 = vmatpush2.xpose.msra.mxu0 0.0
    %2619 = vmatprep.subr.mxu0 0.0
    %2620 = vmatpush2.xpose.msra.mxu0 0.0
    %2621 = vmatprep.subr.mxu0 0.0
    %2622 = vmatpush2.xpose.msra.mxu0 0.0
    %2623 = vmatprep.subr.mxu0 0.0
    %2624 = vmatpush2.xpose.msra.mxu0 0.0
    %2625 = vmatprep.subr.mxu0 0.0
    %2626 = vmatpush2.xpose.msra.mxu0 0.0
    %2627 = vmatprep.subr.mxu0 0.0
    %2628 = vmatpush2.xpose.msra.mxu0 0.0
    %2629 = vmatprep.subr.mxu0 0.0
    %2630 = vmatpush2.xpose.msra.mxu0 0.0
    %2631 = vmatprep.mubr.f32.mxu0 0.0
    %2632 = vmatmul.mubr.f32.gmra.mxu0 %v1867
    %v2633 = vpop.f32.mrf.mxu0
    %v2634 = vadd.f32 0.0, %v2633
    %v2635 = vpop.f32.mrf.mxu0
    %2636 = vdwg.mxu0
    %v2638 = vsel %vm96, %v2555, 0
    %v2641 = vsel %vm96, %v2556, 0
    %2643 = vmatprep.subr.mxu0 0.0
    %2644 = vmatpush1.xpose.msra.mxu0 0.0
    %2645 = vmatprep.subr.mxu0 0.0
    %2646 = vmatpush1.xpose.msra.mxu0 0.0
    %2647 = vmatprep.subr.mxu0 0.0
    %2648 = vmatpush1.xpose.msra.mxu0 0.0
    %2649 = vmatprep.subr.mxu0 0.0
    %2650 = vmatpush1.xpose.msra.mxu0 0.0
    %2651 = vmatprep.subr.mxu0 0.0
    %2652 = vmatpush1.xpose.msra.mxu0 0.0
    %2653 = vmatprep.subr.mxu0 0.0
    %2654 = vmatpush1.xpose.msra.mxu0 0.0
    %2655 = vmatprep.subr.mxu0 0.0
    %2656 = vmatpush1.xpose.msra.mxu0 0.0
    %2657 = vmatprep.subr.mxu0 0.0
    %2658 = vmatpush1.xpose.msra.mxu0 0.0
    %2659 = vmatprep.subr.mxu0 0.0
    %2660 = vmatpush1.xpose.msra.mxu0 0.0
    %2661 = vmatprep.subr.mxu0 0.0
    %2662 = vmatpush1.xpose.msra.mxu0 0.0
    %2663 = vmatprep.subr.mxu0 0.0
    %2664 = vmatpush1.xpose.msra.mxu0 0.0
    %2665 = vmatprep.subr.mxu0 0.0
    %2666 = vmatpush1.xpose.msra.mxu0 0.0
    %2667 = vmatprep.subr.mxu0 0.0
    %2668 = vmatpush1.xpose.msra.mxu0 0.0
    %2669 = vmatprep.subr.mxu0 0.0
    %2670 = vmatpush1.xpose.msra.mxu0 0.0
    %2671 = vmatprep.subr.mxu0 0.0
    %2672 = vmatpush1.xpose.msra.mxu0 %v2641
    %2673 = vmatprep.subr.mxu0 0.0
    %2674 = vmatpush1.xpose.msra.mxu0 %v2638
    %2675 = vmatprep.subr.mxu0 0.0
    %2676 = vmatpush2.xpose.msra.mxu0 0.0
    %2677 = vmatprep.subr.mxu0 0.0
    %2678 = vmatpush2.xpose.msra.mxu0 0.0
    %2679 = vmatprep.subr.mxu0 0.0
    %2680 = vmatpush2.xpose.msra.mxu0 0.0
    %2681 = vmatprep.subr.mxu0 0.0
    %2682 = vmatpush2.xpose.msra.mxu0 0.0
    %2683 = vmatprep.subr.mxu0 0.0
    %2684 = vmatpush2.xpose.msra.mxu0 0.0
    %2685 = vmatprep.subr.mxu0 0.0
    %2686 = vmatpush2.xpose.msra.mxu0 0.0
    %2687 = vmatprep.subr.mxu0 0.0
    %2688 = vmatpush2.xpose.msra.mxu0 0.0
    %2689 = vmatprep.subr.mxu0 0.0
    %2690 = vmatpush2.xpose.msra.mxu0 0.0
    %2691 = vmatprep.subr.mxu0 0.0
    %2692 = vmatpush2.xpose.msra.mxu0 0.0
    %2693 = vmatprep.subr.mxu0 0.0
    %2694 = vmatpush2.xpose.msra.mxu0 0.0
    %2695 = vmatprep.subr.mxu0 0.0
    %2696 = vmatpush2.xpose.msra.mxu0 0.0
    %2697 = vmatprep.subr.mxu0 0.0
    %2698 = vmatpush2.xpose.msra.mxu0 0.0
    %2699 = vmatprep.subr.mxu0 0.0
    %2700 = vmatpush2.xpose.msra.mxu0 0.0
    %2701 = vmatprep.subr.mxu0 0.0
    %2702 = vmatpush2.xpose.msra.mxu0 0.0
    %2703 = vmatprep.subr.mxu0 0.0
    %2704 = vmatpush2.xpose.msra.mxu0 0.0
    %2705 = vmatprep.subr.mxu0 0.0
    %2706 = vmatpush2.xpose.msra.mxu0 0.0
    %2707 = vmatprep.mubr.f32.mxu0 0.0
    %2708 = vmatmul.mubr.f32.gmra.mxu0 %v1946
    %v2709 = vpop.f32.mrf.mxu0
    %v2710 = vadd.f32 0.0, %v2709
    %v2711 = vpop.f32.mrf.mxu0
    %2712 = vdwg.mxu0
    %v2713 = vsel %vm2024, %v2634, -inf
    %2714 = vmax.xlane.f32.xlu0 %v2713
    %v2715 = vpop.xlane.xlu0 %2714
    %v2716 = vsel %vm2024, %v2710, -inf
    %2717 = vmax.xlane.f32.xlu0 %v2716
    %v2718 = vpop.xlane.xlu0 %2717
    %v2719 = vsub.f32 %v2634, %v2715
    %v2720 = vsub.f32 %v2710, %v2718
    %v2721 = vmul.f32 %v2719, 1.442695
    %v2722 = vpow.pop %v2721
    %v2723 = vmul.f32 %v2720, 1.442695
    %v2724 = vpow.pop %v2723
    %v2725 = vsel %vm2024, %v2722, 0.0
    %2726 = vadd.xlane.f32.xlu0 %v2725
    %v2727 = vpop.xlane.xlu0 %2726
    %v2728 = vsel %vm2024, %v2724, 0.0
    %2729 = vadd.xlane.f32.xlu0 %v2728
    %v2730 = vpop.xlane.xlu0 %2729
    %v2731 = vrcp.pop %v2727
    %v2732 = vmul.f32 %v2722, %v2731
    %v2733 = vrcp.pop %v2730
    %v2734 = vmul.f32 %v2724, %v2733
    %2737 = vrot.lane.b32.xlu0 %v2557, 96
    %v2738 = vpop.permute.xlu0 %2737
    %2739 = vrot.lane.b32.xlu0 %v2558, 96
    %v2740 = vpop.permute.xlu0 %2739
    %v2744 = vsel %vm2024, %v2732, 0
    %2746 = vmatprep.subr.mxu0 0.0
    %2747 = vmatpush1.msra.mxu0 0.0
    %2748 = vmatprep.subr.mxu0 0.0
    %2749 = vmatpush1.msra.mxu0 0.0
    %2750 = vmatprep.subr.mxu0 0.0
    %2751 = vmatpush1.msra.mxu0 0.0
    %2752 = vmatprep.subr.mxu0 0.0
    %2753 = vmatpush1.msra.mxu0 0.0
    %2754 = vmatprep.subr.mxu0 0.0
    %2755 = vmatpush1.msra.mxu0 0.0
    %2756 = vmatprep.subr.mxu0 0.0
    %2757 = vmatpush1.msra.mxu0 0.0
    %2758 = vmatprep.subr.mxu0 0.0
    %2759 = vmatpush1.msra.mxu0 0.0
    %2760 = vmatprep.subr.mxu0 0.0
    %2761 = vmatpush1.msra.mxu0 0.0
    %2762 = vmatprep.subr.mxu0 0.0
    %2763 = vmatpush1.msra.mxu0 0.0
    %2764 = vmatprep.subr.mxu0 0.0
    %2765 = vmatpush1.msra.mxu0 0.0
    %2766 = vmatprep.subr.mxu0 0.0
    %2767 = vmatpush1.msra.mxu0 0.0
    %2768 = vmatprep.subr.mxu0 0.0
    %2769 = vmatpush1.msra.mxu0 0.0
    %2770 = vmatprep.subr.mxu0 0.0
    %2771 = vmatpush1.msra.mxu0 0.0
    %2772 = vmatprep.subr.mxu0 0.0
    %2773 = vmatpush1.msra.mxu0 0.0
    %2774 = vmatprep.subr.mxu0 0.0
    %2775 = vmatpush1.msra.mxu0 %v2740
    %2776 = vmatprep.subr.mxu0 0.0
    %2777 = vmatpush1.msra.mxu0 %v2738
    %2778 = vmatprep.subr.mxu0 0.0
    %2779 = vmatpush2.msra.mxu0 0.0
    %2780 = vmatprep.subr.mxu0 0.0
    %2781 = vmatpush2.msra.mxu0 0.0
    %2782 = vmatprep.subr.mxu0 0.0
    %2783 = vmatpush2.msra.mxu0 0.0
    %2784 = vmatprep.subr.mxu0 0.0
    %2785 = vmatpush2.msra.mxu0 0.0
    %2786 = vmatprep.subr.mxu0 0.0
    %2787 = vmatpush2.msra.mxu0 0.0
    %2788 = vmatprep.subr.mxu0 0.0
    %2789 = vmatpush2.msra.mxu0 0.0
    %2790 = vmatprep.subr.mxu0 0.0
    %2791 = vmatpush2.msra.mxu0 0.0
    %2792 = vmatprep.subr.mxu0 0.0
    %2793 = vmatpush2.msra.mxu0 0.0
    %2794 = vmatprep.subr.mxu0 0.0
    %2795 = vmatpush2.msra.mxu0 0.0
    %2796 = vmatprep.subr.mxu0 0.0
    %2797 = vmatpush2.msra.mxu0 0.0
    %2798 = vmatprep.subr.mxu0 0.0
    %2799 = vmatpush2.msra.mxu0 0.0
    %2800 = vmatprep.subr.mxu0 0.0
    %2801 = vmatpush2.msra.mxu0 0.0
    %2802 = vmatprep.subr.mxu0 0.0
    %2803 = vmatpush2.msra.mxu0 0.0
    %2804 = vmatprep.subr.mxu0 0.0
    %2805 = vmatpush2.msra.mxu0 0.0
    %2806 = vmatprep.subr.mxu0 0.0
    %2807 = vmatpush2.msra.mxu0 0.0
    %2808 = vmatprep.subr.mxu0 0.0
    %2809 = vmatpush2.msra.mxu0 0.0
    %2810 = vmatprep.mubr.f32.mxu0 0.0
    %2811 = vmatmul.mubr.f32.gmra.mxu0 %v2744
    %v2812 = vpop.f32.mrf.mxu0
    %v2813 = vadd.f32 0.0, %v2812
    %v2814 = vpop.f32.mrf.mxu0
    %2815 = vdwg.mxu0
    %2818 = vrot.lane.b32.xlu0 %v2559, 96
    %v2819 = vpop.permute.xlu0 %2818
    %2820 = vrot.lane.b32.xlu0 %v2560, 96
    %v2821 = vpop.permute.xlu0 %2820
    %v2825 = vsel %vm2024, %v2734, 0
    %2827 = vmatprep.subr.mxu0 0.0
    %2828 = vmatpush1.msra.mxu0 0.0
    %2829 = vmatprep.subr.mxu0 0.0
    %2830 = vmatpush1.msra.mxu0 0.0
    %2831 = vmatprep.subr.mxu0 0.0
    %2832 = vmatpush1.msra.mxu0 0.0
    %2833 = vmatprep.subr.mxu0 0.0
    %2834 = vmatpush1.msra.mxu0 0.0
    %2835 = vmatprep.subr.mxu0 0.0
    %2836 = vmatpush1.msra.mxu0 0.0
    %2837 = vmatprep.subr.mxu0 0.0
    %2838 = vmatpush1.msra.mxu0 0.0
    %2839 = vmatprep.subr.mxu0 0.0
    %2840 = vmatpush1.msra.mxu0 0.0
    %2841 = vmatprep.subr.mxu0 0.0
    %2842 = vmatpush1.msra.mxu0 0.0
    %2843 = vmatprep.subr.mxu0 0.0
    %2844 = vmatpush1.msra.mxu0 0.0
    %2845 = vmatprep.subr.mxu0 0.0
    %2846 = vmatpush1.msra.mxu0 0.0
    %2847 = vmatprep.subr.mxu0 0.0
    %2848 = vmatpush1.msra.mxu0 0.0
    %2849 = vmatprep.subr.mxu0 0.0
    %2850 = vmatpush1.msra.mxu0 0.0
    %2851 = vmatprep.subr.mxu0 0.0
    %2852 = vmatpush1.msra.mxu0 0.0
    %2853 = vmatprep.subr.mxu0 0.0
    %2854 = vmatpush1.msra.mxu0 0.0
    %2855 = vmatprep.subr.mxu0 0.0
    %2856 = vmatpush1.msra.mxu0 %v2821
    %2857 = vmatprep.subr.mxu0 0.0
    %2858 = vmatpush1.msra.mxu0 %v2819
    %2859 = vmatprep.subr.mxu0 0.0
    %2860 = vmatpush2.msra.mxu0 0.0
    %2861 = vmatprep.subr.mxu0 0.0
    %2862 = vmatpush2.msra.mxu0 0.0
    %2863 = vmatprep.subr.mxu0 0.0
    %2864 = vmatpush2.msra.mxu0 0.0
    %2865 = vmatprep.subr.mxu0 0.0
    %2866 = vmatpush2.msra.mxu0 0.0
    %2867 = vmatprep.subr.mxu0 0.0
    %2868 = vmatpush2.msra.mxu0 0.0
    %2869 = vmatprep.subr.mxu0 0.0
    %2870 = vmatpush2.msra.mxu0 0.0
    %2871 = vmatprep.subr.mxu0 0.0
    %2872 = vmatpush2.msra.mxu0 0.0
    %2873 = vmatprep.subr.mxu0 0.0
    %2874 = vmatpush2.msra.mxu0 0.0
    %2875 = vmatprep.subr.mxu0 0.0
    %2876 = vmatpush2.msra.mxu0 0.0
    %2877 = vmatprep.subr.mxu0 0.0
    %2878 = vmatpush2.msra.mxu0 0.0
    %2879 = vmatprep.subr.mxu0 0.0
    %2880 = vmatpush2.msra.mxu0 0.0
    %2881 = vmatprep.subr.mxu0 0.0
    %2882 = vmatpush2.msra.mxu0 0.0
    %2883 = vmatprep.subr.mxu0 0.0
    %2884 = vmatpush2.msra.mxu0 0.0
    %2885 = vmatprep.subr.mxu0 0.0
    %2886 = vmatpush2.msra.mxu0 0.0
    %2887 = vmatprep.subr.mxu0 0.0
    %2888 = vmatpush2.msra.mxu0 0.0
    %2889 = vmatprep.subr.mxu0 0.0
    %2890 = vmatpush2.msra.mxu0 0.0
    %2891 = vmatprep.mubr.f32.mxu0 0.0
    %2892 = vmatmul.mubr.f32.gmra.mxu0 %v2825
    %v2893 = vpop.f32.mrf.mxu0
    %v2894 = vadd.f32 0.0, %v2893
    %v2895 = vpop.f32.mrf.mxu0
    %2896 = vdwg.mxu0
    %v2897 = vadd.f32 %v2469, %v2813
    %v2898 = vadd.f32 %v2550, %v2894
    %v2899 = vmul.f32 %v1844, %v1278
    %v2900 = vmul.f32 %v1847, %v1278
    %v2901 = vmul.f32 %v1852, %v1278
    %v2902 = vmul.f32 %v1855, %v1278
    %v2903 = vmul.f32 %v1844, %v1281
    %v2904 = vmul.f32 %v1847, %v1281
    %v2905 = vmul.f32 %v1852, %v1281
    %v2906 = vmul.f32 %v1855, %v1281
    %v2908 = vsel %vm96, %v2899, 0
    %v2911 = vsel %vm96, %v2900, 0
    %2913 = vmatprep.subr.mxu0 0.0
    %2914 = vmatpush1.xpose.msra.mxu0 0.0
    %2915 = vmatprep.subr.mxu0 0.0
    %2916 = vmatpush1.xpose.msra.mxu0 0.0
    %2917 = vmatprep.subr.mxu0 0.0
    %2918 = vmatpush1.xpose.msra.mxu0 0.0
    %2919 = vmatprep.subr.mxu0 0.0
    %2920 = vmatpush1.xpose.msra.mxu0 0.0
    %2921 = vmatprep.subr.mxu0 0.0
    %2922 = vmatpush1.xpose.msra.mxu0 0.0
    %2923 = vmatprep.subr.mxu0 0.0
    %2924 = vmatpush1.xpose.msra.mxu0 0.0
    %2925 = vmatprep.subr.mxu0 0.0
    %2926 = vmatpush1.xpose.msra.mxu0 0.0
    %2927 = vmatprep.subr.mxu0 0.0
    %2928 = vmatpush1.xpose.msra.mxu0 0.0
    %2929 = vmatprep.subr.mxu0 0.0
    %2930 = vmatpush1.xpose.msra.mxu0 0.0
    %2931 = vmatprep.subr.mxu0 0.0
    %2932 = vmatpush1.xpose.msra.mxu0 0.0
    %2933 = vmatprep.subr.mxu0 0.0
    %2934 = vmatpush1.xpose.msra.mxu0 0.0
    %2935 = vmatprep.subr.mxu0 0.0
    %2936 = vmatpush1.xpose.msra.mxu0 0.0
    %2937 = vmatprep.subr.mxu0 0.0
    %2938 = vmatpush1.xpose.msra.mxu0 0.0
    %2939 = vmatprep.subr.mxu0 0.0
    %2940 = vmatpush1.xpose.msra.mxu0 0.0
    %2941 = vmatprep.subr.mxu0 0.0
    %2942 = vmatpush1.xpose.msra.mxu0 %v2911
    %2943 = vmatprep.subr.mxu0 0.0
    %2944 = vmatpush1.xpose.msra.mxu0 %v2908
    %2945 = vmatprep.subr.mxu0 0.0
    %2946 = vmatpush2.xpose.msra.mxu0 0.0
    %2947 = vmatprep.subr.mxu0 0.0
    %2948 = vmatpush2.xpose.msra.mxu0 0.0
    %2949 = vmatprep.subr.mxu0 0.0
    %2950 = vmatpush2.xpose.msra.mxu0 0.0
    %2951 = vmatprep.subr.mxu0 0.0
    %2952 = vmatpush2.xpose.msra.mxu0 0.0
    %2953 = vmatprep.subr.mxu0 0.0
    %2954 = vmatpush2.xpose.msra.mxu0 0.0
    %2955 = vmatprep.subr.mxu0 0.0
    %2956 = vmatpush2.xpose.msra.mxu0 0.0
    %2957 = vmatprep.subr.mxu0 0.0
    %2958 = vmatpush2.xpose.msra.mxu0 0.0
    %2959 = vmatprep.subr.mxu0 0.0
    %2960 = vmatpush2.xpose.msra.mxu0 0.0
    %2961 = vmatprep.subr.mxu0 0.0
    %2962 = vmatpush2.xpose.msra.mxu0 0.0
    %2963 = vmatprep.subr.mxu0 0.0
    %2964 = vmatpush2.xpose.msra.mxu0 0.0
    %2965 = vmatprep.subr.mxu0 0.0
    %2966 = vmatpush2.xpose.msra.mxu0 0.0
    %2967 = vmatprep.subr.mxu0 0.0
    %2968 = vmatpush2.xpose.msra.mxu0 0.0
    %2969 = vmatprep.subr.mxu0 0.0
    %2970 = vmatpush2.xpose.msra.mxu0 0.0
    %2971 = vmatprep.subr.mxu0 0.0
    %2972 = vmatpush2.xpose.msra.mxu0 0.0
    %2973 = vmatprep.subr.mxu0 0.0
    %2974 = vmatpush2.xpose.msra.mxu0 0.0
    %2975 = vmatprep.subr.mxu0 0.0
    %2976 = vmatpush2.xpose.msra.mxu0 0.0
    %2977 = vmatprep.mubr.f32.mxu0 0.0
    %2978 = vmatmul.mubr.f32.gmra.mxu0 %v1867
    %v2979 = vpop.f32.mrf.mxu0
    %v2980 = vadd.f32 0.0, %v2979
    %v2981 = vpop.f32.mrf.mxu0
    %2982 = vdwg.mxu0
    %v2984 = vsel %vm96, %v2901, 0
    %v2987 = vsel %vm96, %v2902, 0
    %2989 = vmatprep.subr.mxu0 0.0
    %2990 = vmatpush1.xpose.msra.mxu0 0.0
    %2991 = vmatprep.subr.mxu0 0.0
    %2992 = vmatpush1.xpose.msra.mxu0 0.0
    %2993 = vmatprep.subr.mxu0 0.0
    %2994 = vmatpush1.xpose.msra.mxu0 0.0
    %2995 = vmatprep.subr.mxu0 0.0
    %2996 = vmatpush1.xpose.msra.mxu0 0.0
    %2997 = vmatprep.subr.mxu0 0.0
    %2998 = vmatpush1.xpose.msra.mxu0 0.0
    %2999 = vmatprep.subr.mxu0 0.0
    %3000 = vmatpush1.xpose.msra.mxu0 0.0
    %3001 = vmatprep.subr.mxu0 0.0
    %3002 = vmatpush1.xpose.msra.mxu0 0.0
    %3003 = vmatprep.subr.mxu0 0.0
    %3004 = vmatpush1.xpose.msra.mxu0 0.0
    %3005 = vmatprep.subr.mxu0 0.0
    %3006 = vmatpush1.xpose.msra.mxu0 0.0
    %3007 = vmatprep.subr.mxu0 0.0
    %3008 = vmatpush1.xpose.msra.mxu0 0.0
    %3009 = vmatprep.subr.mxu0 0.0
    %3010 = vmatpush1.xpose.msra.mxu0 0.0
    %3011 = vmatprep.subr.mxu0 0.0
    %3012 = vmatpush1.xpose.msra.mxu0 0.0
    %3013 = vmatprep.subr.mxu0 0.0
    %3014 = vmatpush1.xpose.msra.mxu0 0.0
    %3015 = vmatprep.subr.mxu0 0.0
    %3016 = vmatpush1.xpose.msra.mxu0 0.0
    %3017 = vmatprep.subr.mxu0 0.0
    %3018 = vmatpush1.xpose.msra.mxu0 %v2987
    %3019 = vmatprep.subr.mxu0 0.0
    %3020 = vmatpush1.xpose.msra.mxu0 %v2984
    %3021 = vmatprep.subr.mxu0 0.0
    %3022 = vmatpush2.xpose.msra.mxu0 0.0
    %3023 = vmatprep.subr.mxu0 0.0
    %3024 = vmatpush2.xpose.msra.mxu0 0.0
    %3025 = vmatprep.subr.mxu0 0.0
    %3026 = vmatpush2.xpose.msra.mxu0 0.0
    %3027 = vmatprep.subr.mxu0 0.0
    %3028 = vmatpush2.xpose.msra.mxu0 0.0
    %3029 = vmatprep.subr.mxu0 0.0
    %3030 = vmatpush2.xpose.msra.mxu0 0.0
    %3031 = vmatprep.subr.mxu0 0.0
    %3032 = vmatpush2.xpose.msra.mxu0 0.0
    %3033 = vmatprep.subr.mxu0 0.0
    %3034 = vmatpush2.xpose.msra.mxu0 0.0
    %3035 = vmatprep.subr.mxu0 0.0
    %3036 = vmatpush2.xpose.msra.mxu0 0.0
    %3037 = vmatprep.subr.mxu0 0.0
    %3038 = vmatpush2.xpose.msra.mxu0 0.0
    %3039 = vmatprep.subr.mxu0 0.0
    %3040 = vmatpush2.xpose.msra.mxu0 0.0
    %3041 = vmatprep.subr.mxu0 0.0
    %3042 = vmatpush2.xpose.msra.mxu0 0.0
    %3043 = vmatprep.subr.mxu0 0.0
    %3044 = vmatpush2.xpose.msra.mxu0 0.0
    %3045 = vmatprep.subr.mxu0 0.0
    %3046 = vmatpush2.xpose.msra.mxu0 0.0
    %3047 = vmatprep.subr.mxu0 0.0
    %3048 = vmatpush2.xpose.msra.mxu0 0.0
    %3049 = vmatprep.subr.mxu0 0.0
    %3050 = vmatpush2.xpose.msra.mxu0 0.0
    %3051 = vmatprep.subr.mxu0 0.0
    %3052 = vmatpush2.xpose.msra.mxu0 0.0
    %3053 = vmatprep.mubr.f32.mxu0 0.0
    %3054 = vmatmul.mubr.f32.gmra.mxu0 %v1946
    %v3055 = vpop.f32.mrf.mxu0
    %v3056 = vadd.f32 0.0, %v3055
    %v3057 = vpop.f32.mrf.mxu0
    %3058 = vdwg.mxu0
    %v3059 = vsel %vm2024, %v2980, -inf
    %3060 = vmax.xlane.f32.xlu0 %v3059
    %v3061 = vpop.xlane.xlu0 %3060
    %v3062 = vsel %vm2024, %v3056, -inf
    %3063 = vmax.xlane.f32.xlu0 %v3062
    %v3064 = vpop.xlane.xlu0 %3063
    %v3065 = vsub.f32 %v2980, %v3061
    %v3066 = vsub.f32 %v3056, %v3064
    %v3067 = vmul.f32 %v3065, 1.442695
    %v3068 = vpow.pop %v3067
    %v3069 = vmul.f32 %v3066, 1.442695
    %v3070 = vpow.pop %v3069
    %v3071 = vsel %vm2024, %v3068, 0.0
    %3072 = vadd.xlane.f32.xlu0 %v3071
    %v3073 = vpop.xlane.xlu0 %3072
    %v3074 = vsel %vm2024, %v3070, 0.0
    %3075 = vadd.xlane.f32.xlu0 %v3074
    %v3076 = vpop.xlane.xlu0 %3075
    %v3077 = vrcp.pop %v3073
    %v3078 = vmul.f32 %v3068, %v3077
    %v3079 = vrcp.pop %v3076
    %v3080 = vmul.f32 %v3070, %v3079
    %3083 = vrot.lane.b32.xlu0 %v2903, 96
    %v3084 = vpop.permute.xlu0 %3083
    %3085 = vrot.lane.b32.xlu0 %v2904, 96
    %v3086 = vpop.permute.xlu0 %3085
    %v3090 = vsel %vm2024, %v3078, 0
    %3092 = vmatprep.subr.mxu0 0.0
    %3093 = vmatpush1.msra.mxu0 0.0
    %3094 = vmatprep.subr.mxu0 0.0
    %3095 = vmatpush1.msra.mxu0 0.0
    %3096 = vmatprep.subr.mxu0 0.0
    %3097 = vmatpush1.msra.mxu0 0.0
    %3098 = vmatprep.subr.mxu0 0.0
    %3099 = vmatpush1.msra.mxu0 0.0
    %3100 = vmatprep.subr.mxu0 0.0
    %3101 = vmatpush1.msra.mxu0 0.0
    %3102 = vmatprep.subr.mxu0 0.0
    %3103 = vmatpush1.msra.mxu0 0.0
    %3104 = vmatprep.subr.mxu0 0.0
    %3105 = vmatpush1.msra.mxu0 0.0
    %3106 = vmatprep.subr.mxu0 0.0
    %3107 = vmatpush1.msra.mxu0 0.0
    %3108 = vmatprep.subr.mxu0 0.0
    %3109 = vmatpush1.msra.mxu0 0.0
    %3110 = vmatprep.subr.mxu0 0.0
    %3111 = vmatpush1.msra.mxu0 0.0
    %3112 = vmatprep.subr.mxu0 0.0
    %3113 = vmatpush1.msra.mxu0 0.0
    %3114 = vmatprep.subr.mxu0 0.0
    %3115 = vmatpush1.msra.mxu0 0.0
    %3116 = vmatprep.subr.mxu0 0.0
    %3117 = vmatpush1.msra.mxu0 0.0
    %3118 = vmatprep.subr.mxu0 0.0
    %3119 = vmatpush1.msra.mxu0 0.0
    %3120 = vmatprep.subr.mxu0 0.0
    %3121 = vmatpush1.msra.mxu0 %v3086
    %3122 = vmatprep.subr.mxu0 0.0
    %3123 = vmatpush1.msra.mxu0 %v3084
    %3124 = vmatprep.subr.mxu0 0.0
    %3125 = vmatpush2.msra.mxu0 0.0
    %3126 = vmatprep.subr.mxu0 0.0
    %3127 = vmatpush2.msra.mxu0 0.0
    %3128 = vmatprep.subr.mxu0 0.0
    %3129 = vmatpush2.msra.mxu0 0.0
    %3130 = vmatprep.subr.mxu0 0.0
    %3131 = vmatpush2.msra.mxu0 0.0
    %3132 = vmatprep.subr.mxu0 0.0
    %3133 = vmatpush2.msra.mxu0 0.0
    %3134 = vmatprep.subr.mxu0 0.0
    %3135 = vmatpush2.msra.mxu0 0.0
    %3136 = vmatprep.subr.mxu0 0.0
    %3137 = vmatpush2.msra.mxu0 0.0
    %3138 = vmatprep.subr.mxu0 0.0
    %3139 = vmatpush2.msra.mxu0 0.0
    %3140 = vmatprep.subr.mxu0 0.0
    %3141 = vmatpush2.msra.mxu0 0.0
    %3142 = vmatprep.subr.mxu0 0.0
    %3143 = vmatpush2.msra.mxu0 0.0
    %3144 = vmatprep.subr.mxu0 0.0
    %3145 = vmatpush2.msra.mxu0 0.0
    %3146 = vmatprep.subr.mxu0 0.0
    %3147 = vmatpush2.msra.mxu0 0.0
    %3148 = vmatprep.subr.mxu0 0.0
    %3149 = vmatpush2.msra.mxu0 0.0
    %3150 = vmatprep.subr.mxu0 0.0
    %3151 = vmatpush2.msra.mxu0 0.0
    %3152 = vmatprep.subr.mxu0 0.0
    %3153 = vmatpush2.msra.mxu0 0.0
    %3154 = vmatprep.subr.mxu0 0.0
    %3155 = vmatpush2.msra.mxu0 0.0
    %3156 = vmatprep.mubr.f32.mxu0 0.0
    %3157 = vmatmul.mubr.f32.gmra.mxu0 %v3090
    %v3158 = vpop.f32.mrf.mxu0
    %v3159 = vadd.f32 0.0, %v3158
    %v3160 = vpop.f32.mrf.mxu0
    %3161 = vdwg.mxu0
    %3164 = vrot.lane.b32.xlu0 %v2905, 96
    %v3165 = vpop.permute.xlu0 %3164
    %3166 = vrot.lane.b32.xlu0 %v2906, 96
    %v3167 = vpop.permute.xlu0 %3166
    %v3171 = vsel %vm2024, %v3080, 0
    %3173 = vmatprep.subr.mxu0 0.0
    %3174 = vmatpush1.msra.mxu0 0.0
    %3175 = vmatprep.subr.mxu0 0.0
    %3176 = vmatpush1.msra.mxu0 0.0
    %3177 = vmatprep.subr.mxu0 0.0
    %3178 = vmatpush1.msra.mxu0 0.0
    %3179 = vmatprep.subr.mxu0 0.0
    %3180 = vmatpush1.msra.mxu0 0.0
    %3181 = vmatprep.subr.mxu0 0.0
    %3182 = vmatpush1.msra.mxu0 0.0
    %3183 = vmatprep.subr.mxu0 0.0
    %3184 = vmatpush1.msra.mxu0 0.0
    %3185 = vmatprep.subr.mxu0 0.0
    %3186 = vmatpush1.msra.mxu0 0.0
    %3187 = vmatprep.subr.mxu0 0.0
    %3188 = vmatpush1.msra.mxu0 0.0
    %3189 = vmatprep.subr.mxu0 0.0
    %3190 = vmatpush1.msra.mxu0 0.0
    %3191 = vmatprep.subr.mxu0 0.0
    %3192 = vmatpush1.msra.mxu0 0.0
    %3193 = vmatprep.subr.mxu0 0.0
    %3194 = vmatpush1.msra.mxu0 0.0
    %3195 = vmatprep.subr.mxu0 0.0
    %3196 = vmatpush1.msra.mxu0 0.0
    %3197 = vmatprep.subr.mxu0 0.0
    %3198 = vmatpush1.msra.mxu0 0.0
    %3199 = vmatprep.subr.mxu0 0.0
    %3200 = vmatpush1.msra.mxu0 0.0
    %3201 = vmatprep.subr.mxu0 0.0
    %3202 = vmatpush1.msra.mxu0 %v3167
    %3203 = vmatprep.subr.mxu0 0.0
    %3204 = vmatpush1.msra.mxu0 %v3165
    %3205 = vmatprep.subr.mxu0 0.0
    %3206 = vmatpush2.msra.mxu0 0.0
    %3207 = vmatprep.subr.mxu0 0.0
    %3208 = vmatpush2.msra.mxu0 0.0
    %3209 = vmatprep.subr.mxu0 0.0
    %3210 = vmatpush2.msra.mxu0 0.0
    %3211 = vmatprep.subr.mxu0 0.0
    %3212 = vmatpush2.msra.mxu0 0.0
    %3213 = vmatprep.subr.mxu0 0.0
    %3214 = vmatpush2.msra.mxu0 0.0
    %3215 = vmatprep.subr.mxu0 0.0
    %3216 = vmatpush2.msra.mxu0 0.0
    %3217 = vmatprep.subr.mxu0 0.0
    %3218 = vmatpush2.msra.mxu0 0.0
    %3219 = vmatprep.subr.mxu0 0.0
    %3220 = vmatpush2.msra.mxu0 0.0
    %3221 = vmatprep.subr.mxu0 0.0
    %3222 = vmatpush2.msra.mxu0 0.0
    %3223 = vmatprep.subr.mxu0 0.0
    %3224 = vmatpush2.msra.mxu0 0.0
    %3225 = vmatprep.subr.mxu0 0.0
    %3226 = vmatpush2.msra.mxu0 0.0
    %3227 = vmatprep.subr.mxu0 0.0
    %3228 = vmatpush2.msra.mxu0 0.0
    %3229 = vmatprep.subr.mxu0 0.0
    %3230 = vmatpush2.msra.mxu0 0.0
    %3231 = vmatprep.subr.mxu0 0.0
    %3232 = vmatpush2.msra.mxu0 0.0
    %3233 = vmatprep.subr.mxu0 0.0
    %3234 = vmatpush2.msra.mxu0 0.0
    %3235 = vmatprep.subr.mxu0 0.0
    %3236 = vmatpush2.msra.mxu0 0.0
    %3237 = vmatprep.mubr.f32.mxu0 0.0
    %3238 = vmatmul.mubr.f32.gmra.mxu0 %v3171
    %v3239 = vpop.f32.mrf.mxu0
    %v3240 = vadd.f32 0.0, %v3239
    %v3241 = vpop.f32.mrf.mxu0
    %3242 = vdwg.mxu0
    %v3243 = vadd.f32 %v2897, %v3159
    %v3244 = vadd.f32 %v2898, %v3240
    %v3245 = vpack.c.bf16 %v3244, %v3243
    %v3246 = vlaneseq
    %v3247 = vshrl.u32 %v3246, 7
    %v3248 = vsub.s32 0, %v3247
    %v3249 = vrot.slane %v67, %v3248
    %v3254 = vunpack.c.l.b16 %v54
    %v3255 = vunpack.c.l.b16 %v55
    %v3256 = vunpack.c.l.b16 %v56
    %v3257 = vunpack.c.l.b16 %v57
    %v3258 = vpack.c.b16 %v3255, %v3254
    %v3259 = vpack.c.b16 %v3257, %v3256
    %v3263 = vsel %vm96, %v3245, 0
    %3265 = vmatprep.subr.bf16.mxu0 0
    %3266 = vmatpush1.bf16.msra.mxu0 0
    %3267 = vmatprep.subr.bf16.mxu0 0
    %3268 = vmatpush1.bf16.msra.mxu0 0
    %3269 = vmatprep.subr.bf16.mxu0 0
    %3270 = vmatpush1.bf16.msra.mxu0 0
    %3271 = vmatprep.subr.bf16.mxu0 0
    %3272 = vmatpush1.bf16.msra.mxu0 0
    %3273 = vmatprep.subr.bf16.mxu0 0
    %3274 = vmatpush1.bf16.msra.mxu0 0
    %3275 = vmatprep.subr.bf16.mxu0 0
    %3276 = vmatpush1.bf16.msra.mxu0 0
    %3277 = vmatprep.subr.bf16.mxu0 0
    %3278 = vmatpush1.bf16.msra.mxu0 %v3259
    %3279 = vmatprep.subr.bf16.mxu0 0
    %3280 = vmatpush1.bf16.msra.mxu0 %v3258
    %3281 = vmatprep.subr.bf16.mxu0 0
    %3282 = vmatpush2.bf16.msra.mxu0 0
    %3283 = vmatprep.subr.bf16.mxu0 0
    %3284 = vmatpush2.bf16.msra.mxu0 0
    %3285 = vmatprep.subr.bf16.mxu0 0
    %3286 = vmatpush2.bf16.msra.mxu0 0
    %3287 = vmatprep.subr.bf16.mxu0 0
    %3288 = vmatpush2.bf16.msra.mxu0 0
    %3289 = vmatprep.subr.bf16.mxu0 0
    %3290 = vmatpush2.bf16.msra.mxu0 0
    %3291 = vmatprep.subr.bf16.mxu0 0
    %3292 = vmatpush2.bf16.msra.mxu0 0
    %3293 = vmatprep.subr.bf16.mxu0 0
    %3294 = vmatpush2.bf16.msra.mxu0 0
    %3295 = vmatprep.subr.bf16.mxu0 0
    %3296 = vmatpush2.bf16.msra.mxu0 0
    %3297 = vmatprep.mubr.bf16.mxu0 0
    %3298 = vmatmul.mubr.bf16.gmra.mxu0 %v3263
    %v3299 = vpop.f32.mrf.mxu0
    %v3300 = vadd.f32 %v3249, %v3299
    %v3301 = vpop.f32.mrf.mxu0
    %v3302 = vpop.f32.mrf.mxu0
    %v3303 = vadd.f32 %v3249, %v3302
    %v3304 = vpop.f32.mrf.mxu0
    %3305 = vdwg.mxu0
    %v3306 = vadd.f32 %v1718, %v3300
    %v3307 = vadd.f32 %v1719, %v3303
    %v3308 = vsel %vm96, %v3306, 0.0
    %3309 = vadd.xlane.f32.xlu0 %v3308
    %v3310 = vpop.xlane.xlu0 %3309
    %v3311 = vsel %vm96, %v3307, 0.0
    %3312 = vadd.xlane.f32.xlu0 %v3311
    %v3313 = vpop.xlane.xlu0 %3312
    %v3314 = vmul.f32 %v3310, %v1687
    %v3315 = vmul.f32 %v3313, %v1687
    %v3316 = vsub.f32 %v3306, %v3314
    %v3317 = vsub.f32 %v3307, %v3315
    %v3318 = vmul.f32 %v3316, %v3316
    %v3319 = vmul.f32 %v3317, %v3317
    %v3320 = vsel %vm96, %v3318, 0.0
    %3321 = vadd.xlane.f32.xlu0 %v3320
    %v3322 = vpop.xlane.xlu0 %3321
    %v3323 = vsel %vm96, %v3319, 0.0
    %3324 = vadd.xlane.f32.xlu0 %v3323
    %v3325 = vpop.xlane.xlu0 %3324
    %v3326 = vmul.f32 %v3322, %v1687
    %v3327 = vmul.f32 %v3325, %v1687
    %v3328 = vadd.f32 %v3326, 1e-05
    %v3329 = vadd.f32 %v3327, 1e-05
    %v3330 = vrsqrt.pop %v3328
    %v3331 = vrsqrt.pop %v3329
    %v3332 = vmul.f32 %v3316, %v3330
    %v3333 = vmul.f32 %v3317, %v3331
    %v3334 = vlaneseq
    %v3335 = vshrl.u32 %v3334, 7
    %v3336 = vsub.s32 0, %v3335
    %v3337 = vrot.slane %v72, %v3336
    %v3338 = vmul.f32 %v3332, %v3337
    %v3339 = vmul.f32 %v3333, %v3337
    %v3340 = vlaneseq
    %v3341 = vshrl.u32 %v3340, 7
    %v3342 = vsub.s32 0, %v3341
    %v3343 = vrot.slane %v73, %v3342
    %v3344 = vadd.f32 %v3338, %v3343
    %v3345 = vadd.f32 %v3339, %v3343
    %v3346 = vpack.c.bf16 %v3345, %v3344
    %v3347 = vld [vmem:[%s4] sm:$0xff]
    %v3348 = vld [vmem:[%s4 + $0x8] sm:$0xff]
    %v3349 = vld [vmem:[%s4 + $0x10] sm:$0xff]
    %v3350 = vld [vmem:[%s4 + $0x18] sm:$0xff]
    %v3351 = vld [vmem:[%s4 + $0x20] sm:$0xff]
    %v3352 = vld [vmem:[%s4 + $0x28] sm:$0xff]
    %v3353 = vld [vmem:[%s4 + $0x30] sm:$0xff]
    %v3354 = vld [vmem:[%s4 + $0x38] sm:$0xff]
    %v3355 = vld [vmem:[%s4 + $0x40] sm:$0xff]
    %v3356 = vld [vmem:[%s4 + $0x48] sm:$0xff]
    %v3357 = vld [vmem:[%s4 + $0x50] sm:$0xff]
    %v3358 = vld [vmem:[%s4 + $0x58] sm:$0xff]
    %v3359 = vld [vmem:[%s4 + $0x60] sm:$0xff]
    %v3360 = vld [vmem:[%s4 + $0x68] sm:$0xff]
    %v3361 = vld [vmem:[%s4 + $0x70] sm:$0xff]
    %v3362 = vld [vmem:[%s4 + $0x78] sm:$0xff]
    %v3363 = vld [vmem:[%s4 + $0x80] sm:$0xff]
    %v3364 = vld [vmem:[%s4 + $0x88] sm:$0xff]
    %v3365 = vld [vmem:[%s4 + $0x90] sm:$0xff]
    %v3366 = vld [vmem:[%s4 + $0x98] sm:$0xff]
    %v3367 = vld [vmem:[%s4 + $0xa0] sm:$0xff]
    %v3368 = vld [vmem:[%s4 + $0xa8] sm:$0xff]
    %v3369 = vld [vmem:[%s4 + $0xb0] sm:$0xff]
    %v3370 = vld [vmem:[%s4 + $0xb8] sm:$0xff]
    %v3371 = vld [vmem:[%s4 + $0xc0] sm:$0xff]
    %v3372 = vld [vmem:[%s4 + $0xc8] sm:$0xff]
    %v3373 = vld [vmem:[%s4 + $0xd0] sm:$0xff]
    %v3374 = vld [vmem:[%s4 + $0xd8] sm:$0xff]
    %v3375 = vld [vmem:[%s4 + $0xe0] sm:$0xff]
    %v3376 = vld [vmem:[%s4 + $0xe8] sm:$0xff]
    %v3377 = vld [vmem:[%s4 + $0xf0] sm:$0xff]
    %v3378 = vld [vmem:[%s4 + $0xf8] sm:$0xff]
    %v3379 = vld [vmem:[%s5] sm:$0xff]
    %v3380 = vld [vmem:[%s5 + $0x8] sm:$0xff]
    %v3383 = vlaneseq
    %v3384 = vshrl.u32 %v3383, 7
    %v3385 = vsub.s32 0, %v3384
    %v3386 = vrot.slane %v3379, %v3385
    %v3387 = vlaneseq
    %v3388 = vshrl.u32 %v3387, 7
    %v3389 = vsub.s32 1, %v3388
    %v3390 = vrot.slane %v3379, %v3389
    %v3391 = vlaneseq
    %v3392 = vshrl.u32 %v3391, 7
    %v3393 = vsub.s32 2, %v3392
    %v3394 = vrot.slane %v3379, %v3393
    %v3395 = vlaneseq
    %v3396 = vshrl.u32 %v3395, 7
    %v3397 = vsub.s32 3, %v3396
    %v3398 = vrot.slane %v3379, %v3397
    %v3399 = vlaneseq
    %v3400 = vshrl.u32 %v3399, 7
    %v3401 = vsub.s32 4, %v3400
    %v3402 = vrot.slane %v3379, %v3401
    %v3403 = vlaneseq
    %v3404 = vshrl.u32 %v3403, 7
    %v3405 = vsub.s32 5, %v3404
    %v3406 = vrot.slane %v3379, %v3405
    %v3407 = vlaneseq
    %v3408 = vshrl.u32 %v3407, 7
    %v3409 = vsub.s32 6, %v3408
    %v3410 = vrot.slane %v3379, %v3409
    %v3411 = vlaneseq
    %v3412 = vshrl.u32 %v3411, 7
    %v3413 = vsub.s32 7, %v3412
    %v3414 = vrot.slane %v3379, %v3413
    %v3415 = vlaneseq
    %v3416 = vshrl.u32 %v3415, 7
    %v3417 = vsub.s32 0, %v3416
    %v3418 = vrot.slane %v3380, %v3417
    %v3419 = vlaneseq
    %v3420 = vshrl.u32 %v3419, 7
    %v3421 = vsub.s32 1, %v3420
    %v3422 = vrot.slane %v3380, %v3421
    %v3423 = vlaneseq
    %v3424 = vshrl.u32 %v3423, 7
    %v3425 = vsub.s32 2, %v3424
    %v3426 = vrot.slane %v3380, %v3425
    %v3427 = vlaneseq
    %v3428 = vshrl.u32 %v3427, 7
    %v3429 = vsub.s32 3, %v3428
    %v3430 = vrot.slane %v3380, %v3429
    %v3431 = vlaneseq
    %v3432 = vshrl.u32 %v3431, 7
    %v3433 = vsub.s32 4, %v3432
    %v3434 = vrot.slane %v3380, %v3433
    %v3435 = vlaneseq
    %v3436 = vshrl.u32 %v3435, 7
    %v3437 = vsub.s32 5, %v3436
    %v3438 = vrot.slane %v3380, %v3437
    %v3439 = vlaneseq
    %v3440 = vshrl.u32 %v3439, 7
    %v3441 = vsub.s32 6, %v3440
    %v3442 = vrot.slane %v3380, %v3441
    %v3443 = vlaneseq
    %v3444 = vshrl.u32 %v3443, 7
    %v3445 = vsub.s32 7, %v3444
    %v3446 = vrot.slane %v3380, %v3445
    %v3495 = vunpack.c.l.b16 %v3347
    %v3496 = vunpack.c.h.b16 %v3347
    %v3497 = vunpack.c.l.b16 %v3348
    %v3498 = vunpack.c.h.b16 %v3348
    %v3499 = vunpack.c.l.b16 %v3349
    %v3500 = vunpack.c.h.b16 %v3349
    %v3501 = vunpack.c.l.b16 %v3350
    %v3502 = vunpack.c.h.b16 %v3350
    %v3503 = vunpack.c.l.b16 %v3351
    %v3504 = vunpack.c.h.b16 %v3351
    %v3505 = vunpack.c.l.b16 %v3352
    %v3506 = vunpack.c.h.b16 %v3352
    %v3507 = vunpack.c.l.b16 %v3353
    %v3508 = vunpack.c.h.b16 %v3353
    %v3509 = vunpack.c.l.b16 %v3354
    %v3510 = vunpack.c.h.b16 %v3354
    %v3511 = vunpack.c.l.b16 %v3355
    %v3512 = vunpack.c.h.b16 %v3355
    %v3513 = vunpack.c.l.b16 %v3356
    %v3514 = vunpack.c.h.b16 %v3356
    %v3515 = vunpack.c.l.b16 %v3357
    %v3516 = vunpack.c.h.b16 %v3357
    %v3517 = vunpack.c.l.b16 %v3358
    %v3518 = vunpack.c.h.b16 %v3358
    %v3519 = vunpack.c.l.b16 %v3359
    %v3520 = vunpack.c.h.b16 %v3359
    %v3521 = vunpack.c.l.b16 %v3360
    %v3522 = vunpack.c.h.b16 %v3360
    %v3523 = vunpack.c.l.b16 %v3361
    %v3524 = vunpack.c.h.b16 %v3361
    %v3525 = vunpack.c.l.b16 %v3362
    %v3526 = vunpack.c.h.b16 %v3362
    %v3527 = vunpack.c.l.b16 %v3363
    %v3528 = vunpack.c.h.b16 %v3363
    %v3529 = vunpack.c.l.b16 %v3364
    %v3530 = vunpack.c.h.b16 %v3364
    %v3531 = vunpack.c.l.b16 %v3365
    %v3532 = vunpack.c.h.b16 %v3365
    %v3533 = vunpack.c.l.b16 %v3366
    %v3534 = vunpack.c.h.b16 %v3366
    %v3535 = vunpack.c.l.b16 %v3367
    %v3536 = vunpack.c.h.b16 %v3367
    %v3537 = vunpack.c.l.b16 %v3368
    %v3538 = vunpack.c.h.b16 %v3368
    %v3539 = vunpack.c.l.b16 %v3369
    %v3540 = vunpack.c.h.b16 %v3369
    %v3541 = vunpack.c.l.b16 %v3370
    %v3542 = vunpack.c.h.b16 %v3370
    %v3543 = vunpack.c.l.b16 %v3371
    %v3544 = vunpack.c.h.b16 %v3371
    %v3545 = vunpack.c.l.b16 %v3372
    %v3546 = vunpack.c.h.b16 %v3372
    %v3547 = vunpack.c.l.b16 %v3373
    %v3548 = vunpack.c.h.b16 %v3373
    %v3549 = vunpack.c.l.b16 %v3374
    %v3550 = vunpack.c.h.b16 %v3374
    %v3551 = vunpack.c.l.b16 %v3375
    %v3552 = vunpack.c.h.b16 %v3375
    %v3553 = vunpack.c.l.b16 %v3376
    %v3554 = vunpack.c.h.b16 %v3376
    %v3555 = vunpack.c.l.b16 %v3377
    %v3556 = vunpack.c.h.b16 %v3377
    %v3557 = vunpack.c.l.b16 %v3378
    %v3558 = vunpack.c.h.b16 %v3378
    %v3559 = vpack.c.b16 %v3511, %v3495
    %v3560 = vpack.c.b16 %v3512, %v3496
    %v3561 = vpack.c.b16 %v3513, %v3497
    %v3562 = vpack.c.b16 %v3514, %v3498
    %v3563 = vpack.c.b16 %v3515, %v3499
    %v3564 = vpack.c.b16 %v3516, %v3500
    %v3565 = vpack.c.b16 %v3517, %v3501
    %v3566 = vpack.c.b16 %v3518, %v3502
    %v3567 = vpack.c.b16 %v3519, %v3503
    %v3568 = vpack.c.b16 %v3520, %v3504
    %v3569 = vpack.c.b16 %v3521, %v3505
    %v3570 = vpack.c.b16 %v3522, %v3506
    %v3571 = vpack.c.b16 %v3523, %v3507
    %v3572 = vpack.c.b16 %v3524, %v3508
    %v3573 = vpack.c.b16 %v3525, %v3509
    %v3574 = vpack.c.b16 %v3526, %v3510
    %v3575 = vpack.c.b16 %v3543, %v3527
    %v3576 = vpack.c.b16 %v3544, %v3528
    %v3577 = vpack.c.b16 %v3545, %v3529
    %v3578 = vpack.c.b16 %v3546, %v3530
    %v3579 = vpack.c.b16 %v3547, %v3531
    %v3580 = vpack.c.b16 %v3548, %v3532
    %v3581 = vpack.c.b16 %v3549, %v3533
    %v3582 = vpack.c.b16 %v3550, %v3534
    %v3583 = vpack.c.b16 %v3551, %v3535
    %v3584 = vpack.c.b16 %v3552, %v3536
    %v3585 = vpack.c.b16 %v3553, %v3537
    %v3586 = vpack.c.b16 %v3554, %v3538
    %v3587 = vpack.c.b16 %v3555, %v3539
    %v3588 = vpack.c.b16 %v3556, %v3540
    %v3589 = vpack.c.b16 %v3557, %v3541
    %v3590 = vpack.c.b16 %v3558, %v3542
    %v3624 = vsel %vm96, %v3346, 0
    %3626 = vmatprep.subr.bf16.mxu0 0
    %3627 = vmatpush1.bf16.msra.mxu0 0
    %3628 = vmatprep.subr.bf16.mxu0 0
    %3629 = vmatpush1.bf16.msra.mxu0 0
    %3630 = vmatprep.subr.bf16.mxu0 0
    %3631 = vmatpush1.bf16.msra.mxu0 0
    %3632 = vmatprep.subr.bf16.mxu0 0
    %3633 = vmatpush1.bf16.msra.mxu0 0
    %3634 = vmatprep.subr.bf16.mxu0 0
    %3635 = vmatpush1.bf16.msra.mxu0 0
    %3636 = vmatprep.subr.bf16.mxu0 0
    %3637 = vmatpush1.bf16.msra.mxu0 0
    %3638 = vmatprep.subr.bf16.mxu0 %v3576
    %3639 = vmatpush1.bf16.msra.mxu0 %v3575
    %3640 = vmatprep.subr.bf16.mxu0 %v3560
    %3641 = vmatpush1.bf16.msra.mxu0 %v3559
    %3642 = vmatprep.subr.bf16.mxu0 0
    %3643 = vmatpush2.bf16.msra.mxu0 0
    %3644 = vmatprep.subr.bf16.mxu0 0
    %3645 = vmatpush2.bf16.msra.mxu0 0
    %3646 = vmatprep.subr.bf16.mxu0 0
    %3647 = vmatpush2.bf16.msra.mxu0 0
    %3648 = vmatprep.subr.bf16.mxu0 0
    %3649 = vmatpush2.bf16.msra.mxu0 0
    %3650 = vmatprep.subr.bf16.mxu0 0
    %3651 = vmatpush2.bf16.msra.mxu0 0
    %3652 = vmatprep.subr.bf16.mxu0 0
    %3653 = vmatpush2.bf16.msra.mxu0 0
    %3654 = vmatprep.subr.bf16.mxu0 0
    %3655 = vmatpush2.bf16.msra.mxu0 0
    %3656 = vmatprep.subr.bf16.mxu0 0
    %3657 = vmatpush2.bf16.msra.mxu0 0
    %3658 = vmatprep.mubr.bf16.mxu0 0
    %3659 = vmatmul.mubr.bf16.gmra.mxu0 %v3624
    %v3660 = vpop.f32.mrf.mxu0
    %v3661 = vadd.f32 %v3386, %v3660
    %v3662 = vpop.f32.mrf.mxu0
    %v3663 = vadd.f32 %v3390, %v3662
    %v3664 = vpop.f32.mrf.mxu0
    %v3665 = vadd.f32 %v3386, %v3664
    %v3666 = vpop.f32.mrf.mxu0
    %v3667 = vadd.f32 %v3390, %v3666
    %3668 = vdwg.mxu0
    %3669 = vmatprep.subr.bf16.mxu0 0
    %3670 = vmatpush1.bf16.msra.mxu0 0
    %3671 = vmatprep.subr.bf16.mxu0 0
    %3672 = vmatpush1.bf16.msra.mxu0 0
    %3673 = vmatprep.subr.bf16.mxu0 0
    %3674 = vmatpush1.bf16.msra.mxu0 0
    %3675 = vmatprep.subr.bf16.mxu0 0
    %3676 = vmatpush1.bf16.msra.mxu0 0
    %3677 = vmatprep.subr.bf16.mxu0 0
    %3678 = vmatpush1.bf16.msra.mxu0 0
    %3679 = vmatprep.subr.bf16.mxu0 0
    %3680 = vmatpush1.bf16.msra.mxu0 0
    %3681 = vmatprep.subr.bf16.mxu0 %v3578
    %3682 = vmatpush1.bf16.msra.mxu0 %v3577
    %3683 = vmatprep.subr.bf16.mxu0 %v3562
    %3684 = vmatpush1.bf16.msra.mxu0 %v3561
    %3685 = vmatprep.subr.bf16.mxu0 0
    %3686 = vmatpush2.bf16.msra.mxu0 0
    %3687 = vmatprep.subr.bf16.mxu0 0
    %3688 = vmatpush2.bf16.msra.mxu0 0
    %3689 = vmatprep.subr.bf16.mxu0 0
    %3690 = vmatpush2.bf16.msra.mxu0 0
    %3691 = vmatprep.subr.bf16.mxu0 0
    %3692 = vmatpush2.bf16.msra.mxu0 0
    %3693 = vmatprep.subr.bf16.mxu0 0
    %3694 = vmatpush2.bf16.msra.mxu0 0
    %3695 = vmatprep.subr.bf16.mxu0 0
    %3696 = vmatpush2.bf16.msra.mxu0 0
    %3697 = vmatprep.subr.bf16.mxu0 0
    %3698 = vmatpush2.bf16.msra.mxu0 0
    %3699 = vmatprep.subr.bf16.mxu0 0
    %3700 = vmatpush2.bf16.msra.mxu0 0
    %3701 = vmatprep.mubr.bf16.mxu0 0
    %3702 = vmatmul.mubr.bf16.gmra.mxu0 %v3624
    %v3703 = vpop.f32.mrf.mxu0
    %v3704 = vadd.f32 %v3394, %v3703
    %v3705 = vpop.f32.mrf.mxu0
    %v3706 = vadd.f32 %v3398, %v3705
    %v3707 = vpop.f32.mrf.mxu0
    %v3708 = vadd.f32 %v3394, %v3707
    %v3709 = vpop.f32.mrf.mxu0
    %v3710 = vadd.f32 %v3398, %v3709
    %3711 = vdwg.mxu0
    %3712 = vmatprep.subr.bf16.mxu0 0
    %3713 = vmatpush1.bf16.msra.mxu0 0
    %3714 = vmatprep.subr.bf16.mxu0 0
    %3715 = vmatpush1.bf16.msra.mxu0 0
    %3716 = vmatprep.subr.bf16.mxu0 0
    %3717 = vmatpush1.bf16.msra.mxu0 0
    %3718 = vmatprep.subr.bf16.mxu0 0
    %3719 = vmatpush1.bf16.msra.mxu0 0
    %3720 = vmatprep.subr.bf16.mxu0 0
    %3721 = vmatpush1.bf16.msra.mxu0 0
    %3722 = vmatprep.subr.bf16.mxu0 0
    %3723 = vmatpush1.bf16.msra.mxu0 0
    %3724 = vmatprep.subr.bf16.mxu0 %v3580
    %3725 = vmatpush1.bf16.msra.mxu0 %v3579
    %3726 = vmatprep.subr.bf16.mxu0 %v3564
    %3727 = vmatpush1.bf16.msra.mxu0 %v3563
    %3728 = vmatprep.subr.bf16.mxu0 0
    %3729 = vmatpush2.bf16.msra.mxu0 0
    %3730 = vmatprep.subr.bf16.mxu0 0
    %3731 = vmatpush2.bf16.msra.mxu0 0
    %3732 = vmatprep.subr.bf16.mxu0 0
    %3733 = vmatpush2.bf16.msra.mxu0 0
    %3734 = vmatprep.subr.bf16.mxu0 0
    %3735 = vmatpush2.bf16.msra.mxu0 0
    %3736 = vmatprep.subr.bf16.mxu0 0
    %3737 = vmatpush2.bf16.msra.mxu0 0
    %3738 = vmatprep.subr.bf16.mxu0 0
    %3739 = vmatpush2.bf16.msra.mxu0 0
    %3740 = vmatprep.subr.bf16.mxu0 0
    %3741 = vmatpush2.bf16.msra.mxu0 0
    %3742 = vmatprep.subr.bf16.mxu0 0
    %3743 = vmatpush2.bf16.msra.mxu0 0
    %3744 = vmatprep.mubr.bf16.mxu0 0
    %3745 = vmatmul.mubr.bf16.gmra.mxu0 %v3624
    %v3746 = vpop.f32.mrf.mxu0
    %v3747 = vadd.f32 %v3402, %v3746
    %v3748 = vpop.f32.mrf.mxu0
    %v3749 = vadd.f32 %v3406, %v3748
    %v3750 = vpop.f32.mrf.mxu0
    %v3751 = vadd.f32 %v3402, %v3750
    %v3752 = vpop.f32.mrf.mxu0
    %v3753 = vadd.f32 %v3406, %v3752
    %3754 = vdwg.mxu0
    %3755 = vmatprep.subr.bf16.mxu0 0
    %3756 = vmatpush1.bf16.msra.mxu0 0
    %3757 = vmatprep.subr.bf16.mxu0 0
    %3758 = vmatpush1.bf16.msra.mxu0 0
    %3759 = vmatprep.subr.bf16.mxu0 0
    %3760 = vmatpush1.bf16.msra.mxu0 0
    %3761 = vmatprep.subr.bf16.mxu0 0
    %3762 = vmatpush1.bf16.msra.mxu0 0
    %3763 = vmatprep.subr.bf16.mxu0 0
    %3764 = vmatpush1.bf16.msra.mxu0 0
    %3765 = vmatprep.subr.bf16.mxu0 0
    %3766 = vmatpush1.bf16.msra.mxu0 0
    %3767 = vmatprep.subr.bf16.mxu0 %v3582
    %3768 = vmatpush1.bf16.msra.mxu0 %v3581
    %3769 = vmatprep.subr.bf16.mxu0 %v3566
    %3770 = vmatpush1.bf16.msra.mxu0 %v3565
    %3771 = vmatprep.subr.bf16.mxu0 0
    %3772 = vmatpush2.bf16.msra.mxu0 0
    %3773 = vmatprep.subr.bf16.mxu0 0
    %3774 = vmatpush2.bf16.msra.mxu0 0
    %3775 = vmatprep.subr.bf16.mxu0 0
    %3776 = vmatpush2.bf16.msra.mxu0 0
    %3777 = vmatprep.subr.bf16.mxu0 0
    %3778 = vmatpush2.bf16.msra.mxu0 0
    %3779 = vmatprep.subr.bf16.mxu0 0
    %3780 = vmatpush2.bf16.msra.mxu0 0
    %3781 = vmatprep.subr.bf16.mxu0 0
    %3782 = vmatpush2.bf16.msra.mxu0 0
    %3783 = vmatprep.subr.bf16.mxu0 0
    %3784 = vmatpush2.bf16.msra.mxu0 0
    %3785 = vmatprep.subr.bf16.mxu0 0
    %3786 = vmatpush2.bf16.msra.mxu0 0
    %3787 = vmatprep.mubr.bf16.mxu0 0
    %3788 = vmatmul.mubr.bf16.gmra.mxu0 %v3624
    %v3789 = vpop.f32.mrf.mxu0
    %v3790 = vadd.f32 %v3410, %v3789
    %v3791 = vpop.f32.mrf.mxu0
    %v3792 = vadd.f32 %v3414, %v3791
    %v3793 = vpop.f32.mrf.mxu0
    %v3794 = vadd.f32 %v3410, %v3793
    %v3795 = vpop.f32.mrf.mxu0
    %v3796 = vadd.f32 %v3414, %v3795
    %3797 = vdwg.mxu0
    %3798 = vmatprep.subr.bf16.mxu0 0
    %3799 = vmatpush1.bf16.msra.mxu0 0
    %3800 = vmatprep.subr.bf16.mxu0 0
    %3801 = vmatpush1.bf16.msra.mxu0 0
    %3802 = vmatprep.subr.bf16.mxu0 0
    %3803 = vmatpush1.bf16.msra.mxu0 0
    %3804 = vmatprep.subr.bf16.mxu0 0
    %3805 = vmatpush1.bf16.msra.mxu0 0
    %3806 = vmatprep.subr.bf16.mxu0 0
    %3807 = vmatpush1.bf16.msra.mxu0 0
    %3808 = vmatprep.subr.bf16.mxu0 0
    %3809 = vmatpush1.bf16.msra.mxu0 0
    %3810 = vmatprep.subr.bf16.mxu0 %v3584
    %3811 = vmatpush1.bf16.msra.mxu0 %v3583
    %3812 = vmatprep.subr.bf16.mxu0 %v3568
    %3813 = vmatpush1.bf16.msra.mxu0 %v3567
    %3814 = vmatprep.subr.bf16.mxu0 0
    %3815 = vmatpush2.bf16.msra.mxu0 0
    %3816 = vmatprep.subr.bf16.mxu0 0
    %3817 = vmatpush2.bf16.msra.mxu0 0
    %3818 = vmatprep.subr.bf16.mxu0 0
    %3819 = vmatpush2.bf16.msra.mxu0 0
    %3820 = vmatprep.subr.bf16.mxu0 0
    %3821 = vmatpush2.bf16.msra.mxu0 0
    %3822 = vmatprep.subr.bf16.mxu0 0
    %3823 = vmatpush2.bf16.msra.mxu0 0
    %3824 = vmatprep.subr.bf16.mxu0 0
    %3825 = vmatpush2.bf16.msra.mxu0 0
    %3826 = vmatprep.subr.bf16.mxu0 0
    %3827 = vmatpush2.bf16.msra.mxu0 0
    %3828 = vmatprep.subr.bf16.mxu0 0
    %3829 = vmatpush2.bf16.msra.mxu0 0
    %3830 = vmatprep.mubr.bf16.mxu0 0
    %3831 = vmatmul.mubr.bf16.gmra.mxu0 %v3624
    %v3832 = vpop.f32.mrf.mxu0
    %v3833 = vadd.f32 %v3418, %v3832
    %v3834 = vpop.f32.mrf.mxu0
    %v3835 = vadd.f32 %v3422, %v3834
    %v3836 = vpop.f32.mrf.mxu0
    %v3837 = vadd.f32 %v3418, %v3836
    %v3838 = vpop.f32.mrf.mxu0
    %v3839 = vadd.f32 %v3422, %v3838
    %3840 = vdwg.mxu0
    %3841 = vmatprep.subr.bf16.mxu0 0
    %3842 = vmatpush1.bf16.msra.mxu0 0
    %3843 = vmatprep.subr.bf16.mxu0 0
    %3844 = vmatpush1.bf16.msra.mxu0 0
    %3845 = vmatprep.subr.bf16.mxu0 0
    %3846 = vmatpush1.bf16.msra.mxu0 0
    %3847 = vmatprep.subr.bf16.mxu0 0
    %3848 = vmatpush1.bf16.msra.mxu0 0
    %3849 = vmatprep.subr.bf16.mxu0 0
    %3850 = vmatpush1.bf16.msra.mxu0 0
    %3851 = vmatprep.subr.bf16.mxu0 0
    %3852 = vmatpush1.bf16.msra.mxu0 0
    %3853 = vmatprep.subr.bf16.mxu0 %v3586
    %3854 = vmatpush1.bf16.msra.mxu0 %v3585
    %3855 = vmatprep.subr.bf16.mxu0 %v3570
    %3856 = vmatpush1.bf16.msra.mxu0 %v3569
    %3857 = vmatprep.subr.bf16.mxu0 0
    %3858 = vmatpush2.bf16.msra.mxu0 0
    %3859 = vmatprep.subr.bf16.mxu0 0
    %3860 = vmatpush2.bf16.msra.mxu0 0
    %3861 = vmatprep.subr.bf16.mxu0 0
    %3862 = vmatpush2.bf16.msra.mxu0 0
    %3863 = vmatprep.subr.bf16.mxu0 0
    %3864 = vmatpush2.bf16.msra.mxu0 0
    %3865 = vmatprep.subr.bf16.mxu0 0
    %3866 = vmatpush2.bf16.msra.mxu0 0
    %3867 = vmatprep.subr.bf16.mxu0 0
    %3868 = vmatpush2.bf16.msra.mxu0 0
    %3869 = vmatprep.subr.bf16.mxu0 0
    %3870 = vmatpush2.bf16.msra.mxu0 0
    %3871 = vmatprep.subr.bf16.mxu0 0
    %3872 = vmatpush2.bf16.msra.mxu0 0
    %3873 = vmatprep.mubr.bf16.mxu0 0
    %3874 = vmatmul.mubr.bf16.gmra.mxu0 %v3624
    %v3875 = vpop.f32.mrf.mxu0
    %v3876 = vadd.f32 %v3426, %v3875
    %v3877 = vpop.f32.mrf.mxu0
    %v3878 = vadd.f32 %v3430, %v3877
    %v3879 = vpop.f32.mrf.mxu0
    %v3880 = vadd.f32 %v3426, %v3879
    %v3881 = vpop.f32.mrf.mxu0
    %v3882 = vadd.f32 %v3430, %v3881
    %3883 = vdwg.mxu0
    %3884 = vmatprep.subr.bf16.mxu0 0
    %3885 = vmatpush1.bf16.msra.mxu0 0
    %3886 = vmatprep.subr.bf16.mxu0 0
    %3887 = vmatpush1.bf16.msra.mxu0 0
    %3888 = vmatprep.subr.bf16.mxu0 0
    %3889 = vmatpush1.bf16.msra.mxu0 0
    %3890 = vmatprep.subr.bf16.mxu0 0
    %3891 = vmatpush1.bf16.msra.mxu0 0
    %3892 = vmatprep.subr.bf16.mxu0 0
    %3893 = vmatpush1.bf16.msra.mxu0 0
    %3894 = vmatprep.subr.bf16.mxu0 0
    %3895 = vmatpush1.bf16.msra.mxu0 0
    %3896 = vmatprep.subr.bf16.mxu0 %v3588
    %3897 = vmatpush1.bf16.msra.mxu0 %v3587
    %3898 = vmatprep.subr.bf16.mxu0 %v3572
    %3899 = vmatpush1.bf16.msra.mxu0 %v3571
    %3900 = vmatprep.subr.bf16.mxu0 0
    %3901 = vmatpush2.bf16.msra.mxu0 0
    %3902 = vmatprep.subr.bf16.mxu0 0
    %3903 = vmatpush2.bf16.msra.mxu0 0
    %3904 = vmatprep.subr.bf16.mxu0 0
    %3905 = vmatpush2.bf16.msra.mxu0 0
    %3906 = vmatprep.subr.bf16.mxu0 0
    %3907 = vmatpush2.bf16.msra.mxu0 0
    %3908 = vmatprep.subr.bf16.mxu0 0
    %3909 = vmatpush2.bf16.msra.mxu0 0
    %3910 = vmatprep.subr.bf16.mxu0 0
    %3911 = vmatpush2.bf16.msra.mxu0 0
    %3912 = vmatprep.subr.bf16.mxu0 0
    %3913 = vmatpush2.bf16.msra.mxu0 0
    %3914 = vmatprep.subr.bf16.mxu0 0
    %3915 = vmatpush2.bf16.msra.mxu0 0
    %3916 = vmatprep.mubr.bf16.mxu0 0
    %3917 = vmatmul.mubr.bf16.gmra.mxu0 %v3624
    %v3918 = vpop.f32.mrf.mxu0
    %v3919 = vadd.f32 %v3434, %v3918
    %v3920 = vpop.f32.mrf.mxu0
    %v3921 = vadd.f32 %v3438, %v3920
    %v3922 = vpop.f32.mrf.mxu0
    %v3923 = vadd.f32 %v3434, %v3922
    %v3924 = vpop.f32.mrf.mxu0
    %v3925 = vadd.f32 %v3438, %v3924
    %3926 = vdwg.mxu0
    %3927 = vmatprep.subr.bf16.mxu0 0
    %3928 = vmatpush1.bf16.msra.mxu0 0
    %3929 = vmatprep.subr.bf16.mxu0 0
    %3930 = vmatpush1.bf16.msra.mxu0 0
    %3931 = vmatprep.subr.bf16.mxu0 0
    %3932 = vmatpush1.bf16.msra.mxu0 0
    %3933 = vmatprep.subr.bf16.mxu0 0
    %3934 = vmatpush1.bf16.msra.mxu0 0
    %3935 = vmatprep.subr.bf16.mxu0 0
    %3936 = vmatpush1.bf16.msra.mxu0 0
    %3937 = vmatprep.subr.bf16.mxu0 0
    %3938 = vmatpush1.bf16.msra.mxu0 0
    %3939 = vmatprep.subr.bf16.mxu0 %v3590
    %3940 = vmatpush1.bf16.msra.mxu0 %v3589
    %3941 = vmatprep.subr.bf16.mxu0 %v3574
    %3942 = vmatpush1.bf16.msra.mxu0 %v3573
    %3943 = vmatprep.subr.bf16.mxu0 0
    %3944 = vmatpush2.bf16.msra.mxu0 0
    %3945 = vmatprep.subr.bf16.mxu0 0
    %3946 = vmatpush2.bf16.msra.mxu0 0
    %3947 = vmatprep.subr.bf16.mxu0 0
    %3948 = vmatpush2.bf16.msra.mxu0 0
    %3949 = vmatprep.subr.bf16.mxu0 0
    %3950 = vmatpush2.bf16.msra.mxu0 0
    %3951 = vmatprep.subr.bf16.mxu0 0
    %3952 = vmatpush2.bf16.msra.mxu0 0
    %3953 = vmatprep.subr.bf16.mxu0 0
    %3954 = vmatpush2.bf16.msra.mxu0 0
    %3955 = vmatprep.subr.bf16.mxu0 0
    %3956 = vmatpush2.bf16.msra.mxu0 0
    %3957 = vmatprep.subr.bf16.mxu0 0
    %3958 = vmatpush2.bf16.msra.mxu0 0
    %3959 = vmatprep.mubr.bf16.mxu0 0
    %3960 = vmatmul.mubr.bf16.gmra.mxu0 %v3624
    %v3961 = vpop.f32.mrf.mxu0
    %v3962 = vadd.f32 %v3442, %v3961
    %v3963 = vpop.f32.mrf.mxu0
    %v3964 = vadd.f32 %v3446, %v3963
    %v3965 = vpop.f32.mrf.mxu0
    %v3966 = vadd.f32 %v3442, %v3965
    %v3967 = vpop.f32.mrf.mxu0
    %v3968 = vadd.f32 %v3446, %v3967
    %3969 = vdwg.mxu0
    %v3970 = vmax.f32 %v3661, 0.0
    %v3971 = vmax.f32 %v3663, 0.0
    %v3972 = vmax.f32 %v3704, 0.0
    %v3973 = vmax.f32 %v3706, 0.0
    %v3974 = vmax.f32 %v3747, 0.0
    %v3975 = vmax.f32 %v3749, 0.0
    %v3976 = vmax.f32 %v3790, 0.0
    %v3977 = vmax.f32 %v3792, 0.0
    %v3978 = vmax.f32 %v3833, 0.0
    %v3979 = vmax.f32 %v3835, 0.0
    %v3980 = vmax.f32 %v3876, 0.0
    %v3981 = vmax.f32 %v3878, 0.0
    %v3982 = vmax.f32 %v3919, 0.0
    %v3983 = vmax.f32 %v3921, 0.0
    %v3984 = vmax.f32 %v3962, 0.0
    %v3985 = vmax.f32 %v3964, 0.0
    %v3986 = vmax.f32 %v3665, 0.0
    %v3987 = vmax.f32 %v3667, 0.0
    %v3988 = vmax.f32 %v3708, 0.0
    %v3989 = vmax.f32 %v3710, 0.0
    %v3990 = vmax.f32 %v3751, 0.0
    %v3991 = vmax.f32 %v3753, 0.0
    %v3992 = vmax.f32 %v3794, 0.0
    %v3993 = vmax.f32 %v3796, 0.0
    %v3994 = vmax.f32 %v3837, 0.0
    %v3995 = vmax.f32 %v3839, 0.0
    %v3996 = vmax.f32 %v3880, 0.0
    %v3997 = vmax.f32 %v3882, 0.0
    %v3998 = vmax.f32 %v3923, 0.0
    %v3999 = vmax.f32 %v3925, 0.0
    %v4000 = vmax.f32 %v3966, 0.0
    %v4001 = vmax.f32 %v3968, 0.0
    %v4002 = vpack.c.bf16 %v3986, %v3970
    %v4003 = vpack.c.bf16 %v3987, %v3971
    %v4004 = vpack.c.bf16 %v3988, %v3972
    %v4005 = vpack.c.bf16 %v3989, %v3973
    %v4006 = vpack.c.bf16 %v3990, %v3974
    %v4007 = vpack.c.bf16 %v3991, %v3975
    %v4008 = vpack.c.bf16 %v3992, %v3976
    %v4009 = vpack.c.bf16 %v3993, %v3977
    %v4010 = vpack.c.bf16 %v3994, %v3978
    %v4011 = vpack.c.bf16 %v3995, %v3979
    %v4012 = vpack.c.bf16 %v3996, %v3980
    %v4013 = vpack.c.bf16 %v3997, %v3981
    %v4014 = vpack.c.bf16 %v3998, %v3982
    %v4015 = vpack.c.bf16 %v3999, %v3983
    %v4016 = vpack.c.bf16 %v4000, %v3984
    %v4017 = vpack.c.bf16 %v4001, %v3985
    %v4018 = vld [vmem:[%s6] sm:$0xf]
    %v4019 = vld [vmem:[%s6 + $0x4] sm:$0xf]
    %v4020 = vld [vmem:[%s6 + $0x8] sm:$0xf]
    %v4021 = vld [vmem:[%s6 + $0xc] sm:$0xf]
    %v4022 = vld [vmem:[%s6 + $0x10] sm:$0xf]
    %v4023 = vld [vmem:[%s6 + $0x14] sm:$0xf]
    %v4024 = vld [vmem:[%s6 + $0x18] sm:$0xf]
    %v4025 = vld [vmem:[%s6 + $0x1c] sm:$0xf]
    %v4026 = vld [vmem:[%s6 + $0x20] sm:$0xf]
    %v4027 = vld [vmem:[%s6 + $0x24] sm:$0xf]
    %v4028 = vld [vmem:[%s6 + $0x28] sm:$0xf]
    %v4029 = vld [vmem:[%s6 + $0x2c] sm:$0xf]
    %v4030 = vld [vmem:[%s6 + $0x30] sm:$0xf]
    %v4031 = vld [vmem:[%s6 + $0x34] sm:$0xf]
    %v4032 = vld [vmem:[%s6 + $0x38] sm:$0xf]
    %v4033 = vld [vmem:[%s6 + $0x3c] sm:$0xf]
    %v4034 = vld [vmem:[%s6 + $0x40] sm:$0xf]
    %v4035 = vld [vmem:[%s6 + $0x44] sm:$0xf]
    %v4036 = vld [vmem:[%s6 + $0x48] sm:$0xf]
    %v4037 = vld [vmem:[%s6 + $0x4c] sm:$0xf]
    %v4038 = vld [vmem:[%s6 + $0x50] sm:$0xf]
    %v4039 = vld [vmem:[%s6 + $0x54] sm:$0xf]
    %v4040 = vld [vmem:[%s6 + $0x58] sm:$0xf]
    %v4041 = vld [vmem:[%s6 + $0x5c] sm:$0xf]
    %v4042 = vld [vmem:[%s6 + $0x60] sm:$0xf]
    %v4043 = vld [vmem:[%s6 + $0x64] sm:$0xf]
    %v4044 = vld [vmem:[%s6 + $0x68] sm:$0xf]
    %v4045 = vld [vmem:[%s6 + $0x6c] sm:$0xf]
    %v4046 = vld [vmem:[%s6 + $0x70] sm:$0xf]
    %v4047 = vld [vmem:[%s6 + $0x74] sm:$0xf]
    %v4048 = vld [vmem:[%s6 + $0x78] sm:$0xf]
    %v4049 = vld [vmem:[%s6 + $0x7c] sm:$0xf]
    %v4050 = vld [vmem:[%s6 + $0x80] sm:$0xf]
    %v4051 = vld [vmem:[%s6 + $0x84] sm:$0xf]
    %v4052 = vld [vmem:[%s6 + $0x88] sm:$0xf]
    %v4053 = vld [vmem:[%s6 + $0x8c] sm:$0xf]
    %v4054 = vld [vmem:[%s6 + $0x90] sm:$0xf]
    %v4055 = vld [vmem:[%s6 + $0x94] sm:$0xf]
    %v4056 = vld [vmem:[%s6 + $0x98] sm:$0xf]
    %v4057 = vld [vmem:[%s6 + $0x9c] sm:$0xf]
    %v4058 = vld [vmem:[%s6 + $0xa0] sm:$0xf]
    %v4059 = vld [vmem:[%s6 + $0xa4] sm:$0xf]
    %v4060 = vld [vmem:[%s6 + $0xa8] sm:$0xf]
    %v4061 = vld [vmem:[%s6 + $0xac] sm:$0xf]
    %v4062 = vld [vmem:[%s6 + $0xb0] sm:$0xf]
    %v4063 = vld [vmem:[%s6 + $0xb4] sm:$0xf]
    %v4064 = vld [vmem:[%s6 + $0xb8] sm:$0xf]
    %v4065 = vld [vmem:[%s6 + $0xbc] sm:$0xf]
    %v4066 = vld [vmem:[%s6 + $0xc0] sm:$0xf]
    %v4067 = vld [vmem:[%s6 + $0xc4] sm:$0xf]
    %v4068 = vld [vmem:[%s6 + $0xc8] sm:$0xf]
    %v4069 = vld [vmem:[%s6 + $0xcc] sm:$0xf]
    %v4070 = vld [vmem:[%s6 + $0xd0] sm:$0xf]
    %v4071 = vld [vmem:[%s6 + $0xd4] sm:$0xf]
    %v4072 = vld [vmem:[%s6 + $0xd8] sm:$0xf]
    %v4073 = vld [vmem:[%s6 + $0xdc] sm:$0xf]
    %v4074 = vld [vmem:[%s6 + $0xe0] sm:$0xf]
    %v4075 = vld [vmem:[%s6 + $0xe4] sm:$0xf]
    %v4076 = vld [vmem:[%s6 + $0xe8] sm:$0xf]
    %v4077 = vld [vmem:[%s6 + $0xec] sm:$0xf]
    %v4078 = vld [vmem:[%s6 + $0xf0] sm:$0xf]
    %v4079 = vld [vmem:[%s6 + $0xf4] sm:$0xf]
    %v4080 = vld [vmem:[%s6 + $0xf8] sm:$0xf]
    %v4081 = vld [vmem:[%s6 + $0xfc] sm:$0xf]
    %v4082 = vld [vmem:[%s6 + $0x100] sm:$0xf]
    %v4083 = vld [vmem:[%s6 + $0x104] sm:$0xf]
    %v4084 = vld [vmem:[%s6 + $0x108] sm:$0xf]
    %v4085 = vld [vmem:[%s6 + $0x10c] sm:$0xf]
    %v4086 = vld [vmem:[%s6 + $0x110] sm:$0xf]
    %v4087 = vld [vmem:[%s6 + $0x114] sm:$0xf]
    %v4088 = vld [vmem:[%s6 + $0x118] sm:$0xf]
    %v4089 = vld [vmem:[%s6 + $0x11c] sm:$0xf]
    %v4090 = vld [vmem:[%s6 + $0x120] sm:$0xf]
    %v4091 = vld [vmem:[%s6 + $0x124] sm:$0xf]
    %v4092 = vld [vmem:[%s6 + $0x128] sm:$0xf]
    %v4093 = vld [vmem:[%s6 + $0x12c] sm:$0xf]
    %v4094 = vld [vmem:[%s6 + $0x130] sm:$0xf]
    %v4095 = vld [vmem:[%s6 + $0x134] sm:$0xf]
    %v4096 = vld [vmem:[%s6 + $0x138] sm:$0xf]
    %v4097 = vld [vmem:[%s6 + $0x13c] sm:$0xf]
    %v4098 = vld [vmem:[%s6 + $0x140] sm:$0xf]
    %v4099 = vld [vmem:[%s6 + $0x144] sm:$0xf]
    %v4100 = vld [vmem:[%s6 + $0x148] sm:$0xf]
    %v4101 = vld [vmem:[%s6 + $0x14c] sm:$0xf]
    %v4102 = vld [vmem:[%s6 + $0x150] sm:$0xf]
    %v4103 = vld [vmem:[%s6 + $0x154] sm:$0xf]
    %v4104 = vld [vmem:[%s6 + $0x158] sm:$0xf]
    %v4105 = vld [vmem:[%s6 + $0x15c] sm:$0xf]
    %v4106 = vld [vmem:[%s6 + $0x160] sm:$0xf]
    %v4107 = vld [vmem:[%s6 + $0x164] sm:$0xf]
    %v4108 = vld [vmem:[%s6 + $0x168] sm:$0xf]
    %v4109 = vld [vmem:[%s6 + $0x16c] sm:$0xf]
    %v4110 = vld [vmem:[%s6 + $0x170] sm:$0xf]
    %v4111 = vld [vmem:[%s6 + $0x174] sm:$0xf]
    %v4112 = vld [vmem:[%s6 + $0x178] sm:$0xf]
    %v4113 = vld [vmem:[%s6 + $0x17c] sm:$0xf]
    %v4114 = vld [vmem:[%s6 + $0x180] sm:$0xf]
    %v4115 = vld [vmem:[%s6 + $0x184] sm:$0xf]
    %v4116 = vld [vmem:[%s6 + $0x188] sm:$0xf]
    %v4117 = vld [vmem:[%s6 + $0x18c] sm:$0xf]
    %v4118 = vld [vmem:[%s6 + $0x190] sm:$0xf]
    %v4119 = vld [vmem:[%s6 + $0x194] sm:$0xf]
    %v4120 = vld [vmem:[%s6 + $0x198] sm:$0xf]
    %v4121 = vld [vmem:[%s6 + $0x19c] sm:$0xf]
    %v4122 = vld [vmem:[%s6 + $0x1a0] sm:$0xf]
    %v4123 = vld [vmem:[%s6 + $0x1a4] sm:$0xf]
    %v4124 = vld [vmem:[%s6 + $0x1a8] sm:$0xf]
    %v4125 = vld [vmem:[%s6 + $0x1ac] sm:$0xf]
    %v4126 = vld [vmem:[%s6 + $0x1b0] sm:$0xf]
    %v4127 = vld [vmem:[%s6 + $0x1b4] sm:$0xf]
    %v4128 = vld [vmem:[%s6 + $0x1b8] sm:$0xf]
    %v4129 = vld [vmem:[%s6 + $0x1bc] sm:$0xf]
    %v4130 = vld [vmem:[%s6 + $0x1c0] sm:$0xf]
    %v4131 = vld [vmem:[%s6 + $0x1c4] sm:$0xf]
    %v4132 = vld [vmem:[%s6 + $0x1c8] sm:$0xf]
    %v4133 = vld [vmem:[%s6 + $0x1cc] sm:$0xf]
    %v4134 = vld [vmem:[%s6 + $0x1d0] sm:$0xf]
    %v4135 = vld [vmem:[%s6 + $0x1d4] sm:$0xf]
    %v4136 = vld [vmem:[%s6 + $0x1d8] sm:$0xf]
    %v4137 = vld [vmem:[%s6 + $0x1dc] sm:$0xf]
    %v4138 = vld [vmem:[%s6 + $0x1e0] sm:$0xf]
    %v4139 = vld [vmem:[%s6 + $0x1e4] sm:$0xf]
    %v4140 = vld [vmem:[%s6 + $0x1e8] sm:$0xf]
    %v4141 = vld [vmem:[%s6 + $0x1ec] sm:$0xf]
    %v4142 = vld [vmem:[%s6 + $0x1f0] sm:$0xf]
    %v4143 = vld [vmem:[%s6 + $0x1f4] sm:$0xf]
    %v4144 = vld [vmem:[%s6 + $0x1f8] sm:$0xf]
    %v4145 = vld [vmem:[%s6 + $0x1fc] sm:$0xf]
    %v4146 = vld [vmem:[%s6 + $0x200] sm:$0xf]
    %v4147 = vld [vmem:[%s6 + $0x204] sm:$0xf]
    %v4148 = vld [vmem:[%s6 + $0x208] sm:$0xf]
    %v4149 = vld [vmem:[%s6 + $0x20c] sm:$0xf]
    %v4150 = vld [vmem:[%s6 + $0x210] sm:$0xf]
    %v4151 = vld [vmem:[%s6 + $0x214] sm:$0xf]
    %v4152 = vld [vmem:[%s6 + $0x218] sm:$0xf]
    %v4153 = vld [vmem:[%s6 + $0x21c] sm:$0xf]
    %v4154 = vld [vmem:[%s6 + $0x220] sm:$0xf]
    %v4155 = vld [vmem:[%s6 + $0x224] sm:$0xf]
    %v4156 = vld [vmem:[%s6 + $0x228] sm:$0xf]
    %v4157 = vld [vmem:[%s6 + $0x22c] sm:$0xf]
    %v4158 = vld [vmem:[%s6 + $0x230] sm:$0xf]
    %v4159 = vld [vmem:[%s6 + $0x234] sm:$0xf]
    %v4160 = vld [vmem:[%s6 + $0x238] sm:$0xf]
    %v4161 = vld [vmem:[%s6 + $0x23c] sm:$0xf]
    %v4162 = vld [vmem:[%s6 + $0x240] sm:$0xf]
    %v4163 = vld [vmem:[%s6 + $0x244] sm:$0xf]
    %v4164 = vld [vmem:[%s6 + $0x248] sm:$0xf]
    %v4165 = vld [vmem:[%s6 + $0x24c] sm:$0xf]
    %v4166 = vld [vmem:[%s6 + $0x250] sm:$0xf]
    %v4167 = vld [vmem:[%s6 + $0x254] sm:$0xf]
    %v4168 = vld [vmem:[%s6 + $0x258] sm:$0xf]
    %v4169 = vld [vmem:[%s6 + $0x25c] sm:$0xf]
    %v4170 = vld [vmem:[%s6 + $0x260] sm:$0xf]
    %v4171 = vld [vmem:[%s6 + $0x264] sm:$0xf]
    %v4172 = vld [vmem:[%s6 + $0x268] sm:$0xf]
    %v4173 = vld [vmem:[%s6 + $0x26c] sm:$0xf]
    %v4174 = vld [vmem:[%s6 + $0x270] sm:$0xf]
    %v4175 = vld [vmem:[%s6 + $0x274] sm:$0xf]
    %v4176 = vld [vmem:[%s6 + $0x278] sm:$0xf]
    %v4177 = vld [vmem:[%s6 + $0x27c] sm:$0xf]
    %v4178 = vld [vmem:[%s6 + $0x280] sm:$0xf]
    %v4179 = vld [vmem:[%s6 + $0x284] sm:$0xf]
    %v4180 = vld [vmem:[%s6 + $0x288] sm:$0xf]
    %v4181 = vld [vmem:[%s6 + $0x28c] sm:$0xf]
    %v4182 = vld [vmem:[%s6 + $0x290] sm:$0xf]
    %v4183 = vld [vmem:[%s6 + $0x294] sm:$0xf]
    %v4184 = vld [vmem:[%s6 + $0x298] sm:$0xf]
    %v4185 = vld [vmem:[%s6 + $0x29c] sm:$0xf]
    %v4186 = vld [vmem:[%s6 + $0x2a0] sm:$0xf]
    %v4187 = vld [vmem:[%s6 + $0x2a4] sm:$0xf]
    %v4188 = vld [vmem:[%s6 + $0x2a8] sm:$0xf]
    %v4189 = vld [vmem:[%s6 + $0x2ac] sm:$0xf]
    %v4190 = vld [vmem:[%s6 + $0x2b0] sm:$0xf]
    %v4191 = vld [vmem:[%s6 + $0x2b4] sm:$0xf]
    %v4192 = vld [vmem:[%s6 + $0x2b8] sm:$0xf]
    %v4193 = vld [vmem:[%s6 + $0x2bc] sm:$0xf]
    %v4194 = vld [vmem:[%s6 + $0x2c0] sm:$0xf]
    %v4195 = vld [vmem:[%s6 + $0x2c4] sm:$0xf]
    %v4196 = vld [vmem:[%s6 + $0x2c8] sm:$0xf]
    %v4197 = vld [vmem:[%s6 + $0x2cc] sm:$0xf]
    %v4198 = vld [vmem:[%s6 + $0x2d0] sm:$0xf]
    %v4199 = vld [vmem:[%s6 + $0x2d4] sm:$0xf]
    %v4200 = vld [vmem:[%s6 + $0x2d8] sm:$0xf]
    %v4201 = vld [vmem:[%s6 + $0x2dc] sm:$0xf]
    %v4202 = vld [vmem:[%s6 + $0x2e0] sm:$0xf]
    %v4203 = vld [vmem:[%s6 + $0x2e4] sm:$0xf]
    %v4204 = vld [vmem:[%s6 + $0x2e8] sm:$0xf]
    %v4205 = vld [vmem:[%s6 + $0x2ec] sm:$0xf]
    %v4206 = vld [vmem:[%s6 + $0x2f0] sm:$0xf]
    %v4207 = vld [vmem:[%s6 + $0x2f4] sm:$0xf]
    %v4208 = vld [vmem:[%s6 + $0x2f8] sm:$0xf]
    %v4209 = vld [vmem:[%s6 + $0x2fc] sm:$0xf]
    %v4210 = vld [vmem:[%s6 + $0x300] sm:$0xf]
    %v4211 = vld [vmem:[%s6 + $0x304] sm:$0xf]
    %v4212 = vld [vmem:[%s6 + $0x308] sm:$0xf]
    %v4213 = vld [vmem:[%s6 + $0x30c] sm:$0xf]
    %v4214 = vld [vmem:[%s6 + $0x310] sm:$0xf]
    %v4215 = vld [vmem:[%s6 + $0x314] sm:$0xf]
    %v4216 = vld [vmem:[%s6 + $0x318] sm:$0xf]
    %v4217 = vld [vmem:[%s6 + $0x31c] sm:$0xf]
    %v4218 = vld [vmem:[%s6 + $0x320] sm:$0xf]
    %v4219 = vld [vmem:[%s6 + $0x324] sm:$0xf]
    %v4220 = vld [vmem:[%s6 + $0x328] sm:$0xf]
    %v4221 = vld [vmem:[%s6 + $0x32c] sm:$0xf]
    %v4222 = vld [vmem:[%s6 + $0x330] sm:$0xf]
    %v4223 = vld [vmem:[%s6 + $0x334] sm:$0xf]
    %v4224 = vld [vmem:[%s6 + $0x338] sm:$0xf]
    %v4225 = vld [vmem:[%s6 + $0x33c] sm:$0xf]
    %v4226 = vld [vmem:[%s6 + $0x340] sm:$0xf]
    %v4227 = vld [vmem:[%s6 + $0x344] sm:$0xf]
    %v4228 = vld [vmem:[%s6 + $0x348] sm:$0xf]
    %v4229 = vld [vmem:[%s6 + $0x34c] sm:$0xf]
    %v4230 = vld [vmem:[%s6 + $0x350] sm:$0xf]
    %v4231 = vld [vmem:[%s6 + $0x354] sm:$0xf]
    %v4232 = vld [vmem:[%s6 + $0x358] sm:$0xf]
    %v4233 = vld [vmem:[%s6 + $0x35c] sm:$0xf]
    %v4234 = vld [vmem:[%s6 + $0x360] sm:$0xf]
    %v4235 = vld [vmem:[%s6 + $0x364] sm:$0xf]
    %v4236 = vld [vmem:[%s6 + $0x368] sm:$0xf]
    %v4237 = vld [vmem:[%s6 + $0x36c] sm:$0xf]
    %v4238 = vld [vmem:[%s6 + $0x370] sm:$0xf]
    %v4239 = vld [vmem:[%s6 + $0x374] sm:$0xf]
    %v4240 = vld [vmem:[%s6 + $0x378] sm:$0xf]
    %v4241 = vld [vmem:[%s6 + $0x37c] sm:$0xf]
    %v4242 = vld [vmem:[%s6 + $0x380] sm:$0xf]
    %v4243 = vld [vmem:[%s6 + $0x384] sm:$0xf]
    %v4244 = vld [vmem:[%s6 + $0x388] sm:$0xf]
    %v4245 = vld [vmem:[%s6 + $0x38c] sm:$0xf]
    %v4246 = vld [vmem:[%s6 + $0x390] sm:$0xf]
    %v4247 = vld [vmem:[%s6 + $0x394] sm:$0xf]
    %v4248 = vld [vmem:[%s6 + $0x398] sm:$0xf]
    %v4249 = vld [vmem:[%s6 + $0x39c] sm:$0xf]
    %v4250 = vld [vmem:[%s6 + $0x3a0] sm:$0xf]
    %v4251 = vld [vmem:[%s6 + $0x3a4] sm:$0xf]
    %v4252 = vld [vmem:[%s6 + $0x3a8] sm:$0xf]
    %v4253 = vld [vmem:[%s6 + $0x3ac] sm:$0xf]
    %v4254 = vld [vmem:[%s6 + $0x3b0] sm:$0xf]
    %v4255 = vld [vmem:[%s6 + $0x3b4] sm:$0xf]
    %v4256 = vld [vmem:[%s6 + $0x3b8] sm:$0xf]
    %v4257 = vld [vmem:[%s6 + $0x3bc] sm:$0xf]
    %v4258 = vld [vmem:[%s6 + $0x3c0] sm:$0xf]
    %v4259 = vld [vmem:[%s6 + $0x3c4] sm:$0xf]
    %v4260 = vld [vmem:[%s6 + $0x3c8] sm:$0xf]
    %v4261 = vld [vmem:[%s6 + $0x3cc] sm:$0xf]
    %v4262 = vld [vmem:[%s6 + $0x3d0] sm:$0xf]
    %v4263 = vld [vmem:[%s6 + $0x3d4] sm:$0xf]
    %v4264 = vld [vmem:[%s6 + $0x3d8] sm:$0xf]
    %v4265 = vld [vmem:[%s6 + $0x3dc] sm:$0xf]
    %v4266 = vld [vmem:[%s6 + $0x3e0] sm:$0xf]
    %v4267 = vld [vmem:[%s6 + $0x3e4] sm:$0xf]
    %v4268 = vld [vmem:[%s6 + $0x3e8] sm:$0xf]
    %v4269 = vld [vmem:[%s6 + $0x3ec] sm:$0xf]
    %v4270 = vld [vmem:[%s6 + $0x3f0] sm:$0xf]
    %v4271 = vld [vmem:[%s6 + $0x3f4] sm:$0xf]
    %v4272 = vld [vmem:[%s6 + $0x3f8] sm:$0xf]
    %v4273 = vld [vmem:[%s6 + $0x3fc] sm:$0xf]
    %v4274 = vlaneseq
    %v4275 = vshrl.u32 %v4274, 7
    %v4276 = vsub.s32 0, %v4275
    %v4277 = vrot.slane %v68, %v4276
    %v4534 = vunpack.c.l.b16 %v4018
    %v4535 = vunpack.c.l.b16 %v4019
    %v4536 = vunpack.c.l.b16 %v4020
    %v4537 = vunpack.c.l.b16 %v4021
    %v4538 = vunpack.c.l.b16 %v4022
    %v4539 = vunpack.c.l.b16 %v4023
    %v4540 = vunpack.c.l.b16 %v4024
    %v4541 = vunpack.c.l.b16 %v4025
    %v4542 = vunpack.c.l.b16 %v4026
    %v4543 = vunpack.c.l.b16 %v4027
    %v4544 = vunpack.c.l.b16 %v4028
    %v4545 = vunpack.c.l.b16 %v4029
    %v4546 = vunpack.c.l.b16 %v4030
    %v4547 = vunpack.c.l.b16 %v4031
    %v4548 = vunpack.c.l.b16 %v4032
    %v4549 = vunpack.c.l.b16 %v4033
    %v4550 = vunpack.c.l.b16 %v4034
    %v4551 = vunpack.c.l.b16 %v4035
    %v4552 = vunpack.c.l.b16 %v4036
    %v4553 = vunpack.c.l.b16 %v4037
    %v4554 = vunpack.c.l.b16 %v4038
    %v4555 = vunpack.c.l.b16 %v4039
    %v4556 = vunpack.c.l.b16 %v4040
    %v4557 = vunpack.c.l.b16 %v4041
    %v4558 = vunpack.c.l.b16 %v4042
    %v4559 = vunpack.c.l.b16 %v4043
    %v4560 = vunpack.c.l.b16 %v4044
    %v4561 = vunpack.c.l.b16 %v4045
    %v4562 = vunpack.c.l.b16 %v4046
    %v4563 = vunpack.c.l.b16 %v4047
    %v4564 = vunpack.c.l.b16 %v4048
    %v4565 = vunpack.c.l.b16 %v4049
    %v4566 = vunpack.c.l.b16 %v4050
    %v4567 = vunpack.c.l.b16 %v4051
    %v4568 = vunpack.c.l.b16 %v4052
    %v4569 = vunpack.c.l.b16 %v4053
    %v4570 = vunpack.c.l.b16 %v4054
    %v4571 = vunpack.c.l.b16 %v4055
    %v4572 = vunpack.c.l.b16 %v4056
    %v4573 = vunpack.c.l.b16 %v4057
    %v4574 = vunpack.c.l.b16 %v4058
    %v4575 = vunpack.c.l.b16 %v4059
    %v4576 = vunpack.c.l.b16 %v4060
    %v4577 = vunpack.c.l.b16 %v4061
    %v4578 = vunpack.c.l.b16 %v4062
    %v4579 = vunpack.c.l.b16 %v4063
    %v4580 = vunpack.c.l.b16 %v4064
    %v4581 = vunpack.c.l.b16 %v4065
    %v4582 = vunpack.c.l.b16 %v4066
    %v4583 = vunpack.c.l.b16 %v4067
    %v4584 = vunpack.c.l.b16 %v4068
    %v4585 = vunpack.c.l.b16 %v4069
    %v4586 = vunpack.c.l.b16 %v4070
    %v4587 = vunpack.c.l.b16 %v4071
    %v4588 = vunpack.c.l.b16 %v4072
    %v4589 = vunpack.c.l.b16 %v4073
    %v4590 = vunpack.c.l.b16 %v4074
    %v4591 = vunpack.c.l.b16 %v4075
    %v4592 = vunpack.c.l.b16 %v4076
    %v4593 = vunpack.c.l.b16 %v4077
    %v4594 = vunpack.c.l.b16 %v4078
    %v4595 = vunpack.c.l.b16 %v4079
    %v4596 = vunpack.c.l.b16 %v4080
    %v4597 = vunpack.c.l.b16 %v4081
    %v4598 = vunpack.c.l.b16 %v4082
    %v4599 = vunpack.c.l.b16 %v4083
    %v4600 = vunpack.c.l.b16 %v4084
    %v4601 = vunpack.c.l.b16 %v4085
    %v4602 = vunpack.c.l.b16 %v4086
    %v4603 = vunpack.c.l.b16 %v4087
    %v4604 = vunpack.c.l.b16 %v4088
    %v4605 = vunpack.c.l.b16 %v4089
    %v4606 = vunpack.c.l.b16 %v4090
    %v4607 = vunpack.c.l.b16 %v4091
    %v4608 = vunpack.c.l.b16 %v4092
    %v4609 = vunpack.c.l.b16 %v4093
    %v4610 = vunpack.c.l.b16 %v4094
    %v4611 = vunpack.c.l.b16 %v4095
    %v4612 = vunpack.c.l.b16 %v4096
    %v4613 = vunpack.c.l.b16 %v4097
    %v4614 = vunpack.c.l.b16 %v4098
    %v4615 = vunpack.c.l.b16 %v4099
    %v4616 = vunpack.c.l.b16 %v4100
    %v4617 = vunpack.c.l.b16 %v4101
    %v4618 = vunpack.c.l.b16 %v4102
    %v4619 = vunpack.c.l.b16 %v4103
    %v4620 = vunpack.c.l.b16 %v4104
    %v4621 = vunpack.c.l.b16 %v4105
    %v4622 = vunpack.c.l.b16 %v4106
    %v4623 = vunpack.c.l.b16 %v4107
    %v4624 = vunpack.c.l.b16 %v4108
    %v4625 = vunpack.c.l.b16 %v4109
    %v4626 = vunpack.c.l.b16 %v4110
    %v4627 = vunpack.c.l.b16 %v4111
    %v4628 = vunpack.c.l.b16 %v4112
    %v4629 = vunpack.c.l.b16 %v4113
    %v4630 = vunpack.c.l.b16 %v4114
    %v4631 = vunpack.c.l.b16 %v4115
    %v4632 = vunpack.c.l.b16 %v4116
    %v4633 = vunpack.c.l.b16 %v4117
    %v4634 = vunpack.c.l.b16 %v4118
    %v4635 = vunpack.c.l.b16 %v4119
    %v4636 = vunpack.c.l.b16 %v4120
    %v4637 = vunpack.c.l.b16 %v4121
    %v4638 = vunpack.c.l.b16 %v4122
    %v4639 = vunpack.c.l.b16 %v4123
    %v4640 = vunpack.c.l.b16 %v4124
    %v4641 = vunpack.c.l.b16 %v4125
    %v4642 = vunpack.c.l.b16 %v4126
    %v4643 = vunpack.c.l.b16 %v4127
    %v4644 = vunpack.c.l.b16 %v4128
    %v4645 = vunpack.c.l.b16 %v4129
    %v4646 = vunpack.c.l.b16 %v4130
    %v4647 = vunpack.c.l.b16 %v4131
    %v4648 = vunpack.c.l.b16 %v4132
    %v4649 = vunpack.c.l.b16 %v4133
    %v4650 = vunpack.c.l.b16 %v4134
    %v4651 = vunpack.c.l.b16 %v4135
    %v4652 = vunpack.c.l.b16 %v4136
    %v4653 = vunpack.c.l.b16 %v4137
    %v4654 = vunpack.c.l.b16 %v4138
    %v4655 = vunpack.c.l.b16 %v4139
    %v4656 = vunpack.c.l.b16 %v4140
    %v4657 = vunpack.c.l.b16 %v4141
    %v4658 = vunpack.c.l.b16 %v4142
    %v4659 = vunpack.c.l.b16 %v4143
    %v4660 = vunpack.c.l.b16 %v4144
    %v4661 = vunpack.c.l.b16 %v4145
    %v4662 = vunpack.c.l.b16 %v4146
    %v4663 = vunpack.c.l.b16 %v4147
    %v4664 = vunpack.c.l.b16 %v4148
    %v4665 = vunpack.c.l.b16 %v4149
    %v4666 = vunpack.c.l.b16 %v4150
    %v4667 = vunpack.c.l.b16 %v4151
    %v4668 = vunpack.c.l.b16 %v4152
    %v4669 = vunpack.c.l.b16 %v4153
    %v4670 = vunpack.c.l.b16 %v4154
    %v4671 = vunpack.c.l.b16 %v4155
    %v4672 = vunpack.c.l.b16 %v4156
    %v4673 = vunpack.c.l.b16 %v4157
    %v4674 = vunpack.c.l.b16 %v4158
    %v4675 = vunpack.c.l.b16 %v4159
    %v4676 = vunpack.c.l.b16 %v4160
    %v4677 = vunpack.c.l.b16 %v4161
    %v4678 = vunpack.c.l.b16 %v4162
    %v4679 = vunpack.c.l.b16 %v4163
    %v4680 = vunpack.c.l.b16 %v4164
    %v4681 = vunpack.c.l.b16 %v4165
    %v4682 = vunpack.c.l.b16 %v4166
    %v4683 = vunpack.c.l.b16 %v4167
    %v4684 = vunpack.c.l.b16 %v4168
    %v4685 = vunpack.c.l.b16 %v4169
    %v4686 = vunpack.c.l.b16 %v4170
    %v4687 = vunpack.c.l.b16 %v4171
    %v4688 = vunpack.c.l.b16 %v4172
    %v4689 = vunpack.c.l.b16 %v4173
    %v4690 = vunpack.c.l.b16 %v4174
    %v4691 = vunpack.c.l.b16 %v4175
    %v4692 = vunpack.c.l.b16 %v4176
    %v4693 = vunpack.c.l.b16 %v4177
    %v4694 = vunpack.c.l.b16 %v4178
    %v4695 = vunpack.c.l.b16 %v4179
    %v4696 = vunpack.c.l.b16 %v4180
    %v4697 = vunpack.c.l.b16 %v4181
    %v4698 = vunpack.c.l.b16 %v4182
    %v4699 = vunpack.c.l.b16 %v4183
    %v4700 = vunpack.c.l.b16 %v4184
    %v4701 = vunpack.c.l.b16 %v4185
    %v4702 = vunpack.c.l.b16 %v4186
    %v4703 = vunpack.c.l.b16 %v4187
    %v4704 = vunpack.c.l.b16 %v4188
    %v4705 = vunpack.c.l.b16 %v4189
    %v4706 = vunpack.c.l.b16 %v4190
    %v4707 = vunpack.c.l.b16 %v4191
    %v4708 = vunpack.c.l.b16 %v4192
    %v4709 = vunpack.c.l.b16 %v4193
    %v4710 = vunpack.c.l.b16 %v4194
    %v4711 = vunpack.c.l.b16 %v4195
    %v4712 = vunpack.c.l.b16 %v4196
    %v4713 = vunpack.c.l.b16 %v4197
    %v4714 = vunpack.c.l.b16 %v4198
    %v4715 = vunpack.c.l.b16 %v4199
    %v4716 = vunpack.c.l.b16 %v4200
    %v4717 = vunpack.c.l.b16 %v4201
    %v4718 = vunpack.c.l.b16 %v4202
    %v4719 = vunpack.c.l.b16 %v4203
    %v4720 = vunpack.c.l.b16 %v4204
    %v4721 = vunpack.c.l.b16 %v4205
    %v4722 = vunpack.c.l.b16 %v4206
    %v4723 = vunpack.c.l.b16 %v4207
    %v4724 = vunpack.c.l.b16 %v4208
    %v4725 = vunpack.c.l.b16 %v4209
    %v4726 = vunpack.c.l.b16 %v4210
    %v4727 = vunpack.c.l.b16 %v4211
    %v4728 = vunpack.c.l.b16 %v4212
    %v4729 = vunpack.c.l.b16 %v4213
    %v4730 = vunpack.c.l.b16 %v4214
    %v4731 = vunpack.c.l.b16 %v4215
    %v4732 = vunpack.c.l.b16 %v4216
    %v4733 = vunpack.c.l.b16 %v4217
    %v4734 = vunpack.c.l.b16 %v4218
    %v4735 = vunpack.c.l.b16 %v4219
    %v4736 = vunpack.c.l.b16 %v4220
    %v4737 = vunpack.c.l.b16 %v4221
    %v4738 = vunpack.c.l.b16 %v4222
    %v4739 = vunpack.c.l.b16 %v4223
    %v4740 = vunpack.c.l.b16 %v4224
    %v4741 = vunpack.c.l.b16 %v4225
    %v4742 = vunpack.c.l.b16 %v4226
    %v4743 = vunpack.c.l.b16 %v4227
    %v4744 = vunpack.c.l.b16 %v4228
    %v4745 = vunpack.c.l.b16 %v4229
    %v4746 = vunpack.c.l.b16 %v4230
    %v4747 = vunpack.c.l.b16 %v4231
    %v4748 = vunpack.c.l.b16 %v4232
    %v4749 = vunpack.c.l.b16 %v4233
    %v4750 = vunpack.c.l.b16 %v4234
    %v4751 = vunpack.c.l.b16 %v4235
    %v4752 = vunpack.c.l.b16 %v4236
    %v4753 = vunpack.c.l.b16 %v4237
    %v4754 = vunpack.c.l.b16 %v4238
    %v4755 = vunpack.c.l.b16 %v4239
    %v4756 = vunpack.c.l.b16 %v4240
    %v4757 = vunpack.c.l.b16 %v4241
    %v4758 = vunpack.c.l.b16 %v4242
    %v4759 = vunpack.c.l.b16 %v4243
    %v4760 = vunpack.c.l.b16 %v4244
    %v4761 = vunpack.c.l.b16 %v4245
    %v4762 = vunpack.c.l.b16 %v4246
    %v4763 = vunpack.c.l.b16 %v4247
    %v4764 = vunpack.c.l.b16 %v4248
    %v4765 = vunpack.c.l.b16 %v4249
    %v4766 = vunpack.c.l.b16 %v4250
    %v4767 = vunpack.c.l.b16 %v4251
    %v4768 = vunpack.c.l.b16 %v4252
    %v4769 = vunpack.c.l.b16 %v4253
    %v4770 = vunpack.c.l.b16 %v4254
    %v4771 = vunpack.c.l.b16 %v4255
    %v4772 = vunpack.c.l.b16 %v4256
    %v4773 = vunpack.c.l.b16 %v4257
    %v4774 = vunpack.c.l.b16 %v4258
    %v4775 = vunpack.c.l.b16 %v4259
    %v4776 = vunpack.c.l.b16 %v4260
    %v4777 = vunpack.c.l.b16 %v4261
    %v4778 = vunpack.c.l.b16 %v4262
    %v4779 = vunpack.c.l.b16 %v4263
    %v4780 = vunpack.c.l.b16 %v4264
    %v4781 = vunpack.c.l.b16 %v4265
    %v4782 = vunpack.c.l.b16 %v4266
    %v4783 = vunpack.c.l.b16 %v4267
    %v4784 = vunpack.c.l.b16 %v4268
    %v4785 = vunpack.c.l.b16 %v4269
    %v4786 = vunpack.c.l.b16 %v4270
    %v4787 = vunpack.c.l.b16 %v4271
    %v4788 = vunpack.c.l.b16 %v4272
    %v4789 = vunpack.c.l.b16 %v4273
    %v4790 = vpack.c.b16 %v4535, %v4534
    %v4791 = vpack.c.b16 %v4537, %v4536
    %v4792 = vpack.c.b16 %v4539, %v4538
    %v4793 = vpack.c.b16 %v4541, %v4540
    %v4794 = vpack.c.b16 %v4543, %v4542
    %v4795 = vpack.c.b16 %v4545, %v4544
    %v4796 = vpack.c.b16 %v4547, %v4546
    %v4797 = vpack.c.b16 %v4549, %v4548
    %v4798 = vpack.c.b16 %v4551, %v4550
    %v4799 = vpack.c.b16 %v4553, %v4552
    %v4800 = vpack.c.b16 %v4555, %v4554
    %v4801 = vpack.c.b16 %v4557, %v4556
    %v4802 = vpack.c.b16 %v4559, %v4558
    %v4803 = vpack.c.b16 %v4561, %v4560
    %v4804 = vpack.c.b16 %v4563, %v4562
    %v4805 = vpack.c.b16 %v4565, %v4564
    %v4806 = vpack.c.b16 %v4567, %v4566
    %v4807 = vpack.c.b16 %v4569, %v4568
    %v4808 = vpack.c.b16 %v4571, %v4570
    %v4809 = vpack.c.b16 %v4573, %v4572
    %v4810 = vpack.c.b16 %v4575, %v4574
    %v4811 = vpack.c.b16 %v4577, %v4576
    %v4812 = vpack.c.b16 %v4579, %v4578
    %v4813 = vpack.c.b16 %v4581, %v4580
    %v4814 = vpack.c.b16 %v4583, %v4582
    %v4815 = vpack.c.b16 %v4585, %v4584
    %v4816 = vpack.c.b16 %v4587, %v4586
    %v4817 = vpack.c.b16 %v4589, %v4588
    %v4818 = vpack.c.b16 %v4591, %v4590
    %v4819 = vpack.c.b16 %v4593, %v4592
    %v4820 = vpack.c.b16 %v4595, %v4594
    %v4821 = vpack.c.b16 %v4597, %v4596
    %v4822 = vpack.c.b16 %v4599, %v4598
    %v4823 = vpack.c.b16 %v4601, %v4600
    %v4824 = vpack.c.b16 %v4603, %v4602
    %v4825 = vpack.c.b16 %v4605, %v4604
    %v4826 = vpack.c.b16 %v4607, %v4606
    %v4827 = vpack.c.b16 %v4609, %v4608
    %v4828 = vpack.c.b16 %v4611, %v4610
    %v4829 = vpack.c.b16 %v4613, %v4612
    %v4830 = vpack.c.b16 %v4615, %v4614
    %v4831 = vpack.c.b16 %v4617, %v4616
    %v4832 = vpack.c.b16 %v4619, %v4618
    %v4833 = vpack.c.b16 %v4621, %v4620
    %v4834 = vpack.c.b16 %v4623, %v4622
    %v4835 = vpack.c.b16 %v4625, %v4624
    %v4836 = vpack.c.b16 %v4627, %v4626
    %v4837 = vpack.c.b16 %v4629, %v4628
    %v4838 = vpack.c.b16 %v4631, %v4630
    %v4839 = vpack.c.b16 %v4633, %v4632
    %v4840 = vpack.c.b16 %v4635, %v4634
    %v4841 = vpack.c.b16 %v4637, %v4636
    %v4842 = vpack.c.b16 %v4639, %v4638
    %v4843 = vpack.c.b16 %v4641, %v4640
    %v4844 = vpack.c.b16 %v4643, %v4642
    %v4845 = vpack.c.b16 %v4645, %v4644
    %v4846 = vpack.c.b16 %v4647, %v4646
    %v4847 = vpack.c.b16 %v4649, %v4648
    %v4848 = vpack.c.b16 %v4651, %v4650
    %v4849 = vpack.c.b16 %v4653, %v4652
    %v4850 = vpack.c.b16 %v4655, %v4654
    %v4851 = vpack.c.b16 %v4657, %v4656
    %v4852 = vpack.c.b16 %v4659, %v4658
    %v4853 = vpack.c.b16 %v4661, %v4660
    %v4854 = vpack.c.b16 %v4663, %v4662
    %v4855 = vpack.c.b16 %v4665, %v4664
    %v4856 = vpack.c.b16 %v4667, %v4666
    %v4857 = vpack.c.b16 %v4669, %v4668
    %v4858 = vpack.c.b16 %v4671, %v4670
    %v4859 = vpack.c.b16 %v4673, %v4672
    %v4860 = vpack.c.b16 %v4675, %v4674
    %v4861 = vpack.c.b16 %v4677, %v4676
    %v4862 = vpack.c.b16 %v4679, %v4678
    %v4863 = vpack.c.b16 %v4681, %v4680
    %v4864 = vpack.c.b16 %v4683, %v4682
    %v4865 = vpack.c.b16 %v4685, %v4684
    %v4866 = vpack.c.b16 %v4687, %v4686
    %v4867 = vpack.c.b16 %v4689, %v4688
    %v4868 = vpack.c.b16 %v4691, %v4690
    %v4869 = vpack.c.b16 %v4693, %v4692
    %v4870 = vpack.c.b16 %v4695, %v4694
    %v4871 = vpack.c.b16 %v4697, %v4696
    %v4872 = vpack.c.b16 %v4699, %v4698
    %v4873 = vpack.c.b16 %v4701, %v4700
    %v4874 = vpack.c.b16 %v4703, %v4702
    %v4875 = vpack.c.b16 %v4705, %v4704
    %v4876 = vpack.c.b16 %v4707, %v4706
    %v4877 = vpack.c.b16 %v4709, %v4708
    %v4878 = vpack.c.b16 %v4711, %v4710
    %v4879 = vpack.c.b16 %v4713, %v4712
    %v4880 = vpack.c.b16 %v4715, %v4714
    %v4881 = vpack.c.b16 %v4717, %v4716
    %v4882 = vpack.c.b16 %v4719, %v4718
    %v4883 = vpack.c.b16 %v4721, %v4720
    %v4884 = vpack.c.b16 %v4723, %v4722
    %v4885 = vpack.c.b16 %v4725, %v4724
    %v4886 = vpack.c.b16 %v4727, %v4726
    %v4887 = vpack.c.b16 %v4729, %v4728
    %v4888 = vpack.c.b16 %v4731, %v4730
    %v4889 = vpack.c.b16 %v4733, %v4732
    %v4890 = vpack.c.b16 %v4735, %v4734
    %v4891 = vpack.c.b16 %v4737, %v4736
    %v4892 = vpack.c.b16 %v4739, %v4738
    %v4893 = vpack.c.b16 %v4741, %v4740
    %v4894 = vpack.c.b16 %v4743, %v4742
    %v4895 = vpack.c.b16 %v4745, %v4744
    %v4896 = vpack.c.b16 %v4747, %v4746
    %v4897 = vpack.c.b16 %v4749, %v4748
    %v4898 = vpack.c.b16 %v4751, %v4750
    %v4899 = vpack.c.b16 %v4753, %v4752
    %v4900 = vpack.c.b16 %v4755, %v4754
    %v4901 = vpack.c.b16 %v4757, %v4756
    %v4902 = vpack.c.b16 %v4759, %v4758
    %v4903 = vpack.c.b16 %v4761, %v4760
    %v4904 = vpack.c.b16 %v4763, %v4762
    %v4905 = vpack.c.b16 %v4765, %v4764
    %v4906 = vpack.c.b16 %v4767, %v4766
    %v4907 = vpack.c.b16 %v4769, %v4768
    %v4908 = vpack.c.b16 %v4771, %v4770
    %v4909 = vpack.c.b16 %v4773, %v4772
    %v4910 = vpack.c.b16 %v4775, %v4774
    %v4911 = vpack.c.b16 %v4777, %v4776
    %v4912 = vpack.c.b16 %v4779, %v4778
    %v4913 = vpack.c.b16 %v4781, %v4780
    %v4914 = vpack.c.b16 %v4783, %v4782
    %v4915 = vpack.c.b16 %v4785, %v4784
    %v4916 = vpack.c.b16 %v4787, %v4786
    %v4917 = vpack.c.b16 %v4789, %v4788
    %5046 = vmatprep.subr.bf16.mxu0 0
    %5047 = vmatpush1.bf16.msra.mxu0 %v4797
    %5048 = vmatprep.subr.bf16.mxu0 0
    %5049 = vmatpush1.bf16.msra.mxu0 %v4796
    %5050 = vmatprep.subr.bf16.mxu0 0
    %5051 = vmatpush1.bf16.msra.mxu0 %v4795
    %5052 = vmatprep.subr.bf16.mxu0 0
    %5053 = vmatpush1.bf16.msra.mxu0 %v4794
    %5054 = vmatprep.subr.bf16.mxu0 0
    %5055 = vmatpush1.bf16.msra.mxu0 %v4793
    %5056 = vmatprep.subr.bf16.mxu0 0
    %5057 = vmatpush1.bf16.msra.mxu0 %v4792
    %5058 = vmatprep.subr.bf16.mxu0 0
    %5059 = vmatpush1.bf16.msra.mxu0 %v4791
    %5060 = vmatprep.subr.bf16.mxu0 0
    %5061 = vmatpush1.bf16.msra.mxu0 %v4790
    %5062 = vmatprep.subr.bf16.mxu0 0
    %5063 = vmatpush2.bf16.msra.mxu0 %v4805
    %5064 = vmatprep.subr.bf16.mxu0 0
    %5065 = vmatpush2.bf16.msra.mxu0 %v4804
    %5066 = vmatprep.subr.bf16.mxu0 0
    %5067 = vmatpush2.bf16.msra.mxu0 %v4803
    %5068 = vmatprep.subr.bf16.mxu0 0
    %5069 = vmatpush2.bf16.msra.mxu0 %v4802
    %5070 = vmatprep.subr.bf16.mxu0 0
    %5071 = vmatpush2.bf16.msra.mxu0 %v4801
    %5072 = vmatprep.subr.bf16.mxu0 0
    %5073 = vmatpush2.bf16.msra.mxu0 %v4800
    %5074 = vmatprep.subr.bf16.mxu0 0
    %5075 = vmatpush2.bf16.msra.mxu0 %v4799
    %5076 = vmatprep.subr.bf16.mxu0 0
    %5077 = vmatpush2.bf16.msra.mxu0 %v4798
    %5078 = vmatprep.mubr.bf16.mxu0 %v4003
    %5079 = vmatmul.mubr.bf16.gmra.mxu0 %v4002
    %v5080 = vpop.f32.mrf.mxu0
    %v5081 = vadd.f32 %v4277, %v5080
    %v5082 = vpop.f32.mrf.mxu0
    %v5083 = vpop.f32.mrf.mxu0
    %v5084 = vadd.f32 %v4277, %v5083
    %v5085 = vpop.f32.mrf.mxu0
    %5086 = vdwg.mxu0
    %5087 = vmatprep.subr.bf16.mxu0 0
    %5088 = vmatpush1.bf16.msra.mxu0 %v4813
    %5089 = vmatprep.subr.bf16.mxu0 0
    %5090 = vmatpush1.bf16.msra.mxu0 %v4812
    %5091 = vmatprep.subr.bf16.mxu0 0
    %5092 = vmatpush1.bf16.msra.mxu0 %v4811
    %5093 = vmatprep.subr.bf16.mxu0 0
    %5094 = vmatpush1.bf16.msra.mxu0 %v4810
    %5095 = vmatprep.subr.bf16.mxu0 0
    %5096 = vmatpush1.bf16.msra.mxu0 %v4809
    %5097 = vmatprep.subr.bf16.mxu0 0
    %5098 = vmatpush1.bf16.msra.mxu0 %v4808
    %5099 = vmatprep.subr.bf16.mxu0 0
    %5100 = vmatpush1.bf16.msra.mxu0 %v4807
    %5101 = vmatprep.subr.bf16.mxu0 0
    %5102 = vmatpush1.bf16.msra.mxu0 %v4806
    %5103 = vmatprep.subr.bf16.mxu0 0
    %5104 = vmatpush2.bf16.msra.mxu0 %v4821
    %5105 = vmatprep.subr.bf16.mxu0 0
    %5106 = vmatpush2.bf16.msra.mxu0 %v4820
    %5107 = vmatprep.subr.bf16.mxu0 0
    %5108 = vmatpush2.bf16.msra.mxu0 %v4819
    %5109 = vmatprep.subr.bf16.mxu0 0
    %5110 = vmatpush2.bf16.msra.mxu0 %v4818
    %5111 = vmatprep.subr.bf16.mxu0 0
    %5112 = vmatpush2.bf16.msra.mxu0 %v4817
    %5113 = vmatprep.subr.bf16.mxu0 0
    %5114 = vmatpush2.bf16.msra.mxu0 %v4816
    %5115 = vmatprep.subr.bf16.mxu0 0
    %5116 = vmatpush2.bf16.msra.mxu0 %v4815
    %5117 = vmatprep.subr.bf16.mxu0 0
    %5118 = vmatpush2.bf16.msra.mxu0 %v4814
    %5119 = vmatprep.mubr.bf16.mxu0 %v4005
    %5120 = vmatmul.mubr.bf16.gmra.mxu0 %v4004
    %v5121 = vpop.f32.mrf.mxu0
    %v5122 = vadd.f32 %v5081, %v5121
    %v5123 = vpop.f32.mrf.mxu0
    %v5124 = vpop.f32.mrf.mxu0
    %v5125 = vadd.f32 %v5084, %v5124
    %v5126 = vpop.f32.mrf.mxu0
    %5127 = vdwg.mxu0
    %5128 = vmatprep.subr.bf16.mxu0 0
    %5129 = vmatpush1.bf16.msra.mxu0 %v4829
    %5130 = vmatprep.subr.bf16.mxu0 0
    %5131 = vmatpush1.bf16.msra.mxu0 %v4828
    %5132 = vmatprep.subr.bf16.mxu0 0
    %5133 = vmatpush1.bf16.msra.mxu0 %v4827
    %5134 = vmatprep.subr.bf16.mxu0 0
    %5135 = vmatpush1.bf16.msra.mxu0 %v4826
    %5136 = vmatprep.subr.bf16.mxu0 0
    %5137 = vmatpush1.bf16.msra.mxu0 %v4825
    %5138 = vmatprep.subr.bf16.mxu0 0
    %5139 = vmatpush1.bf16.msra.mxu0 %v4824
    %5140 = vmatprep.subr.bf16.mxu0 0
    %5141 = vmatpush1.bf16.msra.mxu0 %v4823
    %5142 = vmatprep.subr.bf16.mxu0 0
    %5143 = vmatpush1.bf16.msra.mxu0 %v4822
    %5144 = vmatprep.subr.bf16.mxu0 0
    %5145 = vmatpush2.bf16.msra.mxu0 %v4837
    %5146 = vmatprep.subr.bf16.mxu0 0
    %5147 = vmatpush2.bf16.msra.mxu0 %v4836
    %5148 = vmatprep.subr.bf16.mxu0 0
    %5149 = vmatpush2.bf16.msra.mxu0 %v4835
    %5150 = vmatprep.subr.bf16.mxu0 0
    %5151 = vmatpush2.bf16.msra.mxu0 %v4834
    %5152 = vmatprep.subr.bf16.mxu0 0
    %5153 = vmatpush2.bf16.msra.mxu0 %v4833
    %5154 = vmatprep.subr.bf16.mxu0 0
    %5155 = vmatpush2.bf16.msra.mxu0 %v4832
    %5156 = vmatprep.subr.bf16.mxu0 0
    %5157 = vmatpush2.bf16.msra.mxu0 %v4831
    %5158 = vmatprep.subr.bf16.mxu0 0
    %5159 = vmatpush2.bf16.msra.mxu0 %v4830
    %5160 = vmatprep.mubr.bf16.mxu0 %v4007
    %5161 = vmatmul.mubr.bf16.gmra.mxu0 %v4006
    %v5162 = vpop.f32.mrf.mxu0
    %v5163 = vadd.f32 %v5122, %v5162
    %v5164 = vpop.f32.mrf.mxu0
    %v5165 = vpop.f32.mrf.mxu0
    %v5166 = vadd.f32 %v5125, %v5165
    %v5167 = vpop.f32.mrf.mxu0
    %5168 = vdwg.mxu0
    %5169 = vmatprep.subr.bf16.mxu0 0
    %5170 = vmatpush1.bf16.msra.mxu0 %v4845
    %5171 = vmatprep.subr.bf16.mxu0 0
    %5172 = vmatpush1.bf16.msra.mxu0 %v4844
    %5173 = vmatprep.subr.bf16.mxu0 0
    %5174 = vmatpush1.bf16.msra.mxu0 %v4843
    %5175 = vmatprep.subr.bf16.mxu0 0
    %5176 = vmatpush1.bf16.msra.mxu0 %v4842
    %5177 = vmatprep.subr.bf16.mxu0 0
    %5178 = vmatpush1.bf16.msra.mxu0 %v4841
    %5179 = vmatprep.subr.bf16.mxu0 0
    %5180 = vmatpush1.bf16.msra.mxu0 %v4840
    %5181 = vmatprep.subr.bf16.mxu0 0
    %5182 = vmatpush1.bf16.msra.mxu0 %v4839
    %5183 = vmatprep.subr.bf16.mxu0 0
    %5184 = vmatpush1.bf16.msra.mxu0 %v4838
    %5185 = vmatprep.subr.bf16.mxu0 0
    %5186 = vmatpush2.bf16.msra.mxu0 %v4853
    %5187 = vmatprep.subr.bf16.mxu0 0
    %5188 = vmatpush2.bf16.msra.mxu0 %v4852
    %5189 = vmatprep.subr.bf16.mxu0 0
    %5190 = vmatpush2.bf16.msra.mxu0 %v4851
    %5191 = vmatprep.subr.bf16.mxu0 0
    %5192 = vmatpush2.bf16.msra.mxu0 %v4850
    %5193 = vmatprep.subr.bf16.mxu0 0
    %5194 = vmatpush2.bf16.msra.mxu0 %v4849
    %5195 = vmatprep.subr.bf16.mxu0 0
    %5196 = vmatpush2.bf16.msra.mxu0 %v4848
    %5197 = vmatprep.subr.bf16.mxu0 0
    %5198 = vmatpush2.bf16.msra.mxu0 %v4847
    %5199 = vmatprep.subr.bf16.mxu0 0
    %5200 = vmatpush2.bf16.msra.mxu0 %v4846
    %5201 = vmatprep.mubr.bf16.mxu0 %v4009
    %5202 = vmatmul.mubr.bf16.gmra.mxu0 %v4008
    %v5203 = vpop.f32.mrf.mxu0
    %v5204 = vadd.f32 %v5163, %v5203
    %v5205 = vpop.f32.mrf.mxu0
    %v5206 = vpop.f32.mrf.mxu0
    %v5207 = vadd.f32 %v5166, %v5206
    %v5208 = vpop.f32.mrf.mxu0
    %5209 = vdwg.mxu0
    %5210 = vmatprep.subr.bf16.mxu0 0
    %5211 = vmatpush1.bf16.msra.mxu0 %v4861
    %5212 = vmatprep.subr.bf16.mxu0 0
    %5213 = vmatpush1.bf16.msra.mxu0 %v4860
    %5214 = vmatprep.subr.bf16.mxu0 0
    %5215 = vmatpush1.bf16.msra.mxu0 %v4859
    %5216 = vmatprep.subr.bf16.mxu0 0
    %5217 = vmatpush1.bf16.msra.mxu0 %v4858
    %5218 = vmatprep.subr.bf16.mxu0 0
    %5219 = vmatpush1.bf16.msra.mxu0 %v4857
    %5220 = vmatprep.subr.bf16.mxu0 0
    %5221 = vmatpush1.bf16.msra.mxu0 %v4856
    %5222 = vmatprep.subr.bf16.mxu0 0
    %5223 = vmatpush1.bf16.msra.mxu0 %v4855
    %5224 = vmatprep.subr.bf16.mxu0 0
    %5225 = vmatpush1.bf16.msra.mxu0 %v4854
    %5226 = vmatprep.subr.bf16.mxu0 0
    %5227 = vmatpush2.bf16.msra.mxu0 %v4869
    %5228 = vmatprep.subr.bf16.mxu0 0
    %5229 = vmatpush2.bf16.msra.mxu0 %v4868
    %5230 = vmatprep.subr.bf16.mxu0 0
    %5231 = vmatpush2.bf16.msra.mxu0 %v4867
    %5232 = vmatprep.subr.bf16.mxu0 0
    %5233 = vmatpush2.bf16.msra.mxu0 %v4866
    %5234 = vmatprep.subr.bf16.mxu0 0
    %5235 = vmatpush2.bf16.msra.mxu0 %v4865
    %5236 = vmatprep.subr.bf16.mxu0 0
    %5237 = vmatpush2.bf16.msra.mxu0 %v4864
    %5238 = vmatprep.subr.bf16.mxu0 0
    %5239 = vmatpush2.bf16.msra.mxu0 %v4863
    %5240 = vmatprep.subr.bf16.mxu0 0
    %5241 = vmatpush2.bf16.msra.mxu0 %v4862
    %5242 = vmatprep.mubr.bf16.mxu0 %v4011
    %5243 = vmatmul.mubr.bf16.gmra.mxu0 %v4010
    %v5244 = vpop.f32.mrf.mxu0
    %v5245 = vadd.f32 %v5204, %v5244
    %v5246 = vpop.f32.mrf.mxu0
    %v5247 = vpop.f32.mrf.mxu0
    %v5248 = vadd.f32 %v5207, %v5247
    %v5249 = vpop.f32.mrf.mxu0
    %5250 = vdwg.mxu0
    %5251 = vmatprep.subr.bf16.mxu0 0
    %5252 = vmatpush1.bf16.msra.mxu0 %v4877
    %5253 = vmatprep.subr.bf16.mxu0 0
    %5254 = vmatpush1.bf16.msra.mxu0 %v4876
    %5255 = vmatprep.subr.bf16.mxu0 0
    %5256 = vmatpush1.bf16.msra.mxu0 %v4875
    %5257 = vmatprep.subr.bf16.mxu0 0
    %5258 = vmatpush1.bf16.msra.mxu0 %v4874
    %5259 = vmatprep.subr.bf16.mxu0 0
    %5260 = vmatpush1.bf16.msra.mxu0 %v4873
    %5261 = vmatprep.subr.bf16.mxu0 0
    %5262 = vmatpush1.bf16.msra.mxu0 %v4872
    %5263 = vmatprep.subr.bf16.mxu0 0
    %5264 = vmatpush1.bf16.msra.mxu0 %v4871
    %5265 = vmatprep.subr.bf16.mxu0 0
    %5266 = vmatpush1.bf16.msra.mxu0 %v4870
    %5267 = vmatprep.subr.bf16.mxu0 0
    %5268 = vmatpush2.bf16.msra.mxu0 %v4885
    %5269 = vmatprep.subr.bf16.mxu0 0
    %5270 = vmatpush2.bf16.msra.mxu0 %v4884
    %5271 = vmatprep.subr.bf16.mxu0 0
    %5272 = vmatpush2.bf16.msra.mxu0 %v4883
    %5273 = vmatprep.subr.bf16.mxu0 0
    %5274 = vmatpush2.bf16.msra.mxu0 %v4882
    %5275 = vmatprep.subr.bf16.mxu0 0
    %5276 = vmatpush2.bf16.msra.mxu0 %v4881
    %5277 = vmatprep.subr.bf16.mxu0 0
    %5278 = vmatpush2.bf16.msra.mxu0 %v4880
    %5279 = vmatprep.subr.bf16.mxu0 0
    %5280 = vmatpush2.bf16.msra.mxu0 %v4879
    %5281 = vmatprep.subr.bf16.mxu0 0
    %5282 = vmatpush2.bf16.msra.mxu0 %v4878
    %5283 = vmatprep.mubr.bf16.mxu0 %v4013
    %5284 = vmatmul.mubr.bf16.gmra.mxu0 %v4012
    %v5285 = vpop.f32.mrf.mxu0
    %v5286 = vadd.f32 %v5245, %v5285
    %v5287 = vpop.f32.mrf.mxu0
    %v5288 = vpop.f32.mrf.mxu0
    %v5289 = vadd.f32 %v5248, %v5288
    %v5290 = vpop.f32.mrf.mxu0
    %5291 = vdwg.mxu0
    %5292 = vmatprep.subr.bf16.mxu0 0
    %5293 = vmatpush1.bf16.msra.mxu0 %v4893
    %5294 = vmatprep.subr.bf16.mxu0 0
    %5295 = vmatpush1.bf16.msra.mxu0 %v4892
    %5296 = vmatprep.subr.bf16.mxu0 0
    %5297 = vmatpush1.bf16.msra.mxu0 %v4891
    %5298 = vmatprep.subr.bf16.mxu0 0
    %5299 = vmatpush1.bf16.msra.mxu0 %v4890
    %5300 = vmatprep.subr.bf16.mxu0 0
    %5301 = vmatpush1.bf16.msra.mxu0 %v4889
    %5302 = vmatprep.subr.bf16.mxu0 0
    %5303 = vmatpush1.bf16.msra.mxu0 %v4888
    %5304 = vmatprep.subr.bf16.mxu0 0
    %5305 = vmatpush1.bf16.msra.mxu0 %v4887
    %5306 = vmatprep.subr.bf16.mxu0 0
    %5307 = vmatpush1.bf16.msra.mxu0 %v4886
    %5308 = vmatprep.subr.bf16.mxu0 0
    %5309 = vmatpush2.bf16.msra.mxu0 %v4901
    %5310 = vmatprep.subr.bf16.mxu0 0
    %5311 = vmatpush2.bf16.msra.mxu0 %v4900
    %5312 = vmatprep.subr.bf16.mxu0 0
    %5313 = vmatpush2.bf16.msra.mxu0 %v4899
    %5314 = vmatprep.subr.bf16.mxu0 0
    %5315 = vmatpush2.bf16.msra.mxu0 %v4898
    %5316 = vmatprep.subr.bf16.mxu0 0
    %5317 = vmatpush2.bf16.msra.mxu0 %v4897
    %5318 = vmatprep.subr.bf16.mxu0 0
    %5319 = vmatpush2.bf16.msra.mxu0 %v4896
    %5320 = vmatprep.subr.bf16.mxu0 0
    %5321 = vmatpush2.bf16.msra.mxu0 %v4895
    %5322 = vmatprep.subr.bf16.mxu0 0
    %5323 = vmatpush2.bf16.msra.mxu0 %v4894
    %5324 = vmatprep.mubr.bf16.mxu0 %v4015
    %5325 = vmatmul.mubr.bf16.gmra.mxu0 %v4014
    %v5326 = vpop.f32.mrf.mxu0
    %v5327 = vadd.f32 %v5286, %v5326
    %v5328 = vpop.f32.mrf.mxu0
    %v5329 = vpop.f32.mrf.mxu0
    %v5330 = vadd.f32 %v5289, %v5329
    %v5331 = vpop.f32.mrf.mxu0
    %5332 = vdwg.mxu0
    %5333 = vmatprep.subr.bf16.mxu0 0
    %5334 = vmatpush1.bf16.msra.mxu0 %v4909
    %5335 = vmatprep.subr.bf16.mxu0 0
    %5336 = vmatpush1.bf16.msra.mxu0 %v4908
    %5337 = vmatprep.subr.bf16.mxu0 0
    %5338 = vmatpush1.bf16.msra.mxu0 %v4907
    %5339 = vmatprep.subr.bf16.mxu0 0
    %5340 = vmatpush1.bf16.msra.mxu0 %v4906
    %5341 = vmatprep.subr.bf16.mxu0 0
    %5342 = vmatpush1.bf16.msra.mxu0 %v4905
    %5343 = vmatprep.subr.bf16.mxu0 0
    %5344 = vmatpush1.bf16.msra.mxu0 %v4904
    %5345 = vmatprep.subr.bf16.mxu0 0
    %5346 = vmatpush1.bf16.msra.mxu0 %v4903
    %5347 = vmatprep.subr.bf16.mxu0 0
    %5348 = vmatpush1.bf16.msra.mxu0 %v4902
    %5349 = vmatprep.subr.bf16.mxu0 0
    %5350 = vmatpush2.bf16.msra.mxu0 %v4917
    %5351 = vmatprep.subr.bf16.mxu0 0
    %5352 = vmatpush2.bf16.msra.mxu0 %v4916
    %5353 = vmatprep.subr.bf16.mxu0 0
    %5354 = vmatpush2.bf16.msra.mxu0 %v4915
    %5355 = vmatprep.subr.bf16.mxu0 0
    %5356 = vmatpush2.bf16.msra.mxu0 %v4914
    %5357 = vmatprep.subr.bf16.mxu0 0
    %5358 = vmatpush2.bf16.msra.mxu0 %v4913
    %5359 = vmatprep.subr.bf16.mxu0 0
    %5360 = vmatpush2.bf16.msra.mxu0 %v4912
    %5361 = vmatprep.subr.bf16.mxu0 0
    %5362 = vmatpush2.bf16.msra.mxu0 %v4911
    %5363 = vmatprep.subr.bf16.mxu0 0
    %5364 = vmatpush2.bf16.msra.mxu0 %v4910
    %5365 = vmatprep.mubr.bf16.mxu0 %v4017
    %5366 = vmatmul.mubr.bf16.gmra.mxu0 %v4016
    %v5367 = vpop.f32.mrf.mxu0
    %v5368 = vadd.f32 %v5327, %v5367
    %v5369 = vpop.f32.mrf.mxu0
    %v5370 = vpop.f32.mrf.mxu0
    %v5371 = vadd.f32 %v5330, %v5370
    %v5372 = vpop.f32.mrf.mxu0
    %5373 = vdwg.mxu0
    %v5374 = vadd.f32 %v3344, %v5368
    %v5375 = vadd.f32 %v3345, %v5371
    %v5376 = vsel %vm96, %v5374, 0.0
    %5377 = vadd.xlane.f32.xlu0 %v5376
    %v5378 = vpop.xlane.xlu0 %5377
    %v5379 = vsel %vm96, %v5375, 0.0
    %5380 = vadd.xlane.f32.xlu0 %v5379
    %v5381 = vpop.xlane.xlu0 %5380
    %v5382 = vmul.f32 %v5378, %v1687
    %v5383 = vmul.f32 %v5381, %v1687
    %v5384 = vsub.f32 %v5374, %v5382
    %v5385 = vsub.f32 %v5375, %v5383
    %v5386 = vmul.f32 %v5384, %v5384
    %v5387 = vmul.f32 %v5385, %v5385
    %v5388 = vsel %vm96, %v5386, 0.0
    %5389 = vadd.xlane.f32.xlu0 %v5388
    %v5390 = vpop.xlane.xlu0 %5389
    %v5391 = vsel %vm96, %v5387, 0.0
    %5392 = vadd.xlane.f32.xlu0 %v5391
    %v5393 = vpop.xlane.xlu0 %5392
    %v5394 = vmul.f32 %v5390, %v1687
    %v5395 = vmul.f32 %v5393, %v1687
    %v5396 = vadd.f32 %v5394, 1e-05
    %v5397 = vadd.f32 %v5395, 1e-05
    %v5398 = vrsqrt.pop %v5396
    %v5399 = vrsqrt.pop %v5397
    %v5400 = vmul.f32 %v5384, %v5398
    %v5401 = vmul.f32 %v5385, %v5399
    %v5402 = vlaneseq
    %v5403 = vshrl.u32 %v5402, 7
    %v5404 = vsub.s32 0, %v5403
    %v5405 = vrot.slane %v74, %v5404
    %v5406 = vmul.f32 %v5400, %v5405
    %v5407 = vmul.f32 %v5401, %v5405
    %v5408 = vlaneseq
    %v5409 = vshrl.u32 %v5408, 7
    %v5410 = vsub.s32 0, %v5409
    %v5411 = vrot.slane %v75, %v5410
    %v5412 = vadd.f32 %v5406, %v5411
    %v5413 = vadd.f32 %v5407, %v5411
    %v5414 = vpack.c.bf16 %v5413, %v5412
    %v5415 = vlaneseq
    %v5416 = vshrl.u32 %v5415, 7
    %v5417 = vsub.s32 0, %v5416
    %v5418 = vrot.slane %v69, %v5417
    %v5423 = vunpack.c.l.b16 %v59
    %v5424 = vunpack.c.l.b16 %v60
    %v5425 = vunpack.c.l.b16 %v61
    %v5426 = vunpack.c.l.b16 %v62
    %v5427 = vpack.c.b16 %v5424, %v5423
    %v5428 = vpack.c.b16 %v5426, %v5425
    %v5432 = vsel %vm96, %v5414, 0
    %5434 = vmatprep.subr.bf16.mxu0 0
    %5435 = vmatpush1.bf16.msra.mxu0 0
    %5436 = vmatprep.subr.bf16.mxu0 0
    %5437 = vmatpush1.bf16.msra.mxu0 0
    %5438 = vmatprep.subr.bf16.mxu0 0
    %5439 = vmatpush1.bf16.msra.mxu0 0
    %5440 = vmatprep.subr.bf16.mxu0 0
    %5441 = vmatpush1.bf16.msra.mxu0 0
    %5442 = vmatprep.subr.bf16.mxu0 0
    %5443 = vmatpush1.bf16.msra.mxu0 0
    %5444 = vmatprep.subr.bf16.mxu0 0
    %5445 = vmatpush1.bf16.msra.mxu0 0
    %5446 = vmatprep.subr.bf16.mxu0 0
    %5447 = vmatpush1.bf16.msra.mxu0 %v5428
    %5448 = vmatprep.subr.bf16.mxu0 0
    %5449 = vmatpush1.bf16.msra.mxu0 %v5427
    %5450 = vmatprep.subr.bf16.mxu0 0
    %5451 = vmatpush2.bf16.msra.mxu0 0
    %5452 = vmatprep.subr.bf16.mxu0 0
    %5453 = vmatpush2.bf16.msra.mxu0 0
    %5454 = vmatprep.subr.bf16.mxu0 0
    %5455 = vmatpush2.bf16.msra.mxu0 0
    %5456 = vmatprep.subr.bf16.mxu0 0
    %5457 = vmatpush2.bf16.msra.mxu0 0
    %5458 = vmatprep.subr.bf16.mxu0 0
    %5459 = vmatpush2.bf16.msra.mxu0 0
    %5460 = vmatprep.subr.bf16.mxu0 0
    %5461 = vmatpush2.bf16.msra.mxu0 0
    %5462 = vmatprep.subr.bf16.mxu0 0
    %5463 = vmatpush2.bf16.msra.mxu0 0
    %5464 = vmatprep.subr.bf16.mxu0 0
    %5465 = vmatpush2.bf16.msra.mxu0 0
    %5466 = vmatprep.mubr.bf16.mxu0 0
    %5467 = vmatmul.mubr.bf16.gmra.mxu0 %v5432
    %v5468 = vpop.f32.mrf.mxu0
    %v5469 = vadd.f32 %v5418, %v5468
    %v5470 = vpop.f32.mrf.mxu0
    %v5471 = vpop.f32.mrf.mxu0
    %v5472 = vadd.f32 %v5418, %v5471
    %v5473 = vpop.f32.mrf.mxu0
    %5474 = vdwg.mxu0
    %5475 = vst [vmem:[#allocation2] sm:$0xff] %v5469
    %5476 = vst [vmem:[#allocation2 + $0x8] sm:$0xff] %v5472
    // Predicated region
    $region38: #{decoder_transformer_forward.1} parent=1 // pred_check
      _
    $region39: #{decoder_transformer_forward.1} parent=1 // pred_check_branch
      %5478 = sbr.rel (0) target = $region41
    $region40: #{decoder_transformer_forward.1} parent=1 // pred_region
      %s5480 = ssub.s32 256, 256
      %5481 = vsyncadd [#allocation3], %s5480
      %s5482 = sshll.u32 [#allocation2], 4
      %s5483 = int_to_ptr.vmem [resolvable:$true] %s5482
      %5488 = dma.vmem_to_hbm [thread:$0]  %s5483, 256, %s9, [#allocation3], 128, 128, 8
    $region41: #{decoder_transformer_forward.1} parent=1 // pred_fallthru
      _
    // Predicated region
    $region42: #{decoder_transformer_forward.1} parent=1 // pred_check
      _
    $region43: #{decoder_transformer_forward.1} parent=1 // pred_check_branch
      %5490 = sbr.rel (0) target = $region45
    $region44: #{decoder_transformer_forward.1} parent=1 // pred_region
      %5491 = dma.done [#allocation3], 256
    $region45: #{decoder_transformer_forward.1} parent=1 // pred_fallthru
      _
    %5492 = vsyncpa [#allocation3], 1

</llo_original>
